<compile_context>
chip_gen: v6e
topology: v6e:2x2x1
jax: 0.10.0
libtpu: 0.0.40
codegen_flags: <defaults>
</compile_context>

<pallas_src>
import jax
import jax.numpy as jnp
from jax import lax
from jax.experimental import pallas as pl
from jax.experimental.pallas import tpu as pltpu

_COMPUTE_DTYPE = jnp.bfloat16   # MXU operand dtype (accumulation stays float32)
_MAX_TILE_N = 64                # images per grid step (kept a multiple of 16)


def _round_up(v, m):
    return (v + m - 1) // m * m


def _im2col_first_conv(x_nchw, k, s, p, tile_n):
    """Patch matrix for conv layer 0 only (pure data movement on the raw input).
    Rows ordered (batch_tile, y, x, n_within_tile); columns ordered (tap, cin)."""
    n, c, h, w = x_nchw.shape
    oh = (h + 2 * p - k) // s + 1
    ow = (w + 2 * p - k) // s + 1
    xp = jnp.pad(x_nchw, ((0, 0), (0, 0), (p, p), (p, p)))
    taps = []
    for i in range(k):
        for j in range(k):
            taps.append(xp[:, :, i:i + s * (oh - 1) + 1:s, j:j + s * (ow - 1) + 1:s])
    cols = jnp.stack(taps, axis=0)                       # (k*k, N, C, OH, OW)
    nt = n // tile_n
    cols = cols.reshape(k * k, nt, tile_n, c, oh, ow)
    cols = cols.transpose(1, 4, 5, 2, 0, 3)              # (nt, OH, OW, T, k*k, C)
    return cols.reshape(nt * oh * ow * tile_n, k * k * c)


def _pick_vmem_limit():
    # Re-derive the scoped VMEM limit per generation: v7x has 64 MiB per
    # TensorCore, v5e/v6e have 128 MiB.  Use ~half of physical capacity.
    try:
        cap = pltpu.get_tpu_info().vmem_capacity_bytes
    except Exception:
        cap = 64 * 1024 * 1024
    return int(min(max(cap // 2, 32 * 1024 * 1024), 100 * 1024 * 1024))


# ----------------------------------------------------------------------------
# Parameter init (torch-layout raw params) + pure-JAX reference.
# ----------------------------------------------------------------------------
def init_vanilla_cnn_params(
    key, input_channels_count, kernel_sizes, output_channels_list,
    input_width, input_height, strides, paddings,
    hidden_dims_fully_connected, output_dim,
):
    params = {"conv": [], "fc": []}
    in_c = input_channels_count
    h, w = input_height, input_width
    for ks, oc, st, pd in zip(kernel_sizes, output_channels_list, strides, paddings):
        key, wk, bk = jax.random.split(key, 3)
        fan_in = in_c * ks * ks
        params["conv"].append(
            dict(
                weight=jax.random.normal(wk, (oc, in_c, ks, ks), jnp.float32)
                / jnp.sqrt(fan_in),
                bias=0.01 * jax.random.normal(bk, (oc,), jnp.float32),
                stride=st,
                padding=pd,
            )
        )
        h = (h + 2 * pd - ks) // st + 1
        w = (w + 2 * pd - ks) // st + 1
        in_c = oc
    mlp_in = in_c * h * w
    dims = [mlp_in] + list(hidden_dims_fully_connected) + [output_dim]
    for d_in, d_out in zip(dims[:-1], dims[1:]):
        key, wk, bk = jax.random.split(key, 3)
        params["fc"].append(
            dict(
                weight=jax.random.normal(wk, (d_in, d_out), jnp.float32)
                / jnp.sqrt(d_in),
                bias=0.01 * jax.random.normal(bk, (d_out,), jnp.float32),
            )
        )
    return params


def vanilla_cnn_reference(params, x):
    out = x
    for layer in params["conv"]:
        out = lax.conv_general_dilated(
            out, layer["weight"],
            window_strides=(layer["stride"], layer["stride"]),
            padding=[(layer["padding"], layer["padding"])] * 2,
            dimension_numbers=("NCHW", "OIHW", "NCHW"),
        )
        out = jnp.maximum(out + layer["bias"][None, :, None, None], 0.0)
    out = out.reshape(out.shape[0], -1)
    n_fc = len(params["fc"])
    for i, layer in enumerate(params["fc"]):
        out = out @ layer["weight"] + layer["bias"]
        if i < n_fc - 1:
            out = jnp.maximum(out, 0.0)
    return out


# ----------------------------------------------------------------------------
# Fused Pallas forward.
# ----------------------------------------------------------------------------
def make_vanilla_cnn_forward(params, input_channels_count, input_height, input_width):
    cdt = _COMPUTE_DTYPE
    conv_raw = params["conv"]
    fc_raw = params["fc"]
    n_conv = len(conv_raw)
    n_fc = len(fc_raw)
    assert n_conv >= 1 and n_fc >= 1

    # ---- static geometry ----------------------------------------------------
    conv_geo = []
    gh, gw, cin = input_height, input_width, input_channels_count
    for layer in conv_raw:
        oc, ic, kh, kw = layer["weight"].shape
        assert kh == kw and ic == cin
        s, p = int(layer["stride"]), int(layer["padding"])
        oh = (gh + 2 * p - kh) // s + 1
        ow = (gw + 2 * p - kw) // s + 1
        conv_geo.append(dict(k=kh, s=s, p=p, gh=gh, gw=gw,
                             cin=cin, cout=oc, oh=oh, ow=ow))
        gh, gw, cin = oh, ow, oc
    c_last, oh_last, ow_last = cin, gh, gw
    mlp_in = c_last * oh_last * ow_last
    fc_dims = [fc_raw[0]["weight"].shape[0]] + [l["weight"].shape[1] for l in fc_raw]
    assert fc_dims[0] == mlp_in
    out_dim = fc_dims[-1]
    use_vpu_last = (n_fc >= 2 and out_dim == 1)

    # ---- pack / permute / cast parameters ONCE (hoisted out of forward) ------
    conv_w_packed, conv_b_packed = [], []
    for layer in conv_raw:
        oc = layer["weight"].shape[0]
        # (oc, ic, k, k) -> (k*k*ic, oc), row order (tap, cin) == slab columns.
        w = jnp.transpose(layer["weight"], (2, 3, 1, 0)).reshape(-1, oc)
        conv_w_packed.append(w.astype(cdt))
        conv_b_packed.append(layer["bias"].reshape(1, -1).astype(jnp.float32))

    # FC layer 0: fold torch's channel-major flatten AND the last conv's stride
    # subsample into a row permutation applied once here.  FC1-input column
    # (kept_position kk, channel c) maps to torch flatten feature (c, a, b).
    ohw = oh_last * ow_last
    perm = [c * ohw + a * ow_last + b
            for a in range(oh_last) for b in range(ow_last) for c in range(c_last)]
    fc_w_packed = [fc_raw[0]["weight"][jnp.asarray(perm), :].astype(cdt)]
    fc_b_packed = [fc_raw[0]["bias"].reshape(1, -1).astype(jnp.float32)]
    for i in range(1, n_fc):
        w, b = fc_raw[i]["weight"], fc_raw[i]["bias"]
        if i == n_fc - 1 and use_vpu_last:
            fc_w_packed.append(w.reshape(1, -1).astype(jnp.float32))  # VPU row
        else:
            fc_w_packed.append(w.astype(cdt))
        fc_b_packed.append(b.reshape(1, -1).astype(jnp.float32))

    vmem_limit = _pick_vmem_limit()

    def _halo_geometry(t):
        """Per conv layer >= 1: zero-padded halo layout + tap offsets (no masks)."""
        geos = []
        for l in range(1, n_conv):
            g = conv_geo[l]
            k, s, p = g["k"], g["s"], g["p"]
            gh_l, gw_l = g["gh"], g["gw"]
            gw_pad = gw_l + 2 * p
            vh = (g["oh"] - 1) * s + 1            # virtual (unstrided) rows computed
            m_virt = vh * gw_pad * t
            d_list = [(i * gw_pad + j) * t for i in range(k) for j in range(k)]
            halo_rows = _round_up(
                max((gh_l + 2 * p) * gw_pad * t, max(d_list) + m_virt), 16)
            prev = None
            if l >= 2:
                pg = conv_geo[l - 1]
                assert pg["s"] <= pg["k"], "stride > kernel unsupported for middle convs"
                prev = dict(s=pg["s"], gw_pad=pg["gw"] + 2 * pg["p"])
            geos.append(dict(k=k, s=s, p=p, gh=gh_l, gw=gw_l, gw_pad=gw_pad,
                             cin=g["cin"], cout=g["cout"], oh=g["oh"], ow=g["ow"],
                             vh=vh, m_virt=m_virt, d_list=d_list,
                             halo_rows=halo_rows, prev=prev))
        return geos

    def forward(x):
        # x: (N, C, H, W) float32 (PyTorch NCHW convention).
        n = x.shape[0]
        # Batch tile: multiple of 16 (bf16 sublane packing) and as large as
        # reasonable so per-grid-step overhead is amortised and all in-kernel
        # row offsets stay sublane aligned.
        t = min(_MAX_TILE_N, _round_up(max(n, 1), 16))
        n_pad = _round_up(n, t)
        if n_pad != n:
            x = jnp.pad(x, ((0, n_pad - n), (0, 0), (0, 0), (0, 0)))
        n_tiles = n_pad // t

        g0 = conv_geo[0]
        m0 = g0["oh"] * g0["ow"] * t
        k0 = g0["k"] * g0["k"] * g0["cin"]
        cols1 = _im2col_first_conv(x, g0["k"], g0["s"], g0["p"], t).astype(cdt)

        hgeo = _halo_geometry(t)

        # Positions (row offsets / t) of the true strided outputs of the last
        # conv inside the row layout the kernel produces, in torch raster order.
        if n_conv == 1:
            kept_pos = list(range(g0["oh"] * g0["ow"]))
        else:
            gl = hgeo[-1]
            kept_pos = [(a * gl["s"]) * gl["gw_pad"] + b * gl["s"]
                        for a in range(gl["oh"]) for b in range(gl["ow"])]

        def kernel(*refs):
            idx = 0
            cols1_ref = refs[idx]; idx += 1
            cw_refs = refs[idx:idx + n_conv]; idx += n_conv
            cb_refs = refs[idx:idx + n_conv]; idx += n_conv
            fw_refs = refs[idx:idx + n_fc]; idx += n_fc
            fb_refs = refs[idx:idx + n_fc]; idx += n_fc
            out_ref = refs[idx]; idx += 1
            halo_refs = refs[idx:idx + n_conv - 1]; idx += n_conv - 1
            f32 = jnp.float32

            # ---- conv layer 0: ONE GEMM on the prebuilt patch block -----------
            h = jnp.dot(cols1_ref[...], cw_refs[0][...], preferred_element_type=f32)
            h = jnp.maximum(h + cb_refs[0][...], 0.0)
            # h rows ordered (y, x, n) over conv0's strided output grid.

            # ---- conv layers >= 1: zero-padded halo + ONE im2col GEMM each ----
            for li, hg in enumerate(hgeo):
                halo = halo_refs[li]
                ci = hg["cin"]
                gwp_t = hg["gw_pad"] * t
                pt = hg["p"] * t
                h_c = h.astype(cdt)

                # Zero bands above / below the interior rows.  Left/right pad
                # columns are folded into the strip writes below, so the whole
                # halo is (re)written every grid step -> megacore safe.
                if hg["p"] > 0:
                    halo[0:hg["p"] * gwp_t, :] = jnp.zeros((hg["p"] * gwp_t, ci), cdt)
                bot = (hg["gh"] + hg["p"]) * gwp_t
                if hg["halo_rows"] > bot:
                    halo[bot:hg["halo_rows"], :] = jnp.zeros(
                        (hg["halo_rows"] - bot, ci), cdt)

                zpad = jnp.zeros((pt, ci), cdt) if pt > 0 else None
                for y in range(hg["gh"]):
                    if li == 0:
                        chunk = h_c[y * hg["gw"] * t:(y + 1) * hg["gw"] * t, :]
                    else:
                        # Previous layer's output lives on its virtual (padded-
                        # width, unstrided) grid: stride-select with one reshape
                        # per row (only reachable with >= 3 conv layers).
                        pv = hg["prev"]
                        start = (y * pv["s"]) * pv["gw_pad"] * t
                        if pv["s"] == 1:
                            chunk = h_c[start:start + hg["gw"] * t, :]
                        else:
                            span = hg["gw"] * pv["s"]
                            chunk = h_c[start:start + span * t, :].reshape(
                                hg["gw"], pv["s"], t, ci)[:, 0].reshape(
                                hg["gw"] * t, ci)
                    if pt > 0:
                        chunk = jnp.concatenate([zpad, chunk, zpad], axis=0)
                    row0 = (y + hg["p"]) * gwp_t
                    halo[row0:row0 + gwp_t, :] = chunk

                # im2col slab: the k*k taps are contiguous shifted slices of the
                # zero-padded halo (no masks), lane-concatenated -> one MXU GEMM.
                slab = jnp.concatenate(
                    [halo[d:d + hg["m_virt"], :] for d in hg["d_list"]], axis=1)
                h = jnp.dot(slab, cw_refs[li + 1][...], preferred_element_type=f32)
                h = jnp.maximum(h + cb_refs[li + 1][...], 0.0)

            # ---- FC stack: flatten + stride subsample folded into ONE GEMM ----
            h_c = h.astype(cdt)
            fc_in = jnp.concatenate(
                [h_c[pos * t:pos * t + t, :] for pos in kept_pos], axis=1)
            hfc = jnp.dot(fc_in, fw_refs[0][...], preferred_element_type=f32)
            hfc = hfc + fb_refs[0][...]
            if n_fc > 1:
                hfc = jnp.maximum(hfc, 0.0)
                for i in range(1, n_fc - 1):
                    hfc = jnp.dot(hfc.astype(cdt), fw_refs[i][...],
                                  preferred_element_type=f32)
                    hfc = jnp.maximum(hfc + fb_refs[i][...], 0.0)
                if use_vpu_last:
                    out = jnp.sum(hfc * fw_refs[n_fc - 1][...], axis=1,
                                  keepdims=True) + fb_refs[n_fc - 1][...]
                else:
                    out = jnp.dot(hfc.astype(cdt), fw_refs[n_fc - 1][...],
                                  preferred_element_type=f32) + fb_refs[n_fc - 1][...]
            else:
                out = hfc
            # TODO(synk): for out_dim==1 a transposed (out_dim, N) output block
            # would be lane-dense; at (t, 1) * 4B per step it is negligible here.
            out_ref[...] = out.astype(out_ref.dtype)

        # Patch matrix streams per batch tile; weights/biases have a constant
        # index_map -> loaded once, VMEM-resident across the whole grid.
        resident = lambda arr: pl.BlockSpec(arr.shape, lambda b: (0, 0))
        in_specs = [pl.BlockSpec((m0, k0), lambda b: (b, 0))]
        in_specs += [resident(w) for w in conv_w_packed]
        in_specs += [resident(b_) for b_ in conv_b_packed]
        in_specs += [resident(w) for w in fc_w_packed]
        in_specs += [resident(b_) for b_ in fc_b_packed]
        out_specs = pl.BlockSpec((t, out_dim), lambda b: (b, 0))

        scratch_shapes = [pltpu.VMEM((hg["halo_rows"], hg["cin"]), cdt)
                          for hg in hgeo]

        fused = pl.pallas_call(
            kernel,
            out_shape=jax.ShapeDtypeStruct((n_pad, out_dim), jnp.float32),
            grid_spec=pltpu.PrefetchScalarGridSpec(
                num_scalar_prefetch=0,
                grid=(n_tiles,),
                in_specs=in_specs,
                out_specs=out_specs,
                scratch_shapes=scratch_shapes,
            ),
            compiler_params=pltpu.CompilerParams(
                dimension_semantics=("parallel",),
                vmem_limit_bytes=vmem_limit,
            ),
        )
        out = fused(cols1, *conv_w_packed, *conv_b_packed,
                    *fc_w_packed, *fc_b_packed)
        return out[:n]

    return forward


if __name__ == "__main__":
    # Small config: 2 conv layers + 1 hidden FC layer + scalar value head.
    N, C, H, W = 2, 4, 16, 16
    kernel_sizes = [3, 3]
    output_channels_list = [8, 16]
    strides = [2, 2]
    paddings = [1, 1]
    hidden_dims = [32]
    output_dim = 1

    key = jax.random.PRNGKey(0)
    key, xk, pk = jax.random.split(key, 3)
    x = jax.random.normal(xk, (N, C, H, W), jnp.float32)

    params = init_vanilla_cnn_params(
        pk, C, kernel_sizes, output_channels_list, W, H, strides, paddings,
        hidden_dims, output_dim,
    )

    forward = jax.jit(make_vanilla_cnn_forward(params, C, H, W))
    out = jax.block_until_ready(forward(x))
    ref = jax.block_until_ready(vanilla_cnn_reference(params, x))

    assert out.shape == (N, output_dim), out.shape
    # bf16 MXU operands with f32 accumulation -> compare with a loose tolerance.
    assert jnp.allclose(out, ref, atol=5e-2, rtol=5e-2), (out, ref)
    print("KERNEL_OK")
</pallas_src>

<mosaic_0001>
module attributes {stable_mosaic.version = 11 : i64} {
  func.func @kernel(%arg0: i32, %arg1: memref<1024x36xbf16, #tpu.memory_space<vmem>>, %arg2: memref<36x8xbf16, #tpu.memory_space<vmem>>, %arg3: memref<72x16xbf16, #tpu.memory_space<vmem>>, %arg4: memref<1x8xf32, #tpu.memory_space<vmem>>, %arg5: memref<1x16xf32, #tpu.memory_space<vmem>>, %arg6: memref<256x32xbf16, #tpu.memory_space<vmem>>, %arg7: memref<1x32xf32, #tpu.memory_space<vmem>>, %arg8: memref<1x32xf32, #tpu.memory_space<vmem>>, %arg9: memref<1x1xf32, #tpu.memory_space<vmem>>, %arg10: memref<16x1xf32, #tpu.memory_space<vmem>>, %arg11: memref<1600x8xbf16, #tpu.memory_space<vmem>>) attributes {dimension_semantics = [#tpu.dimension_semantics<parallel>], iteration_bounds = array<i64: 1>, scalar_prefetch = 0 : i64, scratch_operands = 1 : i64, tpu.core_type = #tpu.core_type<tc>, window_params = [{transform_indices = @transform_0, window_bounds = array<i64: 1024, 36>}, {pipeline_mode = #tpu.pipeline_mode<synchronous>, transform_indices = @transform_1, window_bounds = array<i64: 36, 8>}, {pipeline_mode = #tpu.pipeline_mode<synchronous>, transform_indices = @transform_2, window_bounds = array<i64: 72, 16>}, {pipeline_mode = #tpu.pipeline_mode<synchronous>, transform_indices = @transform_3, window_bounds = array<i64: 1, 8>}, {pipeline_mode = #tpu.pipeline_mode<synchronous>, transform_indices = @transform_4, window_bounds = array<i64: 1, 16>}, {pipeline_mode = #tpu.pipeline_mode<synchronous>, transform_indices = @transform_5, window_bounds = array<i64: 256, 32>}, {pipeline_mode = #tpu.pipeline_mode<synchronous>, transform_indices = @transform_6, window_bounds = array<i64: 1, 32>}, {pipeline_mode = #tpu.pipeline_mode<synchronous>, transform_indices = @transform_7, window_bounds = array<i64: 1, 32>}, {pipeline_mode = #tpu.pipeline_mode<synchronous>, transform_indices = @transform_8, window_bounds = array<i64: 1, 1>}, {transform_indices = @transform_9, window_bounds = array<i64: 16, 1>}]} {
    %c0 = arith.constant 0 : index
    %c0_0 = arith.constant 0 : index
    %0 = vector.load %arg1[%c0, %c0_0] : memref<1024x36xbf16, #tpu.memory_space<vmem>>, vector<1024x36xbf16>
    %c0_1 = arith.constant 0 : index
    %c0_2 = arith.constant 0 : index
    %1 = vector.load %arg2[%c0_1, %c0_2] : memref<36x8xbf16, #tpu.memory_space<vmem>>, vector<36x8xbf16>
    %cst = arith.constant dense<0.000000e+00> : vector<1024x8xf32>
    %2 = tpu.matmul %0, %1, %cst {dimension_numbers = #tpu.dot_dimension_numbers<[1], [0], [0], [1], [0, 0, 1, 1], [], []>} : vector<1024x36xbf16>, vector<36x8xbf16>, vector<1024x8xf32> -> vector<1024x8xf32>
    %c0_3 = arith.constant 0 : index
    %c0_4 = arith.constant 0 : index
    %3 = vector.load %arg4[%c0_3, %c0_4] : memref<1x8xf32, #tpu.memory_space<vmem>>, vector<1x8xf32>
    %4 = vector.broadcast %3 : vector<1x8xf32> to vector<1024x8xf32>
    %5 = arith.addf %2, %4 : vector<1024x8xf32>
    %cst_5 = arith.constant 0.000000e+00 : f32
    %6 = vector.broadcast %cst_5 : f32 to vector<1024x8xf32>
    %7 = arith.maximumf %5, %6 : vector<1024x8xf32>
    %8 = arith.truncf %7 : vector<1024x8xf32> to vector<1024x8xbf16>
    %cst_6 = arith.constant 0.000000e+00 : bf16
    %9 = vector.broadcast %cst_6 : bf16 to vector<160x8xbf16>
    %c0_7 = arith.constant 0 : index
    %c0_8 = arith.constant 0 : index
    %10 = vector.load %arg11[%c0_7, %c0_8] : memref<1600x8xbf16, #tpu.memory_space<vmem>>, vector<160x8xbf16>
    tpu.vector_store %arg11[%c0_7, %c0_8], %9 {strides = array<i32>} : memref<1600x8xbf16, #tpu.memory_space<vmem>>, vector<160x8xbf16>,
    %cst_9 = arith.constant 0.000000e+00 : bf16
    %11 = vector.broadcast %cst_9 : bf16 to vector<160x8xbf16>
    %c1440 = arith.constant 1440 : index
    %c0_10 = arith.constant 0 : index
    %12 = vector.load %arg11[%c1440, %c0_10] : memref<1600x8xbf16, #tpu.memory_space<vmem>>, vector<160x8xbf16>
    tpu.vector_store %arg11[%c1440, %c0_10], %11 {strides = array<i32>} : memref<1600x8xbf16, #tpu.memory_space<vmem>>, vector<160x8xbf16>,
    %cst_11 = arith.constant 0.000000e+00 : bf16
    %13 = vector.broadcast %cst_11 : bf16 to vector<16x8xbf16>
    %14 = vector.extract_strided_slice %8 {offsets = [0, 0], sizes = [128, 8], strides = [1, 1]} : vector<1024x8xbf16> to vector<128x8xbf16>
    %15 = tpu.concatenate %13, %14, %13 in 0 : vector<16x8xbf16>, vector<128x8xbf16>, vector<16x8xbf16> -> vector<160x8xbf16>
    %c160 = arith.constant 160 : index
    %c0_12 = arith.constant 0 : index
    %16 = vector.load %arg11[%c160, %c0_12] : memref<1600x8xbf16, #tpu.memory_space<vmem>>, vector<160x8xbf16>
    tpu.vector_store %arg11[%c160, %c0_12], %15 {strides = array<i32>} : memref<1600x8xbf16, #tpu.memory_space<vmem>>, vector<160x8xbf16>,
    %17 = vector.extract_strided_slice %8 {offsets = [128, 0], sizes = [128, 8], strides = [1, 1]} : vector<1024x8xbf16> to vector<128x8xbf16>
    %18 = tpu.concatenate %13, %17, %13 in 0 : vector<16x8xbf16>, vector<128x8xbf16>, vector<16x8xbf16> -> vector<160x8xbf16>
    %c320 = arith.constant 320 : index
    %c0_13 = arith.constant 0 : index
    %19 = vector.load %arg11[%c320, %c0_13] : memref<1600x8xbf16, #tpu.memory_space<vmem>>, vector<160x8xbf16>
    tpu.vector_store %arg11[%c320, %c0_13], %18 {strides = array<i32>} : memref<1600x8xbf16, #tpu.memory_space<vmem>>, vector<160x8xbf16>,
    %20 = vector.extract_strided_slice %8 {offsets = [256, 0], sizes = [128, 8], strides = [1, 1]} : vector<1024x8xbf16> to vector<128x8xbf16>
    %21 = tpu.concatenate %13, %20, %13 in 0 : vector<16x8xbf16>, vector<128x8xbf16>, vector<16x8xbf16> -> vector<160x8xbf16>
    %c480 = arith.constant 480 : index
    %c0_14 = arith.constant 0 : index
    %22 = vector.load %arg11[%c480, %c0_14] : memref<1600x8xbf16, #tpu.memory_space<vmem>>, vector<160x8xbf16>
    tpu.vector_store %arg11[%c480, %c0_14], %21 {strides = array<i32>} : memref<1600x8xbf16, #tpu.memory_space<vmem>>, vector<160x8xbf16>,
    %23 = vector.extract_strided_slice %8 {offsets = [384, 0], sizes = [128, 8], strides = [1, 1]} : vector<1024x8xbf16> to vector<128x8xbf16>
    %24 = tpu.concatenate %13, %23, %13 in 0 : vector<16x8xbf16>, vector<128x8xbf16>, vector<16x8xbf16> -> vector<160x8xbf16>
    %c640 = arith.constant 640 : index
    %c0_15 = arith.constant 0 : index
    %25 = vector.load %arg11[%c640, %c0_15] : memref<1600x8xbf16, #tpu.memory_space<vmem>>, vector<160x8xbf16>
    tpu.vector_store %arg11[%c640, %c0_15], %24 {strides = array<i32>} : memref<1600x8xbf16, #tpu.memory_space<vmem>>, vector<160x8xbf16>,
    %26 = vector.extract_strided_slice %8 {offsets = [512, 0], sizes = [128, 8], strides = [1, 1]} : vector<1024x8xbf16> to vector<128x8xbf16>
    %27 = tpu.concatenate %13, %26, %13 in 0 : vector<16x8xbf16>, vector<128x8xbf16>, vector<16x8xbf16> -> vector<160x8xbf16>
    %c800 = arith.constant 800 : index
    %c0_16 = arith.constant 0 : index
    %28 = vector.load %arg11[%c800, %c0_16] : memref<1600x8xbf16, #tpu.memory_space<vmem>>, vector<160x8xbf16>
    tpu.vector_store %arg11[%c800, %c0_16], %27 {strides = array<i32>} : memref<1600x8xbf16, #tpu.memory_space<vmem>>, vector<160x8xbf16>,
    %29 = vector.extract_strided_slice %8 {offsets = [640, 0], sizes = [128, 8], strides = [1, 1]} : vector<1024x8xbf16> to vector<128x8xbf16>
    %30 = tpu.concatenate %13, %29, %13 in 0 : vector<16x8xbf16>, vector<128x8xbf16>, vector<16x8xbf16> -> vector<160x8xbf16>
    %c960 = arith.constant 960 : index
    %c0_17 = arith.constant 0 : index
    %31 = vector.load %arg11[%c960, %c0_17] : memref<1600x8xbf16, #tpu.memory_space<vmem>>, vector<160x8xbf16>
    tpu.vector_store %arg11[%c960, %c0_17], %30 {strides = array<i32>} : memref<1600x8xbf16, #tpu.memory_space<vmem>>, vector<160x8xbf16>,
    %32 = vector.extract_strided_slice %8 {offsets = [768, 0], sizes = [128, 8], strides = [1, 1]} : vector<1024x8xbf16> to vector<128x8xbf16>
    %33 = tpu.concatenate %13, %32, %13 in 0 : vector<16x8xbf16>, vector<128x8xbf16>, vector<16x8xbf16> -> vector<160x8xbf16>
    %c1120 = arith.constant 1120 : index
    %c0_18 = arith.constant 0 : index
    %34 = vector.load %arg11[%c1120, %c0_18] : memref<1600x8xbf16, #tpu.memory_space<vmem>>, vector<160x8xbf16>
    tpu.vector_store %arg11[%c1120, %c0_18], %33 {strides = array<i32>} : memref<1600x8xbf16, #tpu.memory_space<vmem>>, vector<160x8xbf16>,
    %35 = vector.extract_strided_slice %8 {offsets = [896, 0], sizes = [128, 8], strides = [1, 1]} : vector<1024x8xbf16> to vector<128x8xbf16>
    %36 = tpu.concatenate %13, %35, %13 in 0 : vector<16x8xbf16>, vector<128x8xbf16>, vector<16x8xbf16> -> vector<160x8xbf16>
    %c1280 = arith.constant 1280 : index
    %c0_19 = arith.constant 0 : index
    %37 = vector.load %arg11[%c1280, %c0_19] : memref<1600x8xbf16, #tpu.memory_space<vmem>>, vector<160x8xbf16>
    tpu.vector_store %arg11[%c1280, %c0_19], %36 {strides = array<i32>} : memref<1600x8xbf16, #tpu.memory_space<vmem>>, vector<160x8xbf16>,
    %c0_20 = arith.constant 0 : index
    %c0_21 = arith.constant 0 : index
    %38 = vector.load %arg11[%c0_20, %c0_21] : memref<1600x8xbf16, #tpu.memory_space<vmem>>, vector<1120x8xbf16>
    %c16 = arith.constant 16 : index
    %c0_22 = arith.constant 0 : index
    %39 = vector.load %arg11[%c16, %c0_22] : memref<1600x8xbf16, #tpu.memory_space<vmem>>, vector<1120x8xbf16>
    %c32 = arith.constant 32 : index
    %c0_23 = arith.constant 0 : index
    %40 = vector.load %arg11[%c32, %c0_23] : memref<1600x8xbf16, #tpu.memory_space<vmem>>, vector<1120x8xbf16>
    %c160_24 = arith.constant 160 : index
    %c0_25 = arith.constant 0 : index
    %41 = vector.load %arg11[%c160_24, %c0_25] : memref<1600x8xbf16, #tpu.memory_space<vmem>>, vector<1120x8xbf16>
    %c176 = arith.constant 176 : index
    %c0_26 = arith.constant 0 : index
    %42 = vector.load %arg11[%c176, %c0_26] : memref<1600x8xbf16, #tpu.memory_space<vmem>>, vector<1120x8xbf16>
    %c192 = arith.constant 192 : index
    %c0_27 = arith.constant 0 : index
    %43 = vector.load %arg11[%c192, %c0_27] : memref<1600x8xbf16, #tpu.memory_space<vmem>>, vector<1120x8xbf16>
    %c320_28 = arith.constant 320 : index
    %c0_29 = arith.constant 0 : index
    %44 = vector.load %arg11[%c320_28, %c0_29] : memref<1600x8xbf16, #tpu.memory_space<vmem>>, vector<1120x8xbf16>
    %c336 = arith.constant 336 : index
    %c0_30 = arith.constant 0 : index
    %45 = vector.load %arg11[%c336, %c0_30] : memref<1600x8xbf16, #tpu.memory_space<vmem>>, vector<1120x8xbf16>
    %c352 = arith.constant 352 : index
    %c0_31 = arith.constant 0 : index
    %46 = vector.load %arg11[%c352, %c0_31] : memref<1600x8xbf16, #tpu.memory_space<vmem>>, vector<1120x8xbf16>
    %47 = tpu.concatenate %38, %39, %40, %41, %42, %43, %44, %45, %46 in 1 : vector<1120x8xbf16>, vector<1120x8xbf16>, vector<1120x8xbf16>, vector<1120x8xbf16>, vector<1120x8xbf16>, vector<1120x8xbf16>, vector<1120x8xbf16>, vector<1120x8xbf16>, vector<1120x8xbf16> -> vector<1120x72xbf16>
    %c0_32 = arith.constant 0 : index
    %c0_33 = arith.constant 0 : index
    %48 = vector.load %arg3[%c0_32, %c0_33] : memref<72x16xbf16, #tpu.memory_space<vmem>>, vector<72x16xbf16>
    %cst_34 = arith.constant dense<0.000000e+00> : vector<1120x16xf32>
    %49 = tpu.matmul %47, %48, %cst_34 {dimension_numbers = #tpu.dot_dimension_numbers<[1], [0], [0], [1], [0, 0, 1, 1], [], []>} : vector<1120x72xbf16>, vector<72x16xbf16>, vector<1120x16xf32> -> vector<1120x16xf32>
    %c0_35 = arith.constant 0 : index
    %c0_36 = arith.constant 0 : index
    %50 = vector.load %arg5[%c0_35, %c0_36] : memref<1x16xf32, #tpu.memory_space<vmem>>, vector<1x16xf32>
    %51 = vector.broadcast %50 : vector<1x16xf32> to vector<1120x16xf32>
    %52 = arith.addf %49, %51 : vector<1120x16xf32>
    %cst_37 = arith.constant 0.000000e+00 : f32
    %53 = vector.broadcast %cst_37 : f32 to vector<1120x16xf32>
    %54 = arith.maximumf %52, %53 : vector<1120x16xf32>
    %55 = arith.truncf %54 : vector<1120x16xf32> to vector<1120x16xbf16>
    %56 = vector.extract_strided_slice %55 {offsets = [0, 0], sizes = [16, 16], strides = [1, 1]} : vector<1120x16xbf16> to vector<16x16xbf16>
    %57 = vector.extract_strided_slice %55 {offsets = [32, 0], sizes = [16, 16], strides = [1, 1]} : vector<1120x16xbf16> to vector<16x16xbf16>
    %58 = vector.extract_strided_slice %55 {offsets = [64, 0], sizes = [16, 16], strides = [1, 1]} : vector<1120x16xbf16> to vector<16x16xbf16>
    %59 = vector.extract_strided_slice %55 {offsets = [96, 0], sizes = [16, 16], strides = [1, 1]} : vector<1120x16xbf16> to vector<16x16xbf16>
    %60 = vector.extract_strided_slice %55 {offsets = [320, 0], sizes = [16, 16], strides = [1, 1]} : vector<1120x16xbf16> to vector<16x16xbf16>
    %61 = vector.extract_strided_slice %55 {offsets = [352, 0], sizes = [16, 16], strides = [1, 1]} : vector<1120x16xbf16> to vector<16x16xbf16>
    %62 = vector.extract_strided_slice %55 {offsets = [384, 0], sizes = [16, 16], strides = [1, 1]} : vector<1120x16xbf16> to vector<16x16xbf16>
    %63 = vector.extract_strided_slice %55 {offsets = [416, 0], sizes = [16, 16], strides = [1, 1]} : vector<1120x16xbf16> to vector<16x16xbf16>
    %64 = vector.extract_strided_slice %55 {offsets = [640, 0], sizes = [16, 16], strides = [1, 1]} : vector<1120x16xbf16> to vector<16x16xbf16>
    %65 = vector.extract_strided_slice %55 {offsets = [672, 0], sizes = [16, 16], strides = [1, 1]} : vector<1120x16xbf16> to vector<16x16xbf16>
    %66 = vector.extract_strided_slice %55 {offsets = [704, 0], sizes = [16, 16], strides = [1, 1]} : vector<1120x16xbf16> to vector<16x16xbf16>
    %67 = vector.extract_strided_slice %55 {offsets = [736, 0], sizes = [16, 16], strides = [1, 1]} : vector<1120x16xbf16> to vector<16x16xbf16>
    %68 = vector.extract_strided_slice %55 {offsets = [960, 0], sizes = [16, 16], strides = [1, 1]} : vector<1120x16xbf16> to vector<16x16xbf16>
    %69 = vector.extract_strided_slice %55 {offsets = [992, 0], sizes = [16, 16], strides = [1, 1]} : vector<1120x16xbf16> to vector<16x16xbf16>
    %70 = vector.extract_strided_slice %55 {offsets = [1024, 0], sizes = [16, 16], strides = [1, 1]} : vector<1120x16xbf16> to vector<16x16xbf16>
    %71 = vector.extract_strided_slice %55 {offsets = [1056, 0], sizes = [16, 16], strides = [1, 1]} : vector<1120x16xbf16> to vector<16x16xbf16>
    %72 = tpu.concatenate %56, %57, %58, %59, %60, %61, %62, %63, %64, %65, %66, %67, %68, %69, %70, %71 in 1 : vector<16x16xbf16>, vector<16x16xbf16>, vector<16x16xbf16>, vector<16x16xbf16>, vector<16x16xbf16>, vector<16x16xbf16>, vector<16x16xbf16>, vector<16x16xbf16>, vector<16x16xbf16>, vector<16x16xbf16>, vector<16x16xbf16>, vector<16x16xbf16>, vector<16x16xbf16>, vector<16x16xbf16>, vector<16x16xbf16>, vector<16x16xbf16> -> vector<16x256xbf16>
    %c0_38 = arith.constant 0 : index
    %c0_39 = arith.constant 0 : index
    %73 = vector.load %arg6[%c0_38, %c0_39] : memref<256x32xbf16, #tpu.memory_space<vmem>>, vector<256x32xbf16>
    %cst_40 = arith.constant dense<0.000000e+00> : vector<16x32xf32>
    %74 = tpu.matmul %72, %73, %cst_40 {dimension_numbers = #tpu.dot_dimension_numbers<[1], [0], [0], [1], [0, 0, 1, 1], [], []>} : vector<16x256xbf16>, vector<256x32xbf16>, vector<16x32xf32> -> vector<16x32xf32>
    %c0_41 = arith.constant 0 : index
    %c0_42 = arith.constant 0 : index
    %75 = vector.load %arg8[%c0_41, %c0_42] : memref<1x32xf32, #tpu.memory_space<vmem>>, vector<1x32xf32>
    %76 = vector.broadcast %75 : vector<1x32xf32> to vector<16x32xf32>
    %77 = arith.addf %74, %76 : vector<16x32xf32>
    %cst_43 = arith.constant 0.000000e+00 : f32
    %78 = vector.broadcast %cst_43 : f32 to vector<16x32xf32>
    %79 = arith.maximumf %77, %78 : vector<16x32xf32>
    %c0_44 = arith.constant 0 : index
    %c0_45 = arith.constant 0 : index
    %80 = vector.load %arg7[%c0_44, %c0_45] : memref<1x32xf32, #tpu.memory_space<vmem>>, vector<1x32xf32>
    %81 = vector.broadcast %80 : vector<1x32xf32> to vector<16x32xf32>
    %82 = arith.mulf %79, %81 : vector<16x32xf32>
    %cst_46 = arith.constant dense<0.000000e+00> : vector<16xf32>
    %83 = vector.multi_reduction <add>, %82, %cst_46 [1] : vector<16x32xf32> to vector<16xf32>
    %84 = vector.shape_cast %83 : vector<16xf32> to vector<16x1xf32>
    %c0_47 = arith.constant 0 : index
    %c0_48 = arith.constant 0 : index
    %85 = vector.load %arg9[%c0_47, %c0_48] : memref<1x1xf32, #tpu.memory_space<vmem>>, vector<1x1xf32>
    %86 = vector.broadcast %85 : vector<1x1xf32> to vector<16x1xf32>
    %87 = arith.addf %84, %86 : vector<16x1xf32>
    %c0_49 = arith.constant 0 : index
    %c0_50 = arith.constant 0 : index
    %88 = vector.load %arg10[%c0_49, %c0_50] : memref<16x1xf32, #tpu.memory_space<vmem>>, vector<16x1xf32>
    tpu.vector_store %arg10[%c0_49, %c0_50], %87 {strides = array<i32>} : memref<16x1xf32, #tpu.memory_space<vmem>>, vector<16x1xf32>,
    return
  }
  func.func @transform_0(%arg0: i32) -> (i32, i32) {
    %c0_i32 = arith.constant 0 : i32
    %c0_i32_0 = arith.constant 0 : i32
    return %arg0, %c0_i32 : i32, i32
  }
  func.func @transform_1(%arg0: i32) -> (i32, i32) {
    %c0_i32 = arith.constant 0 : i32
    %c0_i32_0 = arith.constant 0 : i32
    %c0_i32_1 = arith.constant 0 : i32
    return %c0_i32, %c0_i32_0 : i32, i32
  }
  func.func @transform_2(%arg0: i32) -> (i32, i32) {
    %c0_i32 = arith.constant 0 : i32
    %c0_i32_0 = arith.constant 0 : i32
    %c0_i32_1 = arith.constant 0 : i32
    return %c0_i32, %c0_i32_0 : i32, i32
  }
  func.func @transform_3(%arg0: i32) -> (i32, i32) {
    %c0_i32 = arith.constant 0 : i32
    %c0_i32_0 = arith.constant 0 : i32
    %c0_i32_1 = arith.constant 0 : i32
    return %c0_i32, %c0_i32_0 : i32, i32
  }
  func.func @transform_4(%arg0: i32) -> (i32, i32) {
    %c0_i32 = arith.constant 0 : i32
    %c0_i32_0 = arith.constant 0 : i32
    %c0_i32_1 = arith.constant 0 : i32
    return %c0_i32, %c0_i32_0 : i32, i32
  }
  func.func @transform_5(%arg0: i32) -> (i32, i32) {
    %c0_i32 = arith.constant 0 : i32
    %c0_i32_0 = arith.constant 0 : i32
    %c0_i32_1 = arith.constant 0 : i32
    return %c0_i32, %c0_i32_0 : i32, i32
  }
  func.func @transform_6(%arg0: i32) -> (i32, i32) {
    %c0_i32 = arith.constant 0 : i32
    %c0_i32_0 = arith.constant 0 : i32
    %c0_i32_1 = arith.constant 0 : i32
    return %c0_i32, %c0_i32_0 : i32, i32
  }
  func.func @transform_7(%arg0: i32) -> (i32, i32) {
    %c0_i32 = arith.constant 0 : i32
    %c0_i32_0 = arith.constant 0 : i32
    %c0_i32_1 = arith.constant 0 : i32
    return %c0_i32, %c0_i32_0 : i32, i32
  }
  func.func @transform_8(%arg0: i32) -> (i32, i32) {
    %c0_i32 = arith.constant 0 : i32
    %c0_i32_0 = arith.constant 0 : i32
    %c0_i32_1 = arith.constant 0 : i32
    return %c0_i32, %c0_i32_0 : i32, i32
  }
  func.func @transform_9(%arg0: i32) -> (i32, i32) {
    %c0_i32 = arith.constant 0 : i32
    %c0_i32_0 = arith.constant 0 : i32
    return %arg0, %c0_i32 : i32, i32
  }
}

</mosaic_0001>

<llo_original>
// kernel: forward.1
$region0: #{forward.1}
  #allocation0 [shape = 'u32[]', space=smem, size = 0x4, offset = 0x4, fixed_abs, tag = 'smem constant byte address 0x4 - core index']
  #allocation1 [shape = 'u32[144,128]{1,0:T(1,128)}', space=vmem, size = 0x12000, scoped, tag = 'internal scratch']
  #allocation2 [shape = 'bf16[1600,8]{1,0:T(8,128)(2,1)}', space=vmem, size = 0x64000, scoped, tag = 'scratch operand']
  #allocation3 [shape = 'f32[1,1]{1,0:T(1,128)S(1)}', space=vmem, size = 0x200, scoped, tag = 'scoped memory for forward.1']
  %s0 = inlined_call_operand.vmem [shape: bf16[1024,36], index: 0, kind: input, shape index: {}]
  %s1 = inlined_call_operand.vmem [shape: bf16[36,8], index: 1, kind: input, shape index: {}]
  %s2 = inlined_call_operand.vmem [shape: bf16[72,16], index: 2, kind: input, shape index: {}]
  %s3 = inlined_call_operand.vmem [shape: f32[1,8], index: 3, kind: input, shape index: {}]
  %s4 = inlined_call_operand.vmem [shape: f32[1,16], index: 4, kind: input, shape index: {}]
  %s5 = inlined_call_operand.vmem [shape: bf16[256,32], index: 5, kind: input, shape index: {}]
  %s6 = inlined_call_operand.vmem [shape: f32[1,32], index: 6, kind: input, shape index: {}]
  %s7 = inlined_call_operand.vmem [shape: f32[1,32], index: 7, kind: input, shape index: {}]
  %s8 = inlined_call_operand.<no memory space> [shape: f32[1,1], index: 8, kind: input, shape index: {}]
  %s9 = inlined_call_operand.vmem [shape: f32[16,1], index: 9, kind: output, shape index: {}]
  %s10 = sld [smem:[#allocation0]]
  $region46: #{forward.1} parent=0
    _
  %s12 = ssub.s32 1, %s10
  %s13 = scalar_select 0, %s12, %s10
  %v14 = vstv %s8
  %15 = vst [vmem:[#allocation3] sm:$0x1] %v14
  // Predicated region
  $region2: #{forward.1} parent=0 // pred_check
    _
  $region3: #{forward.1} parent=0 // pred_check_branch
    %17 = sbr.rel (0) target = $region5
  $region4: #{forward.1} parent=0 // pred_region
    _
  $region5: #{forward.1} parent=0 // pred_fallthru
    _
  // Predicated region
  $region6: #{forward.1} parent=0 // pred_check
    _
  $region7: #{forward.1} parent=0 // pred_check_branch
    %19 = sbr.rel (0) target = $region9
  $region8: #{forward.1} parent=0 // pred_region
    _
  $region9: #{forward.1} parent=0 // pred_fallthru
    _
  // Predicated region
  $region10: #{forward.1} parent=0 // pred_check
    _
  $region11: #{forward.1} parent=0 // pred_check_branch
    %21 = sbr.rel (0) target = $region13
  $region12: #{forward.1} parent=0 // pred_region
    _
  $region13: #{forward.1} parent=0 // pred_fallthru
    _
  // Predicated region
  $region14: #{forward.1} parent=0 // pred_check
    _
  $region15: #{forward.1} parent=0 // pred_check_branch
    %23 = sbr.rel (0) target = $region17
  $region16: #{forward.1} parent=0 // pred_region
    _
  $region17: #{forward.1} parent=0 // pred_fallthru
    _
  // Predicated region
  $region18: #{forward.1} parent=0 // pred_check
    _
  $region19: #{forward.1} parent=0 // pred_check_branch
    %25 = sbr.rel (0) target = $region21
  $region20: #{forward.1} parent=0 // pred_region
    _
  $region21: #{forward.1} parent=0 // pred_fallthru
    _
  // Predicated region
  $region22: #{forward.1} parent=0 // pred_check
    _
  $region23: #{forward.1} parent=0 // pred_check_branch
    %27 = sbr.rel (0) target = $region25
  $region24: #{forward.1} parent=0 // pred_region
    _
  $region25: #{forward.1} parent=0 // pred_fallthru
    _
  // Predicated region
  $region26: #{forward.1} parent=0 // pred_check
    _
  $region27: #{forward.1} parent=0 // pred_check_branch
    %29 = sbr.rel (0) target = $region29
  $region28: #{forward.1} parent=0 // pred_region
    _
  $region29: #{forward.1} parent=0 // pred_fallthru
    _
  // Predicated region
  $region30: #{forward.1} parent=0 // pred_check
    _
  $region31: #{forward.1} parent=0 // pred_check_branch
    %31 = sbr.rel (0) target = $region33
  $region32: #{forward.1} parent=0 // pred_region
    _
  $region33: #{forward.1} parent=0 // pred_fallthru
    _
  // Predicated region
  $region34: #{forward.1} parent=0 // pred_check
    _
  $region35: #{forward.1} parent=0 // pred_check_branch
    %33 = sbr.rel (0) target = $region37
  $region36: #{forward.1} parent=0 // pred_region
    _
  $region37: #{forward.1} parent=0 // pred_fallthru
    _
  %v35 = vld [vmem:[%s0] sm:$0xf]
  %v36 = vld [vmem:[%s0 + $0x4] sm:$0xf]
  %v37 = vld [vmem:[%s0 + $0x8] sm:$0xf]
  %v38 = vld [vmem:[%s0 + $0xc] sm:$0xf]
  %v39 = vld [vmem:[%s0 + $0x10] sm:$0xf]
  %v40 = vld [vmem:[%s0 + $0x14] sm:$0xf]
  %v41 = vld [vmem:[%s0 + $0x18] sm:$0xf]
  %v42 = vld [vmem:[%s0 + $0x1c] sm:$0xf]
  %v43 = vld [vmem:[%s0 + $0x20] sm:$0xf]
  %v44 = vld [vmem:[%s0 + $0x24] sm:$0xf]
  %v45 = vld [vmem:[%s0 + $0x28] sm:$0xf]
  %v46 = vld [vmem:[%s0 + $0x2c] sm:$0xf]
  %v47 = vld [vmem:[%s0 + $0x30] sm:$0xf]
  %v48 = vld [vmem:[%s0 + $0x34] sm:$0xf]
  %v49 = vld [vmem:[%s0 + $0x38] sm:$0xf]
  %v50 = vld [vmem:[%s0 + $0x3c] sm:$0xf]
  %v51 = vld [vmem:[%s0 + $0x40] sm:$0xf]
  %v52 = vld [vmem:[%s0 + $0x44] sm:$0xf]
  %v53 = vld [vmem:[%s0 + $0x48] sm:$0xf]
  %v54 = vld [vmem:[%s0 + $0x4c] sm:$0xf]
  %v55 = vld [vmem:[%s0 + $0x50] sm:$0xf]
  %v56 = vld [vmem:[%s0 + $0x54] sm:$0xf]
  %v57 = vld [vmem:[%s0 + $0x58] sm:$0xf]
  %v58 = vld [vmem:[%s0 + $0x5c] sm:$0xf]
  %v59 = vld [vmem:[%s0 + $0x60] sm:$0xf]
  %v60 = vld [vmem:[%s0 + $0x64] sm:$0xf]
  %v61 = vld [vmem:[%s0 + $0x68] sm:$0xf]
  %v62 = vld [vmem:[%s0 + $0x6c] sm:$0xf]
  %v63 = vld [vmem:[%s0 + $0x70] sm:$0xf]
  %v64 = vld [vmem:[%s0 + $0x74] sm:$0xf]
  %v65 = vld [vmem:[%s0 + $0x78] sm:$0xf]
  %v66 = vld [vmem:[%s0 + $0x7c] sm:$0xf]
  %v67 = vld [vmem:[%s0 + $0x80] sm:$0xf]
  %v68 = vld [vmem:[%s0 + $0x84] sm:$0xf]
  %v69 = vld [vmem:[%s0 + $0x88] sm:$0xf]
  %v70 = vld [vmem:[%s0 + $0x8c] sm:$0xf]
  %v71 = vld [vmem:[%s0 + $0x90] sm:$0xf]
  %v72 = vld [vmem:[%s0 + $0x94] sm:$0xf]
  %v73 = vld [vmem:[%s0 + $0x98] sm:$0xf]
  %v74 = vld [vmem:[%s0 + $0x9c] sm:$0xf]
  %v75 = vld [vmem:[%s0 + $0xa0] sm:$0xf]
  %v76 = vld [vmem:[%s0 + $0xa4] sm:$0xf]
  %v77 = vld [vmem:[%s0 + $0xa8] sm:$0xf]
  %v78 = vld [vmem:[%s0 + $0xac] sm:$0xf]
  %v79 = vld [vmem:[%s0 + $0xb0] sm:$0xf]
  %v80 = vld [vmem:[%s0 + $0xb4] sm:$0xf]
  %v81 = vld [vmem:[%s0 + $0xb8] sm:$0xf]
  %v82 = vld [vmem:[%s0 + $0xbc] sm:$0xf]
  %v83 = vld [vmem:[%s0 + $0xc0] sm:$0xf]
  %v84 = vld [vmem:[%s0 + $0xc4] sm:$0xf]
  %v85 = vld [vmem:[%s0 + $0xc8] sm:$0xf]
  %v86 = vld [vmem:[%s0 + $0xcc] sm:$0xf]
  %v87 = vld [vmem:[%s0 + $0xd0] sm:$0xf]
  %v88 = vld [vmem:[%s0 + $0xd4] sm:$0xf]
  %v89 = vld [vmem:[%s0 + $0xd8] sm:$0xf]
  %v90 = vld [vmem:[%s0 + $0xdc] sm:$0xf]
  %v91 = vld [vmem:[%s0 + $0xe0] sm:$0xf]
  %v92 = vld [vmem:[%s0 + $0xe4] sm:$0xf]
  %v93 = vld [vmem:[%s0 + $0xe8] sm:$0xf]
  %v94 = vld [vmem:[%s0 + $0xec] sm:$0xf]
  %v95 = vld [vmem:[%s0 + $0xf0] sm:$0xf]
  %v96 = vld [vmem:[%s0 + $0xf4] sm:$0xf]
  %v97 = vld [vmem:[%s0 + $0xf8] sm:$0xf]
  %v98 = vld [vmem:[%s0 + $0xfc] sm:$0xf]
  %v99 = vld [vmem:[%s0 + $0x100] sm:$0xf]
  %v100 = vld [vmem:[%s0 + $0x104] sm:$0xf]
  %v101 = vld [vmem:[%s0 + $0x108] sm:$0xf]
  %v102 = vld [vmem:[%s0 + $0x10c] sm:$0xf]
  %v103 = vld [vmem:[%s0 + $0x110] sm:$0xf]
  %v104 = vld [vmem:[%s0 + $0x114] sm:$0xf]
  %v105 = vld [vmem:[%s0 + $0x118] sm:$0xf]
  %v106 = vld [vmem:[%s0 + $0x11c] sm:$0xf]
  %v107 = vld [vmem:[%s0 + $0x120] sm:$0xf]
  %v108 = vld [vmem:[%s0 + $0x124] sm:$0xf]
  %v109 = vld [vmem:[%s0 + $0x128] sm:$0xf]
  %v110 = vld [vmem:[%s0 + $0x12c] sm:$0xf]
  %v111 = vld [vmem:[%s0 + $0x130] sm:$0xf]
  %v112 = vld [vmem:[%s0 + $0x134] sm:$0xf]
  %v113 = vld [vmem:[%s0 + $0x138] sm:$0xf]
  %v114 = vld [vmem:[%s0 + $0x13c] sm:$0xf]
  %v115 = vld [vmem:[%s0 + $0x140] sm:$0xf]
  %v116 = vld [vmem:[%s0 + $0x144] sm:$0xf]
  %v117 = vld [vmem:[%s0 + $0x148] sm:$0xf]
  %v118 = vld [vmem:[%s0 + $0x14c] sm:$0xf]
  %v119 = vld [vmem:[%s0 + $0x150] sm:$0xf]
  %v120 = vld [vmem:[%s0 + $0x154] sm:$0xf]
  %v121 = vld [vmem:[%s0 + $0x158] sm:$0xf]
  %v122 = vld [vmem:[%s0 + $0x15c] sm:$0xf]
  %v123 = vld [vmem:[%s0 + $0x160] sm:$0xf]
  %v124 = vld [vmem:[%s0 + $0x164] sm:$0xf]
  %v125 = vld [vmem:[%s0 + $0x168] sm:$0xf]
  %v126 = vld [vmem:[%s0 + $0x16c] sm:$0xf]
  %v127 = vld [vmem:[%s0 + $0x170] sm:$0xf]
  %v128 = vld [vmem:[%s0 + $0x174] sm:$0xf]
  %v129 = vld [vmem:[%s0 + $0x178] sm:$0xf]
  %v130 = vld [vmem:[%s0 + $0x17c] sm:$0xf]
  %v131 = vld [vmem:[%s0 + $0x180] sm:$0xf]
  %v132 = vld [vmem:[%s0 + $0x184] sm:$0xf]
  %v133 = vld [vmem:[%s0 + $0x188] sm:$0xf]
  %v134 = vld [vmem:[%s0 + $0x18c] sm:$0xf]
  %v135 = vld [vmem:[%s0 + $0x190] sm:$0xf]
  %v136 = vld [vmem:[%s0 + $0x194] sm:$0xf]
  %v137 = vld [vmem:[%s0 + $0x198] sm:$0xf]
  %v138 = vld [vmem:[%s0 + $0x19c] sm:$0xf]
  %v139 = vld [vmem:[%s0 + $0x1a0] sm:$0xf]
  %v140 = vld [vmem:[%s0 + $0x1a4] sm:$0xf]
  %v141 = vld [vmem:[%s0 + $0x1a8] sm:$0xf]
  %v142 = vld [vmem:[%s0 + $0x1ac] sm:$0xf]
  %v143 = vld [vmem:[%s0 + $0x1b0] sm:$0xf]
  %v144 = vld [vmem:[%s0 + $0x1b4] sm:$0xf]
  %v145 = vld [vmem:[%s0 + $0x1b8] sm:$0xf]
  %v146 = vld [vmem:[%s0 + $0x1bc] sm:$0xf]
  %v147 = vld [vmem:[%s0 + $0x1c0] sm:$0xf]
  %v148 = vld [vmem:[%s0 + $0x1c4] sm:$0xf]
  %v149 = vld [vmem:[%s0 + $0x1c8] sm:$0xf]
  %v150 = vld [vmem:[%s0 + $0x1cc] sm:$0xf]
  %v151 = vld [vmem:[%s0 + $0x1d0] sm:$0xf]
  %v152 = vld [vmem:[%s0 + $0x1d4] sm:$0xf]
  %v153 = vld [vmem:[%s0 + $0x1d8] sm:$0xf]
  %v154 = vld [vmem:[%s0 + $0x1dc] sm:$0xf]
  %v155 = vld [vmem:[%s0 + $0x1e0] sm:$0xf]
  %v156 = vld [vmem:[%s0 + $0x1e4] sm:$0xf]
  %v157 = vld [vmem:[%s0 + $0x1e8] sm:$0xf]
  %v158 = vld [vmem:[%s0 + $0x1ec] sm:$0xf]
  %v159 = vld [vmem:[%s0 + $0x1f0] sm:$0xf]
  %v160 = vld [vmem:[%s0 + $0x1f4] sm:$0xf]
  %v161 = vld [vmem:[%s0 + $0x1f8] sm:$0xf]
  %v162 = vld [vmem:[%s0 + $0x1fc] sm:$0xf]
  %v163 = vld [vmem:[%s1] sm:$0xf]
  %v164 = vld [vmem:[%s1 + $0x4] sm:$0xf]
  %v165 = vld [vmem:[%s1 + $0x8] sm:$0xf]
  %v166 = vld [vmem:[%s1 + $0xc] sm:$0xf]
  %v167 = vld [vmem:[%s1 + $0x10] sm:$0x3]
  %v168 = vld [vmem:[%s3] sm:$0x1]
  %v170 = vlaneseq
  %v171 = vshrl.u32 %v170, 7
  %v172 = vsub.s32 0, %v171
  %v173 = vrot.slane %v168, %v172
  %v303 = vunpack.c.l.b16 %v35
  %v304 = vunpack.c.l.b16 %v36
  %v305 = vunpack.c.l.b16 %v37
  %v306 = vunpack.c.l.b16 %v38
  %v307 = vunpack.c.l.b16 %v39
  %v308 = vunpack.c.l.b16 %v40
  %v309 = vunpack.c.l.b16 %v41
  %v310 = vunpack.c.l.b16 %v42
  %v311 = vunpack.c.l.b16 %v43
  %v312 = vunpack.c.l.b16 %v44
  %v313 = vunpack.c.l.b16 %v45
  %v314 = vunpack.c.l.b16 %v46
  %v315 = vunpack.c.l.b16 %v47
  %v316 = vunpack.c.l.b16 %v48
  %v317 = vunpack.c.l.b16 %v49
  %v318 = vunpack.c.l.b16 %v50
  %v319 = vunpack.c.l.b16 %v51
  %v320 = vunpack.c.l.b16 %v52
  %v321 = vunpack.c.l.b16 %v53
  %v322 = vunpack.c.l.b16 %v54
  %v323 = vunpack.c.l.b16 %v55
  %v324 = vunpack.c.l.b16 %v56
  %v325 = vunpack.c.l.b16 %v57
  %v326 = vunpack.c.l.b16 %v58
  %v327 = vunpack.c.l.b16 %v59
  %v328 = vunpack.c.l.b16 %v60
  %v329 = vunpack.c.l.b16 %v61
  %v330 = vunpack.c.l.b16 %v62
  %v331 = vunpack.c.l.b16 %v63
  %v332 = vunpack.c.l.b16 %v64
  %v333 = vunpack.c.l.b16 %v65
  %v334 = vunpack.c.l.b16 %v66
  %v335 = vunpack.c.l.b16 %v67
  %v336 = vunpack.c.l.b16 %v68
  %v337 = vunpack.c.l.b16 %v69
  %v338 = vunpack.c.l.b16 %v70
  %v339 = vunpack.c.l.b16 %v71
  %v340 = vunpack.c.l.b16 %v72
  %v341 = vunpack.c.l.b16 %v73
  %v342 = vunpack.c.l.b16 %v74
  %v343 = vunpack.c.l.b16 %v75
  %v344 = vunpack.c.l.b16 %v76
  %v345 = vunpack.c.l.b16 %v77
  %v346 = vunpack.c.l.b16 %v78
  %v347 = vunpack.c.l.b16 %v79
  %v348 = vunpack.c.l.b16 %v80
  %v349 = vunpack.c.l.b16 %v81
  %v350 = vunpack.c.l.b16 %v82
  %v351 = vunpack.c.l.b16 %v83
  %v352 = vunpack.c.l.b16 %v84
  %v353 = vunpack.c.l.b16 %v85
  %v354 = vunpack.c.l.b16 %v86
  %v355 = vunpack.c.l.b16 %v87
  %v356 = vunpack.c.l.b16 %v88
  %v357 = vunpack.c.l.b16 %v89
  %v358 = vunpack.c.l.b16 %v90
  %v359 = vunpack.c.l.b16 %v91
  %v360 = vunpack.c.l.b16 %v92
  %v361 = vunpack.c.l.b16 %v93
  %v362 = vunpack.c.l.b16 %v94
  %v363 = vunpack.c.l.b16 %v95
  %v364 = vunpack.c.l.b16 %v96
  %v365 = vunpack.c.l.b16 %v97
  %v366 = vunpack.c.l.b16 %v98
  %v367 = vunpack.c.l.b16 %v99
  %v368 = vunpack.c.l.b16 %v100
  %v369 = vunpack.c.l.b16 %v101
  %v370 = vunpack.c.l.b16 %v102
  %v371 = vunpack.c.l.b16 %v103
  %v372 = vunpack.c.l.b16 %v104
  %v373 = vunpack.c.l.b16 %v105
  %v374 = vunpack.c.l.b16 %v106
  %v375 = vunpack.c.l.b16 %v107
  %v376 = vunpack.c.l.b16 %v108
  %v377 = vunpack.c.l.b16 %v109
  %v378 = vunpack.c.l.b16 %v110
  %v379 = vunpack.c.l.b16 %v111
  %v380 = vunpack.c.l.b16 %v112
  %v381 = vunpack.c.l.b16 %v113
  %v382 = vunpack.c.l.b16 %v114
  %v383 = vunpack.c.l.b16 %v115
  %v384 = vunpack.c.l.b16 %v116
  %v385 = vunpack.c.l.b16 %v117
  %v386 = vunpack.c.l.b16 %v118
  %v387 = vunpack.c.l.b16 %v119
  %v388 = vunpack.c.l.b16 %v120
  %v389 = vunpack.c.l.b16 %v121
  %v390 = vunpack.c.l.b16 %v122
  %v391 = vunpack.c.l.b16 %v123
  %v392 = vunpack.c.l.b16 %v124
  %v393 = vunpack.c.l.b16 %v125
  %v394 = vunpack.c.l.b16 %v126
  %v395 = vunpack.c.l.b16 %v127
  %v396 = vunpack.c.l.b16 %v128
  %v397 = vunpack.c.l.b16 %v129
  %v398 = vunpack.c.l.b16 %v130
  %v399 = vunpack.c.l.b16 %v131
  %v400 = vunpack.c.l.b16 %v132
  %v401 = vunpack.c.l.b16 %v133
  %v402 = vunpack.c.l.b16 %v134
  %v403 = vunpack.c.l.b16 %v135
  %v404 = vunpack.c.l.b16 %v136
  %v405 = vunpack.c.l.b16 %v137
  %v406 = vunpack.c.l.b16 %v138
  %v407 = vunpack.c.l.b16 %v139
  %v408 = vunpack.c.l.b16 %v140
  %v409 = vunpack.c.l.b16 %v141
  %v410 = vunpack.c.l.b16 %v142
  %v411 = vunpack.c.l.b16 %v143
  %v412 = vunpack.c.l.b16 %v144
  %v413 = vunpack.c.l.b16 %v145
  %v414 = vunpack.c.l.b16 %v146
  %v415 = vunpack.c.l.b16 %v147
  %v416 = vunpack.c.l.b16 %v148
  %v417 = vunpack.c.l.b16 %v149
  %v418 = vunpack.c.l.b16 %v150
  %v419 = vunpack.c.l.b16 %v151
  %v420 = vunpack.c.l.b16 %v152
  %v421 = vunpack.c.l.b16 %v153
  %v422 = vunpack.c.l.b16 %v154
  %v423 = vunpack.c.l.b16 %v155
  %v424 = vunpack.c.l.b16 %v156
  %v425 = vunpack.c.l.b16 %v157
  %v426 = vunpack.c.l.b16 %v158
  %v427 = vunpack.c.l.b16 %v159
  %v428 = vunpack.c.l.b16 %v160
  %v429 = vunpack.c.l.b16 %v161
  %v430 = vunpack.c.l.b16 %v162
  %v431 = vpack.c.b16 %v304, %v303
  %v432 = vpack.c.b16 %v306, %v305
  %v433 = vpack.c.b16 %v308, %v307
  %v434 = vpack.c.b16 %v310, %v309
  %v435 = vpack.c.b16 %v312, %v311
  %v436 = vpack.c.b16 %v314, %v313
  %v437 = vpack.c.b16 %v316, %v315
  %v438 = vpack.c.b16 %v318, %v317
  %v439 = vpack.c.b16 %v320, %v319
  %v440 = vpack.c.b16 %v322, %v321
  %v441 = vpack.c.b16 %v324, %v323
  %v442 = vpack.c.b16 %v326, %v325
  %v443 = vpack.c.b16 %v328, %v327
  %v444 = vpack.c.b16 %v330, %v329
  %v445 = vpack.c.b16 %v332, %v331
  %v446 = vpack.c.b16 %v334, %v333
  %v447 = vpack.c.b16 %v336, %v335
  %v448 = vpack.c.b16 %v338, %v337
  %v449 = vpack.c.b16 %v340, %v339
  %v450 = vpack.c.b16 %v342, %v341
  %v451 = vpack.c.b16 %v344, %v343
  %v452 = vpack.c.b16 %v346, %v345
  %v453 = vpack.c.b16 %v348, %v347
  %v454 = vpack.c.b16 %v350, %v349
  %v455 = vpack.c.b16 %v352, %v351
  %v456 = vpack.c.b16 %v354, %v353
  %v457 = vpack.c.b16 %v356, %v355
  %v458 = vpack.c.b16 %v358, %v357
  %v459 = vpack.c.b16 %v360, %v359
  %v460 = vpack.c.b16 %v362, %v361
  %v461 = vpack.c.b16 %v364, %v363
  %v462 = vpack.c.b16 %v366, %v365
  %v463 = vpack.c.b16 %v368, %v367
  %v464 = vpack.c.b16 %v370, %v369
  %v465 = vpack.c.b16 %v372, %v371
  %v466 = vpack.c.b16 %v374, %v373
  %v467 = vpack.c.b16 %v376, %v375
  %v468 = vpack.c.b16 %v378, %v377
  %v469 = vpack.c.b16 %v380, %v379
  %v470 = vpack.c.b16 %v382, %v381
  %v471 = vpack.c.b16 %v384, %v383
  %v472 = vpack.c.b16 %v386, %v385
  %v473 = vpack.c.b16 %v388, %v387
  %v474 = vpack.c.b16 %v390, %v389
  %v475 = vpack.c.b16 %v392, %v391
  %v476 = vpack.c.b16 %v394, %v393
  %v477 = vpack.c.b16 %v396, %v395
  %v478 = vpack.c.b16 %v398, %v397
  %v479 = vpack.c.b16 %v400, %v399
  %v480 = vpack.c.b16 %v402, %v401
  %v481 = vpack.c.b16 %v404, %v403
  %v482 = vpack.c.b16 %v406, %v405
  %v483 = vpack.c.b16 %v408, %v407
  %v484 = vpack.c.b16 %v410, %v409
  %v485 = vpack.c.b16 %v412, %v411
  %v486 = vpack.c.b16 %v414, %v413
  %v487 = vpack.c.b16 %v416, %v415
  %v488 = vpack.c.b16 %v418, %v417
  %v489 = vpack.c.b16 %v420, %v419
  %v490 = vpack.c.b16 %v422, %v421
  %v491 = vpack.c.b16 %v424, %v423
  %v492 = vpack.c.b16 %v426, %v425
  %v493 = vpack.c.b16 %v428, %v427
  %v494 = vpack.c.b16 %v430, %v429
  %v500 = vunpack.c.l.b16 %v163
  %v501 = vunpack.c.l.b16 %v164
  %v502 = vunpack.c.l.b16 %v165
  %v503 = vunpack.c.l.b16 %v166
  %v504 = vunpack.c.l.b16 %v167
  %v505 = vpack.c.b16 %v501, %v500
  %v506 = vpack.c.b16 %v503, %v502
  %v507 = vpack.c.b16 %v504, %v504
  %vm510 = vcmask 293888
  %v512 = vsel %vm510, %v431, 0
  %v515 = vsel %vm510, %v432, 0
  %v518 = vsel %vm510, %v433, 0
  %v521 = vsel %vm510, %v434, 0
  %v524 = vsel %vm510, %v435, 0
  %v527 = vsel %vm510, %v436, 0
  %v530 = vsel %vm510, %v437, 0
  %v533 = vsel %vm510, %v438, 0
  %v536 = vsel %vm510, %v439, 0
  %v539 = vsel %vm510, %v440, 0
  %v542 = vsel %vm510, %v441, 0
  %v545 = vsel %vm510, %v442, 0
  %v548 = vsel %vm510, %v443, 0
  %v551 = vsel %vm510, %v444, 0
  %v554 = vsel %vm510, %v445, 0
  %v557 = vsel %vm510, %v446, 0
  %v560 = vsel %vm510, %v447, 0
  %v563 = vsel %vm510, %v448, 0
  %v566 = vsel %vm510, %v449, 0
  %v569 = vsel %vm510, %v450, 0
  %v572 = vsel %vm510, %v451, 0
  %v575 = vsel %vm510, %v452, 0
  %v578 = vsel %vm510, %v453, 0
  %v581 = vsel %vm510, %v454, 0
  %v584 = vsel %vm510, %v455, 0
  %v587 = vsel %vm510, %v456, 0
  %v590 = vsel %vm510, %v457, 0
  %v593 = vsel %vm510, %v458, 0
  %v596 = vsel %vm510, %v459, 0
  %v599 = vsel %vm510, %v460, 0
  %v602 = vsel %vm510, %v461, 0
  %v605 = vsel %vm510, %v462, 0
  %v608 = vsel %vm510, %v463, 0
  %v611 = vsel %vm510, %v464, 0
  %v614 = vsel %vm510, %v465, 0
  %v617 = vsel %vm510, %v466, 0
  %v620 = vsel %vm510, %v467, 0
  %v623 = vsel %vm510, %v468, 0
  %v626 = vsel %vm510, %v469, 0
  %v629 = vsel %vm510, %v470, 0
  %v632 = vsel %vm510, %v471, 0
  %v635 = vsel %vm510, %v472, 0
  %v638 = vsel %vm510, %v473, 0
  %v641 = vsel %vm510, %v474, 0
  %v644 = vsel %vm510, %v475, 0
  %v647 = vsel %vm510, %v476, 0
  %v650 = vsel %vm510, %v477, 0
  %v653 = vsel %vm510, %v478, 0
  %v656 = vsel %vm510, %v479, 0
  %v659 = vsel %vm510, %v480, 0
  %v662 = vsel %vm510, %v481, 0
  %v665 = vsel %vm510, %v482, 0
  %v668 = vsel %vm510, %v483, 0
  %v671 = vsel %vm510, %v484, 0
  %v674 = vsel %vm510, %v485, 0
  %v677 = vsel %vm510, %v486, 0
  %v680 = vsel %vm510, %v487, 0
  %v683 = vsel %vm510, %v488, 0
  %v686 = vsel %vm510, %v489, 0
  %v689 = vsel %vm510, %v490, 0
  %v692 = vsel %vm510, %v491, 0
  %v695 = vsel %vm510, %v492, 0
  %v698 = vsel %vm510, %v493, 0
  %v701 = vsel %vm510, %v494, 0
  %vm703 = vcmask 1041408
  %v705 = vsel %vm703, %v507, 0
  %707 = vmatprep.subr.bf16.mxu0 0
  %708 = vmatpush1.bf16.msra.mxu0 0
  %709 = vmatprep.subr.bf16.mxu0 0
  %710 = vmatpush1.bf16.msra.mxu0 0
  %711 = vmatprep.subr.bf16.mxu0 0
  %712 = vmatpush1.bf16.msra.mxu0 0
  %713 = vmatprep.subr.bf16.mxu0 0
  %714 = vmatpush1.bf16.msra.mxu0 0
  %715 = vmatprep.subr.bf16.mxu0 0
  %716 = vmatpush1.bf16.msra.mxu0 0
  %717 = vmatprep.subr.bf16.mxu0 0
  %718 = vmatpush1.bf16.msra.mxu0 %v705
  %719 = vmatprep.subr.bf16.mxu0 0
  %720 = vmatpush1.bf16.msra.mxu0 %v506
  %721 = vmatprep.subr.bf16.mxu0 0
  %722 = vmatpush1.bf16.msra.mxu0 %v505
  %723 = vmatprep.subr.bf16.mxu0 0
  %724 = vmatpush2.bf16.msra.mxu0 0
  %725 = vmatprep.subr.bf16.mxu0 0
  %726 = vmatpush2.bf16.msra.mxu0 0
  %727 = vmatprep.subr.bf16.mxu0 0
  %728 = vmatpush2.bf16.msra.mxu0 0
  %729 = vmatprep.subr.bf16.mxu0 0
  %730 = vmatpush2.bf16.msra.mxu0 0
  %731 = vmatprep.subr.bf16.mxu0 0
  %732 = vmatpush2.bf16.msra.mxu0 0
  %733 = vmatprep.subr.bf16.mxu0 0
  %734 = vmatpush2.bf16.msra.mxu0 0
  %735 = vmatprep.subr.bf16.mxu0 0
  %736 = vmatpush2.bf16.msra.mxu0 0
  %737 = vmatprep.subr.bf16.mxu0 0
  %738 = vmatpush2.bf16.msra.mxu0 0
  %739 = vmatprep.mubr.bf16.mxu0 0
  %740 = vmatmul.mubr.bf16.gmra.mxu0 %v512
  %v741 = vpop.f32.mrf.mxu0
  %v742 = vadd.f32 %v173, %v741
  %v743 = vpop.f32.mrf.mxu0
  %v744 = vpop.f32.mrf.mxu0
  %v745 = vadd.f32 %v173, %v744
  %v746 = vpop.f32.mrf.mxu0
  %747 = vmatprep.mubr.bf16.mxu0 0
  %748 = vmatmul.mubr.bf16.gmra.mxu0 %v515
  %v749 = vpop.f32.mrf.mxu0
  %v750 = vadd.f32 %v173, %v749
  %v751 = vpop.f32.mrf.mxu0
  %v752 = vpop.f32.mrf.mxu0
  %v753 = vadd.f32 %v173, %v752
  %v754 = vpop.f32.mrf.mxu0
  %755 = vmatprep.mubr.bf16.mxu0 0
  %756 = vmatmul.mubr.bf16.gmra.mxu0 %v518
  %v757 = vpop.f32.mrf.mxu0
  %v758 = vadd.f32 %v173, %v757
  %v759 = vpop.f32.mrf.mxu0
  %v760 = vpop.f32.mrf.mxu0
  %v761 = vadd.f32 %v173, %v760
  %v762 = vpop.f32.mrf.mxu0
  %763 = vmatprep.mubr.bf16.mxu0 0
  %764 = vmatmul.mubr.bf16.gmra.mxu0 %v521
  %v765 = vpop.f32.mrf.mxu0
  %v766 = vadd.f32 %v173, %v765
  %v767 = vpop.f32.mrf.mxu0
  %v768 = vpop.f32.mrf.mxu0
  %v769 = vadd.f32 %v173, %v768
  %v770 = vpop.f32.mrf.mxu0
  %771 = vmatprep.mubr.bf16.mxu0 0
  %772 = vmatmul.mubr.bf16.gmra.mxu0 %v524
  %v773 = vpop.f32.mrf.mxu0
  %v774 = vadd.f32 %v173, %v773
  %v775 = vpop.f32.mrf.mxu0
  %v776 = vpop.f32.mrf.mxu0
  %v777 = vadd.f32 %v173, %v776
  %v778 = vpop.f32.mrf.mxu0
  %779 = vmatprep.mubr.bf16.mxu0 0
  %780 = vmatmul.mubr.bf16.gmra.mxu0 %v527
  %v781 = vpop.f32.mrf.mxu0
  %v782 = vadd.f32 %v173, %v781
  %v783 = vpop.f32.mrf.mxu0
  %v784 = vpop.f32.mrf.mxu0
  %v785 = vadd.f32 %v173, %v784
  %v786 = vpop.f32.mrf.mxu0
  %787 = vmatprep.mubr.bf16.mxu0 0
  %788 = vmatmul.mubr.bf16.gmra.mxu0 %v530
  %v789 = vpop.f32.mrf.mxu0
  %v790 = vadd.f32 %v173, %v789
  %v791 = vpop.f32.mrf.mxu0
  %v792 = vpop.f32.mrf.mxu0
  %v793 = vadd.f32 %v173, %v792
  %v794 = vpop.f32.mrf.mxu0
  %795 = vmatprep.mubr.bf16.mxu0 0
  %796 = vmatmul.mubr.bf16.gmra.mxu0 %v533
  %v797 = vpop.f32.mrf.mxu0
  %v798 = vadd.f32 %v173, %v797
  %v799 = vpop.f32.mrf.mxu0
  %v800 = vpop.f32.mrf.mxu0
  %v801 = vadd.f32 %v173, %v800
  %v802 = vpop.f32.mrf.mxu0
  %803 = vmatprep.mubr.bf16.mxu0 0
  %804 = vmatmul.mubr.bf16.gmra.mxu0 %v536
  %v805 = vpop.f32.mrf.mxu0
  %v806 = vadd.f32 %v173, %v805
  %v807 = vpop.f32.mrf.mxu0
  %v808 = vpop.f32.mrf.mxu0
  %v809 = vadd.f32 %v173, %v808
  %v810 = vpop.f32.mrf.mxu0
  %811 = vmatprep.mubr.bf16.mxu0 0
  %812 = vmatmul.mubr.bf16.gmra.mxu0 %v539
  %v813 = vpop.f32.mrf.mxu0
  %v814 = vadd.f32 %v173, %v813
  %v815 = vpop.f32.mrf.mxu0
  %v816 = vpop.f32.mrf.mxu0
  %v817 = vadd.f32 %v173, %v816
  %v818 = vpop.f32.mrf.mxu0
  %819 = vmatprep.mubr.bf16.mxu0 0
  %820 = vmatmul.mubr.bf16.gmra.mxu0 %v542
  %v821 = vpop.f32.mrf.mxu0
  %v822 = vadd.f32 %v173, %v821
  %v823 = vpop.f32.mrf.mxu0
  %v824 = vpop.f32.mrf.mxu0
  %v825 = vadd.f32 %v173, %v824
  %v826 = vpop.f32.mrf.mxu0
  %827 = vmatprep.mubr.bf16.mxu0 0
  %828 = vmatmul.mubr.bf16.gmra.mxu0 %v545
  %v829 = vpop.f32.mrf.mxu0
  %v830 = vadd.f32 %v173, %v829
  %v831 = vpop.f32.mrf.mxu0
  %v832 = vpop.f32.mrf.mxu0
  %v833 = vadd.f32 %v173, %v832
  %v834 = vpop.f32.mrf.mxu0
  %835 = vmatprep.mubr.bf16.mxu0 0
  %836 = vmatmul.mubr.bf16.gmra.mxu0 %v548
  %v837 = vpop.f32.mrf.mxu0
  %v838 = vadd.f32 %v173, %v837
  %v839 = vpop.f32.mrf.mxu0
  %v840 = vpop.f32.mrf.mxu0
  %v841 = vadd.f32 %v173, %v840
  %v842 = vpop.f32.mrf.mxu0
  %843 = vmatprep.mubr.bf16.mxu0 0
  %844 = vmatmul.mubr.bf16.gmra.mxu0 %v551
  %v845 = vpop.f32.mrf.mxu0
  %v846 = vadd.f32 %v173, %v845
  %v847 = vpop.f32.mrf.mxu0
  %v848 = vpop.f32.mrf.mxu0
  %v849 = vadd.f32 %v173, %v848
  %v850 = vpop.f32.mrf.mxu0
  %851 = vmatprep.mubr.bf16.mxu0 0
  %852 = vmatmul.mubr.bf16.gmra.mxu0 %v554
  %v853 = vpop.f32.mrf.mxu0
  %v854 = vadd.f32 %v173, %v853
  %v855 = vpop.f32.mrf.mxu0
  %v856 = vpop.f32.mrf.mxu0
  %v857 = vadd.f32 %v173, %v856
  %v858 = vpop.f32.mrf.mxu0
  %859 = vmatprep.mubr.bf16.mxu0 0
  %860 = vmatmul.mubr.bf16.gmra.mxu0 %v557
  %v861 = vpop.f32.mrf.mxu0
  %v862 = vadd.f32 %v173, %v861
  %v863 = vpop.f32.mrf.mxu0
  %v864 = vpop.f32.mrf.mxu0
  %v865 = vadd.f32 %v173, %v864
  %v866 = vpop.f32.mrf.mxu0
  %867 = vmatprep.mubr.bf16.mxu0 0
  %868 = vmatmul.mubr.bf16.gmra.mxu0 %v560
  %v869 = vpop.f32.mrf.mxu0
  %v870 = vadd.f32 %v173, %v869
  %v871 = vpop.f32.mrf.mxu0
  %v872 = vpop.f32.mrf.mxu0
  %v873 = vadd.f32 %v173, %v872
  %v874 = vpop.f32.mrf.mxu0
  %875 = vmatprep.mubr.bf16.mxu0 0
  %876 = vmatmul.mubr.bf16.gmra.mxu0 %v563
  %v877 = vpop.f32.mrf.mxu0
  %v878 = vadd.f32 %v173, %v877
  %v879 = vpop.f32.mrf.mxu0
  %v880 = vpop.f32.mrf.mxu0
  %v881 = vadd.f32 %v173, %v880
  %v882 = vpop.f32.mrf.mxu0
  %883 = vmatprep.mubr.bf16.mxu0 0
  %884 = vmatmul.mubr.bf16.gmra.mxu0 %v566
  %v885 = vpop.f32.mrf.mxu0
  %v886 = vadd.f32 %v173, %v885
  %v887 = vpop.f32.mrf.mxu0
  %v888 = vpop.f32.mrf.mxu0
  %v889 = vadd.f32 %v173, %v888
  %v890 = vpop.f32.mrf.mxu0
  %891 = vmatprep.mubr.bf16.mxu0 0
  %892 = vmatmul.mubr.bf16.gmra.mxu0 %v569
  %v893 = vpop.f32.mrf.mxu0
  %v894 = vadd.f32 %v173, %v893
  %v895 = vpop.f32.mrf.mxu0
  %v896 = vpop.f32.mrf.mxu0
  %v897 = vadd.f32 %v173, %v896
  %v898 = vpop.f32.mrf.mxu0
  %899 = vmatprep.mubr.bf16.mxu0 0
  %900 = vmatmul.mubr.bf16.gmra.mxu0 %v572
  %v901 = vpop.f32.mrf.mxu0
  %v902 = vadd.f32 %v173, %v901
  %v903 = vpop.f32.mrf.mxu0
  %v904 = vpop.f32.mrf.mxu0
  %v905 = vadd.f32 %v173, %v904
  %v906 = vpop.f32.mrf.mxu0
  %907 = vmatprep.mubr.bf16.mxu0 0
  %908 = vmatmul.mubr.bf16.gmra.mxu0 %v575
  %v909 = vpop.f32.mrf.mxu0
  %v910 = vadd.f32 %v173, %v909
  %v911 = vpop.f32.mrf.mxu0
  %v912 = vpop.f32.mrf.mxu0
  %v913 = vadd.f32 %v173, %v912
  %v914 = vpop.f32.mrf.mxu0
  %915 = vmatprep.mubr.bf16.mxu0 0
  %916 = vmatmul.mubr.bf16.gmra.mxu0 %v578
  %v917 = vpop.f32.mrf.mxu0
  %v918 = vadd.f32 %v173, %v917
  %v919 = vpop.f32.mrf.mxu0
  %v920 = vpop.f32.mrf.mxu0
  %v921 = vadd.f32 %v173, %v920
  %v922 = vpop.f32.mrf.mxu0
  %923 = vmatprep.mubr.bf16.mxu0 0
  %924 = vmatmul.mubr.bf16.gmra.mxu0 %v581
  %v925 = vpop.f32.mrf.mxu0
  %v926 = vadd.f32 %v173, %v925
  %v927 = vpop.f32.mrf.mxu0
  %v928 = vpop.f32.mrf.mxu0
  %v929 = vadd.f32 %v173, %v928
  %v930 = vpop.f32.mrf.mxu0
  %931 = vmatprep.mubr.bf16.mxu0 0
  %932 = vmatmul.mubr.bf16.gmra.mxu0 %v584
  %v933 = vpop.f32.mrf.mxu0
  %v934 = vadd.f32 %v173, %v933
  %v935 = vpop.f32.mrf.mxu0
  %v936 = vpop.f32.mrf.mxu0
  %v937 = vadd.f32 %v173, %v936
  %v938 = vpop.f32.mrf.mxu0
  %939 = vmatprep.mubr.bf16.mxu0 0
  %940 = vmatmul.mubr.bf16.gmra.mxu0 %v587
  %v941 = vpop.f32.mrf.mxu0
  %v942 = vadd.f32 %v173, %v941
  %v943 = vpop.f32.mrf.mxu0
  %v944 = vpop.f32.mrf.mxu0
  %v945 = vadd.f32 %v173, %v944
  %v946 = vpop.f32.mrf.mxu0
  %947 = vmatprep.mubr.bf16.mxu0 0
  %948 = vmatmul.mubr.bf16.gmra.mxu0 %v590
  %v949 = vpop.f32.mrf.mxu0
  %v950 = vadd.f32 %v173, %v949
  %v951 = vpop.f32.mrf.mxu0
  %v952 = vpop.f32.mrf.mxu0
  %v953 = vadd.f32 %v173, %v952
  %v954 = vpop.f32.mrf.mxu0
  %955 = vmatprep.mubr.bf16.mxu0 0
  %956 = vmatmul.mubr.bf16.gmra.mxu0 %v593
  %v957 = vpop.f32.mrf.mxu0
  %v958 = vadd.f32 %v173, %v957
  %v959 = vpop.f32.mrf.mxu0
  %v960 = vpop.f32.mrf.mxu0
  %v961 = vadd.f32 %v173, %v960
  %v962 = vpop.f32.mrf.mxu0
  %963 = vmatprep.mubr.bf16.mxu0 0
  %964 = vmatmul.mubr.bf16.gmra.mxu0 %v596
  %v965 = vpop.f32.mrf.mxu0
  %v966 = vadd.f32 %v173, %v965
  %v967 = vpop.f32.mrf.mxu0
  %v968 = vpop.f32.mrf.mxu0
  %v969 = vadd.f32 %v173, %v968
  %v970 = vpop.f32.mrf.mxu0
  %971 = vmatprep.mubr.bf16.mxu0 0
  %972 = vmatmul.mubr.bf16.gmra.mxu0 %v599
  %v973 = vpop.f32.mrf.mxu0
  %v974 = vadd.f32 %v173, %v973
  %v975 = vpop.f32.mrf.mxu0
  %v976 = vpop.f32.mrf.mxu0
  %v977 = vadd.f32 %v173, %v976
  %v978 = vpop.f32.mrf.mxu0
  %979 = vmatprep.mubr.bf16.mxu0 0
  %980 = vmatmul.mubr.bf16.gmra.mxu0 %v602
  %v981 = vpop.f32.mrf.mxu0
  %v982 = vadd.f32 %v173, %v981
  %v983 = vpop.f32.mrf.mxu0
  %v984 = vpop.f32.mrf.mxu0
  %v985 = vadd.f32 %v173, %v984
  %v986 = vpop.f32.mrf.mxu0
  %987 = vmatprep.mubr.bf16.mxu0 0
  %988 = vmatmul.mubr.bf16.gmra.mxu0 %v605
  %v989 = vpop.f32.mrf.mxu0
  %v990 = vadd.f32 %v173, %v989
  %v991 = vpop.f32.mrf.mxu0
  %v992 = vpop.f32.mrf.mxu0
  %v993 = vadd.f32 %v173, %v992
  %v994 = vpop.f32.mrf.mxu0
  %995 = vmatprep.mubr.bf16.mxu0 0
  %996 = vmatmul.mubr.bf16.gmra.mxu0 %v608
  %v997 = vpop.f32.mrf.mxu0
  %v998 = vadd.f32 %v173, %v997
  %v999 = vpop.f32.mrf.mxu0
  %v1000 = vpop.f32.mrf.mxu0
  %v1001 = vadd.f32 %v173, %v1000
  %v1002 = vpop.f32.mrf.mxu0
  %1003 = vmatprep.mubr.bf16.mxu0 0
  %1004 = vmatmul.mubr.bf16.gmra.mxu0 %v611
  %v1005 = vpop.f32.mrf.mxu0
  %v1006 = vadd.f32 %v173, %v1005
  %v1007 = vpop.f32.mrf.mxu0
  %v1008 = vpop.f32.mrf.mxu0
  %v1009 = vadd.f32 %v173, %v1008
  %v1010 = vpop.f32.mrf.mxu0
  %1011 = vmatprep.mubr.bf16.mxu0 0
  %1012 = vmatmul.mubr.bf16.gmra.mxu0 %v614
  %v1013 = vpop.f32.mrf.mxu0
  %v1014 = vadd.f32 %v173, %v1013
  %v1015 = vpop.f32.mrf.mxu0
  %v1016 = vpop.f32.mrf.mxu0
  %v1017 = vadd.f32 %v173, %v1016
  %v1018 = vpop.f32.mrf.mxu0
  %1019 = vmatprep.mubr.bf16.mxu0 0
  %1020 = vmatmul.mubr.bf16.gmra.mxu0 %v617
  %v1021 = vpop.f32.mrf.mxu0
  %v1022 = vadd.f32 %v173, %v1021
  %v1023 = vpop.f32.mrf.mxu0
  %v1024 = vpop.f32.mrf.mxu0
  %v1025 = vadd.f32 %v173, %v1024
  %v1026 = vpop.f32.mrf.mxu0
  %1027 = vmatprep.mubr.bf16.mxu0 0
  %1028 = vmatmul.mubr.bf16.gmra.mxu0 %v620
  %v1029 = vpop.f32.mrf.mxu0
  %v1030 = vadd.f32 %v173, %v1029
  %v1031 = vpop.f32.mrf.mxu0
  %v1032 = vpop.f32.mrf.mxu0
  %v1033 = vadd.f32 %v173, %v1032
  %v1034 = vpop.f32.mrf.mxu0
  %1035 = vmatprep.mubr.bf16.mxu0 0
  %1036 = vmatmul.mubr.bf16.gmra.mxu0 %v623
  %v1037 = vpop.f32.mrf.mxu0
  %v1038 = vadd.f32 %v173, %v1037
  %v1039 = vpop.f32.mrf.mxu0
  %v1040 = vpop.f32.mrf.mxu0
  %v1041 = vadd.f32 %v173, %v1040
  %v1042 = vpop.f32.mrf.mxu0
  %1043 = vmatprep.mubr.bf16.mxu0 0
  %1044 = vmatmul.mubr.bf16.gmra.mxu0 %v626
  %v1045 = vpop.f32.mrf.mxu0
  %v1046 = vadd.f32 %v173, %v1045
  %v1047 = vpop.f32.mrf.mxu0
  %v1048 = vpop.f32.mrf.mxu0
  %v1049 = vadd.f32 %v173, %v1048
  %v1050 = vpop.f32.mrf.mxu0
  %1051 = vmatprep.mubr.bf16.mxu0 0
  %1052 = vmatmul.mubr.bf16.gmra.mxu0 %v629
  %v1053 = vpop.f32.mrf.mxu0
  %v1054 = vadd.f32 %v173, %v1053
  %v1055 = vpop.f32.mrf.mxu0
  %v1056 = vpop.f32.mrf.mxu0
  %v1057 = vadd.f32 %v173, %v1056
  %v1058 = vpop.f32.mrf.mxu0
  %1059 = vmatprep.mubr.bf16.mxu0 0
  %1060 = vmatmul.mubr.bf16.gmra.mxu0 %v632
  %v1061 = vpop.f32.mrf.mxu0
  %v1062 = vadd.f32 %v173, %v1061
  %v1063 = vpop.f32.mrf.mxu0
  %v1064 = vpop.f32.mrf.mxu0
  %v1065 = vadd.f32 %v173, %v1064
  %v1066 = vpop.f32.mrf.mxu0
  %1067 = vmatprep.mubr.bf16.mxu0 0
  %1068 = vmatmul.mubr.bf16.gmra.mxu0 %v635
  %v1069 = vpop.f32.mrf.mxu0
  %v1070 = vadd.f32 %v173, %v1069
  %v1071 = vpop.f32.mrf.mxu0
  %v1072 = vpop.f32.mrf.mxu0
  %v1073 = vadd.f32 %v173, %v1072
  %v1074 = vpop.f32.mrf.mxu0
  %1075 = vmatprep.mubr.bf16.mxu0 0
  %1076 = vmatmul.mubr.bf16.gmra.mxu0 %v638
  %v1077 = vpop.f32.mrf.mxu0
  %v1078 = vadd.f32 %v173, %v1077
  %v1079 = vpop.f32.mrf.mxu0
  %v1080 = vpop.f32.mrf.mxu0
  %v1081 = vadd.f32 %v173, %v1080
  %v1082 = vpop.f32.mrf.mxu0
  %1083 = vmatprep.mubr.bf16.mxu0 0
  %1084 = vmatmul.mubr.bf16.gmra.mxu0 %v641
  %v1085 = vpop.f32.mrf.mxu0
  %v1086 = vadd.f32 %v173, %v1085
  %v1087 = vpop.f32.mrf.mxu0
  %v1088 = vpop.f32.mrf.mxu0
  %v1089 = vadd.f32 %v173, %v1088
  %v1090 = vpop.f32.mrf.mxu0
  %1091 = vmatprep.mubr.bf16.mxu0 0
  %1092 = vmatmul.mubr.bf16.gmra.mxu0 %v644
  %v1093 = vpop.f32.mrf.mxu0
  %v1094 = vadd.f32 %v173, %v1093
  %v1095 = vpop.f32.mrf.mxu0
  %v1096 = vpop.f32.mrf.mxu0
  %v1097 = vadd.f32 %v173, %v1096
  %v1098 = vpop.f32.mrf.mxu0
  %1099 = vmatprep.mubr.bf16.mxu0 0
  %1100 = vmatmul.mubr.bf16.gmra.mxu0 %v647
  %v1101 = vpop.f32.mrf.mxu0
  %v1102 = vadd.f32 %v173, %v1101
  %v1103 = vpop.f32.mrf.mxu0
  %v1104 = vpop.f32.mrf.mxu0
  %v1105 = vadd.f32 %v173, %v1104
  %v1106 = vpop.f32.mrf.mxu0
  %1107 = vmatprep.mubr.bf16.mxu0 0
  %1108 = vmatmul.mubr.bf16.gmra.mxu0 %v650
  %v1109 = vpop.f32.mrf.mxu0
  %v1110 = vadd.f32 %v173, %v1109
  %v1111 = vpop.f32.mrf.mxu0
  %v1112 = vpop.f32.mrf.mxu0
  %v1113 = vadd.f32 %v173, %v1112
  %v1114 = vpop.f32.mrf.mxu0
  %1115 = vmatprep.mubr.bf16.mxu0 0
  %1116 = vmatmul.mubr.bf16.gmra.mxu0 %v653
  %v1117 = vpop.f32.mrf.mxu0
  %v1118 = vadd.f32 %v173, %v1117
  %v1119 = vpop.f32.mrf.mxu0
  %v1120 = vpop.f32.mrf.mxu0
  %v1121 = vadd.f32 %v173, %v1120
  %v1122 = vpop.f32.mrf.mxu0
  %1123 = vmatprep.mubr.bf16.mxu0 0
  %1124 = vmatmul.mubr.bf16.gmra.mxu0 %v656
  %v1125 = vpop.f32.mrf.mxu0
  %v1126 = vadd.f32 %v173, %v1125
  %v1127 = vpop.f32.mrf.mxu0
  %v1128 = vpop.f32.mrf.mxu0
  %v1129 = vadd.f32 %v173, %v1128
  %v1130 = vpop.f32.mrf.mxu0
  %1131 = vmatprep.mubr.bf16.mxu0 0
  %1132 = vmatmul.mubr.bf16.gmra.mxu0 %v659
  %v1133 = vpop.f32.mrf.mxu0
  %v1134 = vadd.f32 %v173, %v1133
  %v1135 = vpop.f32.mrf.mxu0
  %v1136 = vpop.f32.mrf.mxu0
  %v1137 = vadd.f32 %v173, %v1136
  %v1138 = vpop.f32.mrf.mxu0
  %1139 = vmatprep.mubr.bf16.mxu0 0
  %1140 = vmatmul.mubr.bf16.gmra.mxu0 %v662
  %v1141 = vpop.f32.mrf.mxu0
  %v1142 = vadd.f32 %v173, %v1141
  %v1143 = vpop.f32.mrf.mxu0
  %v1144 = vpop.f32.mrf.mxu0
  %v1145 = vadd.f32 %v173, %v1144
  %v1146 = vpop.f32.mrf.mxu0
  %1147 = vmatprep.mubr.bf16.mxu0 0
  %1148 = vmatmul.mubr.bf16.gmra.mxu0 %v665
  %v1149 = vpop.f32.mrf.mxu0
  %v1150 = vadd.f32 %v173, %v1149
  %v1151 = vpop.f32.mrf.mxu0
  %v1152 = vpop.f32.mrf.mxu0
  %v1153 = vadd.f32 %v173, %v1152
  %v1154 = vpop.f32.mrf.mxu0
  %1155 = vmatprep.mubr.bf16.mxu0 0
  %1156 = vmatmul.mubr.bf16.gmra.mxu0 %v668
  %v1157 = vpop.f32.mrf.mxu0
  %v1158 = vadd.f32 %v173, %v1157
  %v1159 = vpop.f32.mrf.mxu0
  %v1160 = vpop.f32.mrf.mxu0
  %v1161 = vadd.f32 %v173, %v1160
  %v1162 = vpop.f32.mrf.mxu0
  %1163 = vmatprep.mubr.bf16.mxu0 0
  %1164 = vmatmul.mubr.bf16.gmra.mxu0 %v671
  %v1165 = vpop.f32.mrf.mxu0
  %v1166 = vadd.f32 %v173, %v1165
  %v1167 = vpop.f32.mrf.mxu0
  %v1168 = vpop.f32.mrf.mxu0
  %v1169 = vadd.f32 %v173, %v1168
  %v1170 = vpop.f32.mrf.mxu0
  %1171 = vmatprep.mubr.bf16.mxu0 0
  %1172 = vmatmul.mubr.bf16.gmra.mxu0 %v674
  %v1173 = vpop.f32.mrf.mxu0
  %v1174 = vadd.f32 %v173, %v1173
  %v1175 = vpop.f32.mrf.mxu0
  %v1176 = vpop.f32.mrf.mxu0
  %v1177 = vadd.f32 %v173, %v1176
  %v1178 = vpop.f32.mrf.mxu0
  %1179 = vmatprep.mubr.bf16.mxu0 0
  %1180 = vmatmul.mubr.bf16.gmra.mxu0 %v677
  %v1181 = vpop.f32.mrf.mxu0
  %v1182 = vadd.f32 %v173, %v1181
  %v1183 = vpop.f32.mrf.mxu0
  %v1184 = vpop.f32.mrf.mxu0
  %v1185 = vadd.f32 %v173, %v1184
  %v1186 = vpop.f32.mrf.mxu0
  %1187 = vmatprep.mubr.bf16.mxu0 0
  %1188 = vmatmul.mubr.bf16.gmra.mxu0 %v680
  %v1189 = vpop.f32.mrf.mxu0
  %v1190 = vadd.f32 %v173, %v1189
  %v1191 = vpop.f32.mrf.mxu0
  %v1192 = vpop.f32.mrf.mxu0
  %v1193 = vadd.f32 %v173, %v1192
  %v1194 = vpop.f32.mrf.mxu0
  %1195 = vmatprep.mubr.bf16.mxu0 0
  %1196 = vmatmul.mubr.bf16.gmra.mxu0 %v683
  %v1197 = vpop.f32.mrf.mxu0
  %v1198 = vadd.f32 %v173, %v1197
  %v1199 = vpop.f32.mrf.mxu0
  %v1200 = vpop.f32.mrf.mxu0
  %v1201 = vadd.f32 %v173, %v1200
  %v1202 = vpop.f32.mrf.mxu0
  %1203 = vmatprep.mubr.bf16.mxu0 0
  %1204 = vmatmul.mubr.bf16.gmra.mxu0 %v686
  %v1205 = vpop.f32.mrf.mxu0
  %v1206 = vadd.f32 %v173, %v1205
  %v1207 = vpop.f32.mrf.mxu0
  %v1208 = vpop.f32.mrf.mxu0
  %v1209 = vadd.f32 %v173, %v1208
  %v1210 = vpop.f32.mrf.mxu0
  %1211 = vmatprep.mubr.bf16.mxu0 0
  %1212 = vmatmul.mubr.bf16.gmra.mxu0 %v689
  %v1213 = vpop.f32.mrf.mxu0
  %v1214 = vadd.f32 %v173, %v1213
  %v1215 = vpop.f32.mrf.mxu0
  %v1216 = vpop.f32.mrf.mxu0
  %v1217 = vadd.f32 %v173, %v1216
  %v1218 = vpop.f32.mrf.mxu0
  %1219 = vmatprep.mubr.bf16.mxu0 0
  %1220 = vmatmul.mubr.bf16.gmra.mxu0 %v692
  %v1221 = vpop.f32.mrf.mxu0
  %v1222 = vadd.f32 %v173, %v1221
  %v1223 = vpop.f32.mrf.mxu0
  %v1224 = vpop.f32.mrf.mxu0
  %v1225 = vadd.f32 %v173, %v1224
  %v1226 = vpop.f32.mrf.mxu0
  %1227 = vmatprep.mubr.bf16.mxu0 0
  %1228 = vmatmul.mubr.bf16.gmra.mxu0 %v695
  %v1229 = vpop.f32.mrf.mxu0
  %v1230 = vadd.f32 %v173, %v1229
  %v1231 = vpop.f32.mrf.mxu0
  %v1232 = vpop.f32.mrf.mxu0
  %v1233 = vadd.f32 %v173, %v1232
  %v1234 = vpop.f32.mrf.mxu0
  %1235 = vmatprep.mubr.bf16.mxu0 0
  %1236 = vmatmul.mubr.bf16.gmra.mxu0 %v698
  %v1237 = vpop.f32.mrf.mxu0
  %v1238 = vadd.f32 %v173, %v1237
  %v1239 = vpop.f32.mrf.mxu0
  %v1240 = vpop.f32.mrf.mxu0
  %v1241 = vadd.f32 %v173, %v1240
  %v1242 = vpop.f32.mrf.mxu0
  %1243 = vmatprep.mubr.bf16.mxu0 0
  %1244 = vmatmul.mubr.bf16.gmra.mxu0 %v701
  %v1245 = vpop.f32.mrf.mxu0
  %v1246 = vadd.f32 %v173, %v1245
  %v1247 = vpop.f32.mrf.mxu0
  %v1248 = vpop.f32.mrf.mxu0
  %v1249 = vadd.f32 %v173, %v1248
  %v1250 = vpop.f32.mrf.mxu0
  %1251 = vdwg.mxu0
  %v1252 = vmax.f32 %v742, 0.0
  %v1253 = vmax.f32 %v745, 0.0
  %v1254 = vmax.f32 %v750, 0.0
  %v1255 = vmax.f32 %v753, 0.0
  %v1256 = vmax.f32 %v758, 0.0
  %v1257 = vmax.f32 %v761, 0.0
  %v1258 = vmax.f32 %v766, 0.0
  %v1259 = vmax.f32 %v769, 0.0
  %v1260 = vmax.f32 %v774, 0.0
  %v1261 = vmax.f32 %v777, 0.0
  %v1262 = vmax.f32 %v782, 0.0
  %v1263 = vmax.f32 %v785, 0.0
  %v1264 = vmax.f32 %v790, 0.0
  %v1265 = vmax.f32 %v793, 0.0
  %v1266 = vmax.f32 %v798, 0.0
  %v1267 = vmax.f32 %v801, 0.0
  %v1268 = vmax.f32 %v806, 0.0
  %v1269 = vmax.f32 %v809, 0.0
  %v1270 = vmax.f32 %v814, 0.0
  %v1271 = vmax.f32 %v817, 0.0
  %v1272 = vmax.f32 %v822, 0.0
  %v1273 = vmax.f32 %v825, 0.0
  %v1274 = vmax.f32 %v830, 0.0
  %v1275 = vmax.f32 %v833, 0.0
  %v1276 = vmax.f32 %v838, 0.0
  %v1277 = vmax.f32 %v841, 0.0
  %v1278 = vmax.f32 %v846, 0.0
  %v1279 = vmax.f32 %v849, 0.0
  %v1280 = vmax.f32 %v854, 0.0
  %v1281 = vmax.f32 %v857, 0.0
  %v1282 = vmax.f32 %v862, 0.0
  %v1283 = vmax.f32 %v865, 0.0
  %v1284 = vmax.f32 %v870, 0.0
  %v1285 = vmax.f32 %v873, 0.0
  %v1286 = vmax.f32 %v878, 0.0
  %v1287 = vmax.f32 %v881, 0.0
  %v1288 = vmax.f32 %v886, 0.0
  %v1289 = vmax.f32 %v889, 0.0
  %v1290 = vmax.f32 %v894, 0.0
  %v1291 = vmax.f32 %v897, 0.0
  %v1292 = vmax.f32 %v902, 0.0
  %v1293 = vmax.f32 %v905, 0.0
  %v1294 = vmax.f32 %v910, 0.0
  %v1295 = vmax.f32 %v913, 0.0
  %v1296 = vmax.f32 %v918, 0.0
  %v1297 = vmax.f32 %v921, 0.0
  %v1298 = vmax.f32 %v926, 0.0
  %v1299 = vmax.f32 %v929, 0.0
  %v1300 = vmax.f32 %v934, 0.0
  %v1301 = vmax.f32 %v937, 0.0
  %v1302 = vmax.f32 %v942, 0.0
  %v1303 = vmax.f32 %v945, 0.0
  %v1304 = vmax.f32 %v950, 0.0
  %v1305 = vmax.f32 %v953, 0.0
  %v1306 = vmax.f32 %v958, 0.0
  %v1307 = vmax.f32 %v961, 0.0
  %v1308 = vmax.f32 %v966, 0.0
  %v1309 = vmax.f32 %v969, 0.0
  %v1310 = vmax.f32 %v974, 0.0
  %v1311 = vmax.f32 %v977, 0.0
  %v1312 = vmax.f32 %v982, 0.0
  %v1313 = vmax.f32 %v985, 0.0
  %v1314 = vmax.f32 %v990, 0.0
  %v1315 = vmax.f32 %v993, 0.0
  %v1316 = vmax.f32 %v998, 0.0
  %v1317 = vmax.f32 %v1001, 0.0
  %v1318 = vmax.f32 %v1006, 0.0
  %v1319 = vmax.f32 %v1009, 0.0
  %v1320 = vmax.f32 %v1014, 0.0
  %v1321 = vmax.f32 %v1017, 0.0
  %v1322 = vmax.f32 %v1022, 0.0
  %v1323 = vmax.f32 %v1025, 0.0
  %v1324 = vmax.f32 %v1030, 0.0
  %v1325 = vmax.f32 %v1033, 0.0
  %v1326 = vmax.f32 %v1038, 0.0
  %v1327 = vmax.f32 %v1041, 0.0
  %v1328 = vmax.f32 %v1046, 0.0
  %v1329 = vmax.f32 %v1049, 0.0
  %v1330 = vmax.f32 %v1054, 0.0
  %v1331 = vmax.f32 %v1057, 0.0
  %v1332 = vmax.f32 %v1062, 0.0
  %v1333 = vmax.f32 %v1065, 0.0
  %v1334 = vmax.f32 %v1070, 0.0
  %v1335 = vmax.f32 %v1073, 0.0
  %v1336 = vmax.f32 %v1078, 0.0
  %v1337 = vmax.f32 %v1081, 0.0
  %v1338 = vmax.f32 %v1086, 0.0
  %v1339 = vmax.f32 %v1089, 0.0
  %v1340 = vmax.f32 %v1094, 0.0
  %v1341 = vmax.f32 %v1097, 0.0
  %v1342 = vmax.f32 %v1102, 0.0
  %v1343 = vmax.f32 %v1105, 0.0
  %v1344 = vmax.f32 %v1110, 0.0
  %v1345 = vmax.f32 %v1113, 0.0
  %v1346 = vmax.f32 %v1118, 0.0
  %v1347 = vmax.f32 %v1121, 0.0
  %v1348 = vmax.f32 %v1126, 0.0
  %v1349 = vmax.f32 %v1129, 0.0
  %v1350 = vmax.f32 %v1134, 0.0
  %v1351 = vmax.f32 %v1137, 0.0
  %v1352 = vmax.f32 %v1142, 0.0
  %v1353 = vmax.f32 %v1145, 0.0
  %v1354 = vmax.f32 %v1150, 0.0
  %v1355 = vmax.f32 %v1153, 0.0
  %v1356 = vmax.f32 %v1158, 0.0
  %v1357 = vmax.f32 %v1161, 0.0
  %v1358 = vmax.f32 %v1166, 0.0
  %v1359 = vmax.f32 %v1169, 0.0
  %v1360 = vmax.f32 %v1174, 0.0
  %v1361 = vmax.f32 %v1177, 0.0
  %v1362 = vmax.f32 %v1182, 0.0
  %v1363 = vmax.f32 %v1185, 0.0
  %v1364 = vmax.f32 %v1190, 0.0
  %v1365 = vmax.f32 %v1193, 0.0
  %v1366 = vmax.f32 %v1198, 0.0
  %v1367 = vmax.f32 %v1201, 0.0
  %v1368 = vmax.f32 %v1206, 0.0
  %v1369 = vmax.f32 %v1209, 0.0
  %v1370 = vmax.f32 %v1214, 0.0
  %v1371 = vmax.f32 %v1217, 0.0
  %v1372 = vmax.f32 %v1222, 0.0
  %v1373 = vmax.f32 %v1225, 0.0
  %v1374 = vmax.f32 %v1230, 0.0
  %v1375 = vmax.f32 %v1233, 0.0
  %v1376 = vmax.f32 %v1238, 0.0
  %v1377 = vmax.f32 %v1241, 0.0
  %v1378 = vmax.f32 %v1246, 0.0
  %v1379 = vmax.f32 %v1249, 0.0
  %v1380 = vpack.c.bf16 %v1253, %v1252
  %v1381 = vpack.c.bf16 %v1255, %v1254
  %v1382 = vpack.c.bf16 %v1257, %v1256
  %v1383 = vpack.c.bf16 %v1259, %v1258
  %v1384 = vpack.c.bf16 %v1261, %v1260
  %v1385 = vpack.c.bf16 %v1263, %v1262
  %v1386 = vpack.c.bf16 %v1265, %v1264
  %v1387 = vpack.c.bf16 %v1267, %v1266
  %v1388 = vpack.c.bf16 %v1269, %v1268
  %v1389 = vpack.c.bf16 %v1271, %v1270
  %v1390 = vpack.c.bf16 %v1273, %v1272
  %v1391 = vpack.c.bf16 %v1275, %v1274
  %v1392 = vpack.c.bf16 %v1277, %v1276
  %v1393 = vpack.c.bf16 %v1279, %v1278
  %v1394 = vpack.c.bf16 %v1281, %v1280
  %v1395 = vpack.c.bf16 %v1283, %v1282
  %v1396 = vpack.c.bf16 %v1285, %v1284
  %v1397 = vpack.c.bf16 %v1287, %v1286
  %v1398 = vpack.c.bf16 %v1289, %v1288
  %v1399 = vpack.c.bf16 %v1291, %v1290
  %v1400 = vpack.c.bf16 %v1293, %v1292
  %v1401 = vpack.c.bf16 %v1295, %v1294
  %v1402 = vpack.c.bf16 %v1297, %v1296
  %v1403 = vpack.c.bf16 %v1299, %v1298
  %v1404 = vpack.c.bf16 %v1301, %v1300
  %v1405 = vpack.c.bf16 %v1303, %v1302
  %v1406 = vpack.c.bf16 %v1305, %v1304
  %v1407 = vpack.c.bf16 %v1307, %v1306
  %v1408 = vpack.c.bf16 %v1309, %v1308
  %v1409 = vpack.c.bf16 %v1311, %v1310
  %v1410 = vpack.c.bf16 %v1313, %v1312
  %v1411 = vpack.c.bf16 %v1315, %v1314
  %v1412 = vpack.c.bf16 %v1317, %v1316
  %v1413 = vpack.c.bf16 %v1319, %v1318
  %v1414 = vpack.c.bf16 %v1321, %v1320
  %v1415 = vpack.c.bf16 %v1323, %v1322
  %v1416 = vpack.c.bf16 %v1325, %v1324
  %v1417 = vpack.c.bf16 %v1327, %v1326
  %v1418 = vpack.c.bf16 %v1329, %v1328
  %v1419 = vpack.c.bf16 %v1331, %v1330
  %v1420 = vpack.c.bf16 %v1333, %v1332
  %v1421 = vpack.c.bf16 %v1335, %v1334
  %v1422 = vpack.c.bf16 %v1337, %v1336
  %v1423 = vpack.c.bf16 %v1339, %v1338
  %v1424 = vpack.c.bf16 %v1341, %v1340
  %v1425 = vpack.c.bf16 %v1343, %v1342
  %v1426 = vpack.c.bf16 %v1345, %v1344
  %v1427 = vpack.c.bf16 %v1347, %v1346
  %v1428 = vpack.c.bf16 %v1349, %v1348
  %v1429 = vpack.c.bf16 %v1351, %v1350
  %v1430 = vpack.c.bf16 %v1353, %v1352
  %v1431 = vpack.c.bf16 %v1355, %v1354
  %v1432 = vpack.c.bf16 %v1357, %v1356
  %v1433 = vpack.c.bf16 %v1359, %v1358
  %v1434 = vpack.c.bf16 %v1361, %v1360
  %v1435 = vpack.c.bf16 %v1363, %v1362
  %v1436 = vpack.c.bf16 %v1365, %v1364
  %v1437 = vpack.c.bf16 %v1367, %v1366
  %v1438 = vpack.c.bf16 %v1369, %v1368
  %v1439 = vpack.c.bf16 %v1371, %v1370
  %v1440 = vpack.c.bf16 %v1373, %v1372
  %v1441 = vpack.c.bf16 %v1375, %v1374
  %v1442 = vpack.c.bf16 %v1377, %v1376
  %v1443 = vpack.c.bf16 %v1379, %v1378
  %vm1444 = vcmask 60416
  %1445 = vst.msk [vmem:[#allocation2] sm:$0xf] %vm1444, 0
  %1446 = vst.msk [vmem:[#allocation2 + $0x4] sm:$0xf] %vm1444, 0
  %1447 = vst.msk [vmem:[#allocation2 + $0x8] sm:$0xf] %vm1444, 0
  %1448 = vst.msk [vmem:[#allocation2 + $0xc] sm:$0xf] %vm1444, 0
  %1449 = vst.msk [vmem:[#allocation2 + $0x10] sm:$0xf] %vm1444, 0
  %1450 = vst.msk [vmem:[#allocation2 + $0x14] sm:$0xf] %vm1444, 0
  %1451 = vst.msk [vmem:[#allocation2 + $0x18] sm:$0xf] %vm1444, 0
  %1452 = vst.msk [vmem:[#allocation2 + $0x1c] sm:$0xf] %vm1444, 0
  %1453 = vst.msk [vmem:[#allocation2 + $0x20] sm:$0xf] %vm1444, 0
  %1454 = vst.msk [vmem:[#allocation2 + $0x24] sm:$0xf] %vm1444, 0
  %1455 = vst.msk [vmem:[#allocation2 + $0x28] sm:$0xf] %vm1444, 0
  %1456 = vst.msk [vmem:[#allocation2 + $0x2c] sm:$0xf] %vm1444, 0
  %1457 = vst.msk [vmem:[#allocation2 + $0x30] sm:$0xf] %vm1444, 0
  %1458 = vst.msk [vmem:[#allocation2 + $0x34] sm:$0xf] %vm1444, 0
  %1459 = vst.msk [vmem:[#allocation2 + $0x38] sm:$0xf] %vm1444, 0
  %1460 = vst.msk [vmem:[#allocation2 + $0x3c] sm:$0xf] %vm1444, 0
  %1461 = vst.msk [vmem:[#allocation2 + $0x40] sm:$0xf] %vm1444, 0
  %1462 = vst.msk [vmem:[#allocation2 + $0x44] sm:$0xf] %vm1444, 0
  %1463 = vst.msk [vmem:[#allocation2 + $0x48] sm:$0xf] %vm1444, 0
  %1464 = vst.msk [vmem:[#allocation2 + $0x4c] sm:$0xf] %vm1444, 0
  %1465 = vst.msk [vmem:[#allocation2 + $0x2d0] sm:$0xf] %vm1444, 0
  %1466 = vst.msk [vmem:[#allocation2 + $0x2d4] sm:$0xf] %vm1444, 0
  %1467 = vst.msk [vmem:[#allocation2 + $0x2d8] sm:$0xf] %vm1444, 0
  %1468 = vst.msk [vmem:[#allocation2 + $0x2dc] sm:$0xf] %vm1444, 0
  %1469 = vst.msk [vmem:[#allocation2 + $0x2e0] sm:$0xf] %vm1444, 0
  %1470 = vst.msk [vmem:[#allocation2 + $0x2e4] sm:$0xf] %vm1444, 0
  %1471 = vst.msk [vmem:[#allocation2 + $0x2e8] sm:$0xf] %vm1444, 0
  %1472 = vst.msk [vmem:[#allocation2 + $0x2ec] sm:$0xf] %vm1444, 0
  %1473 = vst.msk [vmem:[#allocation2 + $0x2f0] sm:$0xf] %vm1444, 0
  %1474 = vst.msk [vmem:[#allocation2 + $0x2f4] sm:$0xf] %vm1444, 0
  %1475 = vst.msk [vmem:[#allocation2 + $0x2f8] sm:$0xf] %vm1444, 0
  %1476 = vst.msk [vmem:[#allocation2 + $0x2fc] sm:$0xf] %vm1444, 0
  %1477 = vst.msk [vmem:[#allocation2 + $0x300] sm:$0xf] %vm1444, 0
  %1478 = vst.msk [vmem:[#allocation2 + $0x304] sm:$0xf] %vm1444, 0
  %1479 = vst.msk [vmem:[#allocation2 + $0x308] sm:$0xf] %vm1444, 0
  %1480 = vst.msk [vmem:[#allocation2 + $0x30c] sm:$0xf] %vm1444, 0
  %1481 = vst.msk [vmem:[#allocation2 + $0x310] sm:$0xf] %vm1444, 0
  %1482 = vst.msk [vmem:[#allocation2 + $0x314] sm:$0xf] %vm1444, 0
  %1483 = vst.msk [vmem:[#allocation2 + $0x318] sm:$0xf] %vm1444, 0
  %1484 = vst.msk [vmem:[#allocation2 + $0x31c] sm:$0xf] %vm1444, 0
  %v1494 = vunpack.c.l.b16 0
  %v1495 = vunpack.c.h.b16 0
  %v1496 = vunpack.c.l.b16 %v1380
  %v1497 = vunpack.c.h.b16 %v1380
  %v1498 = vunpack.c.l.b16 %v1381
  %v1499 = vunpack.c.h.b16 %v1381
  %v1500 = vunpack.c.l.b16 %v1382
  %v1501 = vunpack.c.h.b16 %v1382
  %v1502 = vunpack.c.l.b16 %v1383
  %v1503 = vunpack.c.h.b16 %v1383
  %v1504 = vunpack.c.l.b16 %v1384
  %v1505 = vunpack.c.h.b16 %v1384
  %v1506 = vunpack.c.l.b16 %v1385
  %v1507 = vunpack.c.h.b16 %v1385
  %v1508 = vunpack.c.l.b16 %v1386
  %v1509 = vunpack.c.h.b16 %v1386
  %v1510 = vunpack.c.l.b16 %v1387
  %v1511 = vunpack.c.h.b16 %v1387
  %v1512 = vpack.c.b16 %v1494, %v1494
  %v1513 = vpack.c.b16 %v1495, %v1495
  %v1514 = vpack.c.b16 %v1496, %v1496
  %v1515 = vpack.c.b16 %v1497, %v1497
  %v1516 = vpack.c.b16 %v1498, %v1498
  %v1517 = vpack.c.b16 %v1499, %v1499
  %v1518 = vpack.c.b16 %v1500, %v1500
  %v1519 = vpack.c.b16 %v1501, %v1501
  %v1520 = vpack.c.b16 %v1502, %v1502
  %v1521 = vpack.c.b16 %v1503, %v1503
  %v1522 = vpack.c.b16 %v1504, %v1504
  %v1523 = vpack.c.b16 %v1505, %v1505
  %v1524 = vpack.c.b16 %v1506, %v1506
  %v1525 = vpack.c.b16 %v1507, %v1507
  %v1526 = vpack.c.b16 %v1508, %v1508
  %v1527 = vpack.c.b16 %v1509, %v1509
  %v1528 = vpack.c.b16 %v1510, %v1510
  %v1529 = vpack.c.b16 %v1511, %v1511
  %1548 = vst.msk [vmem:[#allocation2 + $0x50] sm:$0xf] %vm1444, %v1512
  %1549 = vst.msk [vmem:[#allocation2 + $0x54] sm:$0xf] %vm1444, %v1513
  %1550 = vst.msk [vmem:[#allocation2 + $0x58] sm:$0xf] %vm1444, %v1514
  %1551 = vst.msk [vmem:[#allocation2 + $0x5c] sm:$0xf] %vm1444, %v1515
  %1552 = vst.msk [vmem:[#allocation2 + $0x60] sm:$0xf] %vm1444, %v1516
  %1553 = vst.msk [vmem:[#allocation2 + $0x64] sm:$0xf] %vm1444, %v1517
  %1554 = vst.msk [vmem:[#allocation2 + $0x68] sm:$0xf] %vm1444, %v1518
  %1555 = vst.msk [vmem:[#allocation2 + $0x6c] sm:$0xf] %vm1444, %v1519
  %1556 = vst.msk [vmem:[#allocation2 + $0x70] sm:$0xf] %vm1444, %v1520
  %1557 = vst.msk [vmem:[#allocation2 + $0x74] sm:$0xf] %vm1444, %v1521
  %1558 = vst.msk [vmem:[#allocation2 + $0x78] sm:$0xf] %vm1444, %v1522
  %1559 = vst.msk [vmem:[#allocation2 + $0x7c] sm:$0xf] %vm1444, %v1523
  %1560 = vst.msk [vmem:[#allocation2 + $0x80] sm:$0xf] %vm1444, %v1524
  %1561 = vst.msk [vmem:[#allocation2 + $0x84] sm:$0xf] %vm1444, %v1525
  %1562 = vst.msk [vmem:[#allocation2 + $0x88] sm:$0xf] %vm1444, %v1526
  %1563 = vst.msk [vmem:[#allocation2 + $0x8c] sm:$0xf] %vm1444, %v1527
  %1564 = vst.msk [vmem:[#allocation2 + $0x90] sm:$0xf] %vm1444, %v1528
  %1565 = vst.msk [vmem:[#allocation2 + $0x94] sm:$0xf] %vm1444, %v1529
  %1566 = vst.msk [vmem:[#allocation2 + $0x98] sm:$0xf] %vm1444, %v1512
  %1567 = vst.msk [vmem:[#allocation2 + $0x9c] sm:$0xf] %vm1444, %v1513
  %v1576 = vunpack.c.l.b16 %v1388
  %v1577 = vunpack.c.h.b16 %v1388
  %v1578 = vunpack.c.l.b16 %v1389
  %v1579 = vunpack.c.h.b16 %v1389
  %v1580 = vunpack.c.l.b16 %v1390
  %v1581 = vunpack.c.h.b16 %v1390
  %v1582 = vunpack.c.l.b16 %v1391
  %v1583 = vunpack.c.h.b16 %v1391
  %v1584 = vunpack.c.l.b16 %v1392
  %v1585 = vunpack.c.h.b16 %v1392
  %v1586 = vunpack.c.l.b16 %v1393
  %v1587 = vunpack.c.h.b16 %v1393
  %v1588 = vunpack.c.l.b16 %v1394
  %v1589 = vunpack.c.h.b16 %v1394
  %v1590 = vunpack.c.l.b16 %v1395
  %v1591 = vunpack.c.h.b16 %v1395
  %v1592 = vpack.c.b16 %v1576, %v1576
  %v1593 = vpack.c.b16 %v1577, %v1577
  %v1594 = vpack.c.b16 %v1578, %v1578
  %v1595 = vpack.c.b16 %v1579, %v1579
  %v1596 = vpack.c.b16 %v1580, %v1580
  %v1597 = vpack.c.b16 %v1581, %v1581
  %v1598 = vpack.c.b16 %v1582, %v1582
  %v1599 = vpack.c.b16 %v1583, %v1583
  %v1600 = vpack.c.b16 %v1584, %v1584
  %v1601 = vpack.c.b16 %v1585, %v1585
  %v1602 = vpack.c.b16 %v1586, %v1586
  %v1603 = vpack.c.b16 %v1587, %v1587
  %v1604 = vpack.c.b16 %v1588, %v1588
  %v1605 = vpack.c.b16 %v1589, %v1589
  %v1606 = vpack.c.b16 %v1590, %v1590
  %v1607 = vpack.c.b16 %v1591, %v1591
  %1624 = vst.msk [vmem:[#allocation2 + $0xa0] sm:$0xf] %vm1444, %v1512
  %1625 = vst.msk [vmem:[#allocation2 + $0xa4] sm:$0xf] %vm1444, %v1513
  %1626 = vst.msk [vmem:[#allocation2 + $0xa8] sm:$0xf] %vm1444, %v1592
  %1627 = vst.msk [vmem:[#allocation2 + $0xac] sm:$0xf] %vm1444, %v1593
  %1628 = vst.msk [vmem:[#allocation2 + $0xb0] sm:$0xf] %vm1444, %v1594
  %1629 = vst.msk [vmem:[#allocation2 + $0xb4] sm:$0xf] %vm1444, %v1595
  %1630 = vst.msk [vmem:[#allocation2 + $0xb8] sm:$0xf] %vm1444, %v1596
  %1631 = vst.msk [vmem:[#allocation2 + $0xbc] sm:$0xf] %vm1444, %v1597
  %1632 = vst.msk [vmem:[#allocation2 + $0xc0] sm:$0xf] %vm1444, %v1598
  %1633 = vst.msk [vmem:[#allocation2 + $0xc4] sm:$0xf] %vm1444, %v1599
  %1634 = vst.msk [vmem:[#allocation2 + $0xc8] sm:$0xf] %vm1444, %v1600
  %1635 = vst.msk [vmem:[#allocation2 + $0xcc] sm:$0xf] %vm1444, %v1601
  %1636 = vst.msk [vmem:[#allocation2 + $0xd0] sm:$0xf] %vm1444, %v1602
  %1637 = vst.msk [vmem:[#allocation2 + $0xd4] sm:$0xf] %vm1444, %v1603
  %1638 = vst.msk [vmem:[#allocation2 + $0xd8] sm:$0xf] %vm1444, %v1604
  %1639 = vst.msk [vmem:[#allocation2 + $0xdc] sm:$0xf] %vm1444, %v1605
  %1640 = vst.msk [vmem:[#allocation2 + $0xe0] sm:$0xf] %vm1444, %v1606
  %1641 = vst.msk [vmem:[#allocation2 + $0xe4] sm:$0xf] %vm1444, %v1607
  %1642 = vst.msk [vmem:[#allocation2 + $0xe8] sm:$0xf] %vm1444, %v1512
  %1643 = vst.msk [vmem:[#allocation2 + $0xec] sm:$0xf] %vm1444, %v1513
  %v1652 = vunpack.c.l.b16 %v1396
  %v1653 = vunpack.c.h.b16 %v1396
  %v1654 = vunpack.c.l.b16 %v1397
  %v1655 = vunpack.c.h.b16 %v1397
  %v1656 = vunpack.c.l.b16 %v1398
  %v1657 = vunpack.c.h.b16 %v1398
  %v1658 = vunpack.c.l.b16 %v1399
  %v1659 = vunpack.c.h.b16 %v1399
  %v1660 = vunpack.c.l.b16 %v1400
  %v1661 = vunpack.c.h.b16 %v1400
  %v1662 = vunpack.c.l.b16 %v1401
  %v1663 = vunpack.c.h.b16 %v1401
  %v1664 = vunpack.c.l.b16 %v1402
  %v1665 = vunpack.c.h.b16 %v1402
  %v1666 = vunpack.c.l.b16 %v1403
  %v1667 = vunpack.c.h.b16 %v1403
  %v1668 = vpack.c.b16 %v1652, %v1652
  %v1669 = vpack.c.b16 %v1653, %v1653
  %v1670 = vpack.c.b16 %v1654, %v1654
  %v1671 = vpack.c.b16 %v1655, %v1655
  %v1672 = vpack.c.b16 %v1656, %v1656
  %v1673 = vpack.c.b16 %v1657, %v1657
  %v1674 = vpack.c.b16 %v1658, %v1658
  %v1675 = vpack.c.b16 %v1659, %v1659
  %v1676 = vpack.c.b16 %v1660, %v1660
  %v1677 = vpack.c.b16 %v1661, %v1661
  %v1678 = vpack.c.b16 %v1662, %v1662
  %v1679 = vpack.c.b16 %v1663, %v1663
  %v1680 = vpack.c.b16 %v1664, %v1664
  %v1681 = vpack.c.b16 %v1665, %v1665
  %v1682 = vpack.c.b16 %v1666, %v1666
  %v1683 = vpack.c.b16 %v1667, %v1667
  %1700 = vst.msk [vmem:[#allocation2 + $0xf0] sm:$0xf] %vm1444, %v1512
  %1701 = vst.msk [vmem:[#allocation2 + $0xf4] sm:$0xf] %vm1444, %v1513
  %1702 = vst.msk [vmem:[#allocation2 + $0xf8] sm:$0xf] %vm1444, %v1668
  %1703 = vst.msk [vmem:[#allocation2 + $0xfc] sm:$0xf] %vm1444, %v1669
  %1704 = vst.msk [vmem:[#allocation2 + $0x100] sm:$0xf] %vm1444, %v1670
  %1705 = vst.msk [vmem:[#allocation2 + $0x104] sm:$0xf] %vm1444, %v1671
  %1706 = vst.msk [vmem:[#allocation2 + $0x108] sm:$0xf] %vm1444, %v1672
  %1707 = vst.msk [vmem:[#allocation2 + $0x10c] sm:$0xf] %vm1444, %v1673
  %1708 = vst.msk [vmem:[#allocation2 + $0x110] sm:$0xf] %vm1444, %v1674
  %1709 = vst.msk [vmem:[#allocation2 + $0x114] sm:$0xf] %vm1444, %v1675
  %1710 = vst.msk [vmem:[#allocation2 + $0x118] sm:$0xf] %vm1444, %v1676
  %1711 = vst.msk [vmem:[#allocation2 + $0x11c] sm:$0xf] %vm1444, %v1677
  %1712 = vst.msk [vmem:[#allocation2 + $0x120] sm:$0xf] %vm1444, %v1678
  %1713 = vst.msk [vmem:[#allocation2 + $0x124] sm:$0xf] %vm1444, %v1679
  %1714 = vst.msk [vmem:[#allocation2 + $0x128] sm:$0xf] %vm1444, %v1680
  %1715 = vst.msk [vmem:[#allocation2 + $0x12c] sm:$0xf] %vm1444, %v1681
  %1716 = vst.msk [vmem:[#allocation2 + $0x130] sm:$0xf] %vm1444, %v1682
  %1717 = vst.msk [vmem:[#allocation2 + $0x134] sm:$0xf] %vm1444, %v1683
  %1718 = vst.msk [vmem:[#allocation2 + $0x138] sm:$0xf] %vm1444, %v1512
  %1719 = vst.msk [vmem:[#allocation2 + $0x13c] sm:$0xf] %vm1444, %v1513
  %v1728 = vunpack.c.l.b16 %v1404
  %v1729 = vunpack.c.h.b16 %v1404
  %v1730 = vunpack.c.l.b16 %v1405
  %v1731 = vunpack.c.h.b16 %v1405
  %v1732 = vunpack.c.l.b16 %v1406
  %v1733 = vunpack.c.h.b16 %v1406
  %v1734 = vunpack.c.l.b16 %v1407
  %v1735 = vunpack.c.h.b16 %v1407
  %v1736 = vunpack.c.l.b16 %v1408
  %v1737 = vunpack.c.h.b16 %v1408
  %v1738 = vunpack.c.l.b16 %v1409
  %v1739 = vunpack.c.h.b16 %v1409
  %v1740 = vunpack.c.l.b16 %v1410
  %v1741 = vunpack.c.h.b16 %v1410
  %v1742 = vunpack.c.l.b16 %v1411
  %v1743 = vunpack.c.h.b16 %v1411
  %v1744 = vpack.c.b16 %v1728, %v1728
  %v1745 = vpack.c.b16 %v1729, %v1729
  %v1746 = vpack.c.b16 %v1730, %v1730
  %v1747 = vpack.c.b16 %v1731, %v1731
  %v1748 = vpack.c.b16 %v1732, %v1732
  %v1749 = vpack.c.b16 %v1733, %v1733
  %v1750 = vpack.c.b16 %v1734, %v1734
  %v1751 = vpack.c.b16 %v1735, %v1735
  %v1752 = vpack.c.b16 %v1736, %v1736
  %v1753 = vpack.c.b16 %v1737, %v1737
  %v1754 = vpack.c.b16 %v1738, %v1738
  %v1755 = vpack.c.b16 %v1739, %v1739
  %v1756 = vpack.c.b16 %v1740, %v1740
  %v1757 = vpack.c.b16 %v1741, %v1741
  %v1758 = vpack.c.b16 %v1742, %v1742
  %v1759 = vpack.c.b16 %v1743, %v1743
  %1776 = vst.msk [vmem:[#allocation2 + $0x140] sm:$0xf] %vm1444, %v1512
  %1777 = vst.msk [vmem:[#allocation2 + $0x144] sm:$0xf] %vm1444, %v1513
  %1778 = vst.msk [vmem:[#allocation2 + $0x148] sm:$0xf] %vm1444, %v1744
  %1779 = vst.msk [vmem:[#allocation2 + $0x14c] sm:$0xf] %vm1444, %v1745
  %1780 = vst.msk [vmem:[#allocation2 + $0x150] sm:$0xf] %vm1444, %v1746
  %1781 = vst.msk [vmem:[#allocation2 + $0x154] sm:$0xf] %vm1444, %v1747
  %1782 = vst.msk [vmem:[#allocation2 + $0x158] sm:$0xf] %vm1444, %v1748
  %1783 = vst.msk [vmem:[#allocation2 + $0x15c] sm:$0xf] %vm1444, %v1749
  %1784 = vst.msk [vmem:[#allocation2 + $0x160] sm:$0xf] %vm1444, %v1750
  %1785 = vst.msk [vmem:[#allocation2 + $0x164] sm:$0xf] %vm1444, %v1751
  %1786 = vst.msk [vmem:[#allocation2 + $0x168] sm:$0xf] %vm1444, %v1752
  %1787 = vst.msk [vmem:[#allocation2 + $0x16c] sm:$0xf] %vm1444, %v1753
  %1788 = vst.msk [vmem:[#allocation2 + $0x170] sm:$0xf] %vm1444, %v1754
  %1789 = vst.msk [vmem:[#allocation2 + $0x174] sm:$0xf] %vm1444, %v1755
  %1790 = vst.msk [vmem:[#allocation2 + $0x178] sm:$0xf] %vm1444, %v1756
  %1791 = vst.msk [vmem:[#allocation2 + $0x17c] sm:$0xf] %vm1444, %v1757
  %1792 = vst.msk [vmem:[#allocation2 + $0x180] sm:$0xf] %vm1444, %v1758
  %1793 = vst.msk [vmem:[#allocation2 + $0x184] sm:$0xf] %vm1444, %v1759
  %1794 = vst.msk [vmem:[#allocation2 + $0x188] sm:$0xf] %vm1444, %v1512
  %1795 = vst.msk [vmem:[#allocation2 + $0x18c] sm:$0xf] %vm1444, %v1513
  %v1804 = vunpack.c.l.b16 %v1412
  %v1805 = vunpack.c.h.b16 %v1412
  %v1806 = vunpack.c.l.b16 %v1413
  %v1807 = vunpack.c.h.b16 %v1413
  %v1808 = vunpack.c.l.b16 %v1414
  %v1809 = vunpack.c.h.b16 %v1414
  %v1810 = vunpack.c.l.b16 %v1415
  %v1811 = vunpack.c.h.b16 %v1415
  %v1812 = vunpack.c.l.b16 %v1416
  %v1813 = vunpack.c.h.b16 %v1416
  %v1814 = vunpack.c.l.b16 %v1417
  %v1815 = vunpack.c.h.b16 %v1417
  %v1816 = vunpack.c.l.b16 %v1418
  %v1817 = vunpack.c.h.b16 %v1418
  %v1818 = vunpack.c.l.b16 %v1419
  %v1819 = vunpack.c.h.b16 %v1419
  %v1820 = vpack.c.b16 %v1804, %v1804
  %v1821 = vpack.c.b16 %v1805, %v1805
  %v1822 = vpack.c.b16 %v1806, %v1806
  %v1823 = vpack.c.b16 %v1807, %v1807
  %v1824 = vpack.c.b16 %v1808, %v1808
  %v1825 = vpack.c.b16 %v1809, %v1809
  %v1826 = vpack.c.b16 %v1810, %v1810
  %v1827 = vpack.c.b16 %v1811, %v1811
  %v1828 = vpack.c.b16 %v1812, %v1812
  %v1829 = vpack.c.b16 %v1813, %v1813
  %v1830 = vpack.c.b16 %v1814, %v1814
  %v1831 = vpack.c.b16 %v1815, %v1815
  %v1832 = vpack.c.b16 %v1816, %v1816
  %v1833 = vpack.c.b16 %v1817, %v1817
  %v1834 = vpack.c.b16 %v1818, %v1818
  %v1835 = vpack.c.b16 %v1819, %v1819
  %1852 = vst.msk [vmem:[#allocation2 + $0x190] sm:$0xf] %vm1444, %v1512
  %1853 = vst.msk [vmem:[#allocation2 + $0x194] sm:$0xf] %vm1444, %v1513
  %1854 = vst.msk [vmem:[#allocation2 + $0x198] sm:$0xf] %vm1444, %v1820
  %1855 = vst.msk [vmem:[#allocation2 + $0x19c] sm:$0xf] %vm1444, %v1821
  %1856 = vst.msk [vmem:[#allocation2 + $0x1a0] sm:$0xf] %vm1444, %v1822
  %1857 = vst.msk [vmem:[#allocation2 + $0x1a4] sm:$0xf] %vm1444, %v1823
  %1858 = vst.msk [vmem:[#allocation2 + $0x1a8] sm:$0xf] %vm1444, %v1824
  %1859 = vst.msk [vmem:[#allocation2 + $0x1ac] sm:$0xf] %vm1444, %v1825
  %1860 = vst.msk [vmem:[#allocation2 + $0x1b0] sm:$0xf] %vm1444, %v1826
  %1861 = vst.msk [vmem:[#allocation2 + $0x1b4] sm:$0xf] %vm1444, %v1827
  %1862 = vst.msk [vmem:[#allocation2 + $0x1b8] sm:$0xf] %vm1444, %v1828
  %1863 = vst.msk [vmem:[#allocation2 + $0x1bc] sm:$0xf] %vm1444, %v1829
  %1864 = vst.msk [vmem:[#allocation2 + $0x1c0] sm:$0xf] %vm1444, %v1830
  %1865 = vst.msk [vmem:[#allocation2 + $0x1c4] sm:$0xf] %vm1444, %v1831
  %1866 = vst.msk [vmem:[#allocation2 + $0x1c8] sm:$0xf] %vm1444, %v1832
  %1867 = vst.msk [vmem:[#allocation2 + $0x1cc] sm:$0xf] %vm1444, %v1833
  %1868 = vst.msk [vmem:[#allocation2 + $0x1d0] sm:$0xf] %vm1444, %v1834
  %1869 = vst.msk [vmem:[#allocation2 + $0x1d4] sm:$0xf] %vm1444, %v1835
  %1870 = vst.msk [vmem:[#allocation2 + $0x1d8] sm:$0xf] %vm1444, %v1512
  %1871 = vst.msk [vmem:[#allocation2 + $0x1dc] sm:$0xf] %vm1444, %v1513
  %v1880 = vunpack.c.l.b16 %v1420
  %v1881 = vunpack.c.h.b16 %v1420
  %v1882 = vunpack.c.l.b16 %v1421
  %v1883 = vunpack.c.h.b16 %v1421
  %v1884 = vunpack.c.l.b16 %v1422
  %v1885 = vunpack.c.h.b16 %v1422
  %v1886 = vunpack.c.l.b16 %v1423
  %v1887 = vunpack.c.h.b16 %v1423
  %v1888 = vunpack.c.l.b16 %v1424
  %v1889 = vunpack.c.h.b16 %v1424
  %v1890 = vunpack.c.l.b16 %v1425
  %v1891 = vunpack.c.h.b16 %v1425
  %v1892 = vunpack.c.l.b16 %v1426
  %v1893 = vunpack.c.h.b16 %v1426
  %v1894 = vunpack.c.l.b16 %v1427
  %v1895 = vunpack.c.h.b16 %v1427
  %v1896 = vpack.c.b16 %v1880, %v1880
  %v1897 = vpack.c.b16 %v1881, %v1881
  %v1898 = vpack.c.b16 %v1882, %v1882
  %v1899 = vpack.c.b16 %v1883, %v1883
  %v1900 = vpack.c.b16 %v1884, %v1884
  %v1901 = vpack.c.b16 %v1885, %v1885
  %v1902 = vpack.c.b16 %v1886, %v1886
  %v1903 = vpack.c.b16 %v1887, %v1887
  %v1904 = vpack.c.b16 %v1888, %v1888
  %v1905 = vpack.c.b16 %v1889, %v1889
  %v1906 = vpack.c.b16 %v1890, %v1890
  %v1907 = vpack.c.b16 %v1891, %v1891
  %v1908 = vpack.c.b16 %v1892, %v1892
  %v1909 = vpack.c.b16 %v1893, %v1893
  %v1910 = vpack.c.b16 %v1894, %v1894
  %v1911 = vpack.c.b16 %v1895, %v1895
  %1928 = vst.msk [vmem:[#allocation2 + $0x1e0] sm:$0xf] %vm1444, %v1512
  %1929 = vst.msk [vmem:[#allocation2 + $0x1e4] sm:$0xf] %vm1444, %v1513
  %1930 = vst.msk [vmem:[#allocation2 + $0x1e8] sm:$0xf] %vm1444, %v1896
  %1931 = vst.msk [vmem:[#allocation2 + $0x1ec] sm:$0xf] %vm1444, %v1897
  %1932 = vst.msk [vmem:[#allocation2 + $0x1f0] sm:$0xf] %vm1444, %v1898
  %1933 = vst.msk [vmem:[#allocation2 + $0x1f4] sm:$0xf] %vm1444, %v1899
  %1934 = vst.msk [vmem:[#allocation2 + $0x1f8] sm:$0xf] %vm1444, %v1900
  %1935 = vst.msk [vmem:[#allocation2 + $0x1fc] sm:$0xf] %vm1444, %v1901
  %1936 = vst.msk [vmem:[#allocation2 + $0x200] sm:$0xf] %vm1444, %v1902
  %1937 = vst.msk [vmem:[#allocation2 + $0x204] sm:$0xf] %vm1444, %v1903
  %1938 = vst.msk [vmem:[#allocation2 + $0x208] sm:$0xf] %vm1444, %v1904
  %1939 = vst.msk [vmem:[#allocation2 + $0x20c] sm:$0xf] %vm1444, %v1905
  %1940 = vst.msk [vmem:[#allocation2 + $0x210] sm:$0xf] %vm1444, %v1906
  %1941 = vst.msk [vmem:[#allocation2 + $0x214] sm:$0xf] %vm1444, %v1907
  %1942 = vst.msk [vmem:[#allocation2 + $0x218] sm:$0xf] %vm1444, %v1908
  %1943 = vst.msk [vmem:[#allocation2 + $0x21c] sm:$0xf] %vm1444, %v1909
  %1944 = vst.msk [vmem:[#allocation2 + $0x220] sm:$0xf] %vm1444, %v1910
  %1945 = vst.msk [vmem:[#allocation2 + $0x224] sm:$0xf] %vm1444, %v1911
  %1946 = vst.msk [vmem:[#allocation2 + $0x228] sm:$0xf] %vm1444, %v1512
  %1947 = vst.msk [vmem:[#allocation2 + $0x22c] sm:$0xf] %vm1444, %v1513
  %v1956 = vunpack.c.l.b16 %v1428
  %v1957 = vunpack.c.h.b16 %v1428
  %v1958 = vunpack.c.l.b16 %v1429
  %v1959 = vunpack.c.h.b16 %v1429
  %v1960 = vunpack.c.l.b16 %v1430
  %v1961 = vunpack.c.h.b16 %v1430
  %v1962 = vunpack.c.l.b16 %v1431
  %v1963 = vunpack.c.h.b16 %v1431
  %v1964 = vunpack.c.l.b16 %v1432
  %v1965 = vunpack.c.h.b16 %v1432
  %v1966 = vunpack.c.l.b16 %v1433
  %v1967 = vunpack.c.h.b16 %v1433
  %v1968 = vunpack.c.l.b16 %v1434
  %v1969 = vunpack.c.h.b16 %v1434
  %v1970 = vunpack.c.l.b16 %v1435
  %v1971 = vunpack.c.h.b16 %v1435
  %v1972 = vpack.c.b16 %v1956, %v1956
  %v1973 = vpack.c.b16 %v1957, %v1957
  %v1974 = vpack.c.b16 %v1958, %v1958
  %v1975 = vpack.c.b16 %v1959, %v1959
  %v1976 = vpack.c.b16 %v1960, %v1960
  %v1977 = vpack.c.b16 %v1961, %v1961
  %v1978 = vpack.c.b16 %v1962, %v1962
  %v1979 = vpack.c.b16 %v1963, %v1963
  %v1980 = vpack.c.b16 %v1964, %v1964
  %v1981 = vpack.c.b16 %v1965, %v1965
  %v1982 = vpack.c.b16 %v1966, %v1966
  %v1983 = vpack.c.b16 %v1967, %v1967
  %v1984 = vpack.c.b16 %v1968, %v1968
  %v1985 = vpack.c.b16 %v1969, %v1969
  %v1986 = vpack.c.b16 %v1970, %v1970
  %v1987 = vpack.c.b16 %v1971, %v1971
  %2004 = vst.msk [vmem:[#allocation2 + $0x230] sm:$0xf] %vm1444, %v1512
  %2005 = vst.msk [vmem:[#allocation2 + $0x234] sm:$0xf] %vm1444, %v1513
  %2006 = vst.msk [vmem:[#allocation2 + $0x238] sm:$0xf] %vm1444, %v1972
  %2007 = vst.msk [vmem:[#allocation2 + $0x23c] sm:$0xf] %vm1444, %v1973
  %2008 = vst.msk [vmem:[#allocation2 + $0x240] sm:$0xf] %vm1444, %v1974
  %2009 = vst.msk [vmem:[#allocation2 + $0x244] sm:$0xf] %vm1444, %v1975
  %2010 = vst.msk [vmem:[#allocation2 + $0x248] sm:$0xf] %vm1444, %v1976
  %2011 = vst.msk [vmem:[#allocation2 + $0x24c] sm:$0xf] %vm1444, %v1977
  %2012 = vst.msk [vmem:[#allocation2 + $0x250] sm:$0xf] %vm1444, %v1978
  %2013 = vst.msk [vmem:[#allocation2 + $0x254] sm:$0xf] %vm1444, %v1979
  %2014 = vst.msk [vmem:[#allocation2 + $0x258] sm:$0xf] %vm1444, %v1980
  %2015 = vst.msk [vmem:[#allocation2 + $0x25c] sm:$0xf] %vm1444, %v1981
  %2016 = vst.msk [vmem:[#allocation2 + $0x260] sm:$0xf] %vm1444, %v1982
  %2017 = vst.msk [vmem:[#allocation2 + $0x264] sm:$0xf] %vm1444, %v1983
  %2018 = vst.msk [vmem:[#allocation2 + $0x268] sm:$0xf] %vm1444, %v1984
  %2019 = vst.msk [vmem:[#allocation2 + $0x26c] sm:$0xf] %vm1444, %v1985
  %2020 = vst.msk [vmem:[#allocation2 + $0x270] sm:$0xf] %vm1444, %v1986
  %2021 = vst.msk [vmem:[#allocation2 + $0x274] sm:$0xf] %vm1444, %v1987
  %2022 = vst.msk [vmem:[#allocation2 + $0x278] sm:$0xf] %vm1444, %v1512
  %2023 = vst.msk [vmem:[#allocation2 + $0x27c] sm:$0xf] %vm1444, %v1513
  %v2032 = vunpack.c.l.b16 %v1436
  %v2033 = vunpack.c.h.b16 %v1436
  %v2034 = vunpack.c.l.b16 %v1437
  %v2035 = vunpack.c.h.b16 %v1437
  %v2036 = vunpack.c.l.b16 %v1438
  %v2037 = vunpack.c.h.b16 %v1438
  %v2038 = vunpack.c.l.b16 %v1439
  %v2039 = vunpack.c.h.b16 %v1439
  %v2040 = vunpack.c.l.b16 %v1440
  %v2041 = vunpack.c.h.b16 %v1440
  %v2042 = vunpack.c.l.b16 %v1441
  %v2043 = vunpack.c.h.b16 %v1441
  %v2044 = vunpack.c.l.b16 %v1442
  %v2045 = vunpack.c.h.b16 %v1442
  %v2046 = vunpack.c.l.b16 %v1443
  %v2047 = vunpack.c.h.b16 %v1443
  %v2048 = vpack.c.b16 %v2032, %v2032
  %v2049 = vpack.c.b16 %v2033, %v2033
  %v2050 = vpack.c.b16 %v2034, %v2034
  %v2051 = vpack.c.b16 %v2035, %v2035
  %v2052 = vpack.c.b16 %v2036, %v2036
  %v2053 = vpack.c.b16 %v2037, %v2037
  %v2054 = vpack.c.b16 %v2038, %v2038
  %v2055 = vpack.c.b16 %v2039, %v2039
  %v2056 = vpack.c.b16 %v2040, %v2040
  %v2057 = vpack.c.b16 %v2041, %v2041
  %v2058 = vpack.c.b16 %v2042, %v2042
  %v2059 = vpack.c.b16 %v2043, %v2043
  %v2060 = vpack.c.b16 %v2044, %v2044
  %v2061 = vpack.c.b16 %v2045, %v2045
  %v2062 = vpack.c.b16 %v2046, %v2046
  %v2063 = vpack.c.b16 %v2047, %v2047
  %2080 = vst.msk [vmem:[#allocation2 + $0x280] sm:$0xf] %vm1444, %v1512
  %2081 = vst.msk [vmem:[#allocation2 + $0x284] sm:$0xf] %vm1444, %v1513
  %2082 = vst.msk [vmem:[#allocation2 + $0x288] sm:$0xf] %vm1444, %v2048
  %2083 = vst.msk [vmem:[#allocation2 + $0x28c] sm:$0xf] %vm1444, %v2049
  %2084 = vst.msk [vmem:[#allocation2 + $0x290] sm:$0xf] %vm1444, %v2050
  %2085 = vst.msk [vmem:[#allocation2 + $0x294] sm:$0xf] %vm1444, %v2051
  %2086 = vst.msk [vmem:[#allocation2 + $0x298] sm:$0xf] %vm1444, %v2052
  %2087 = vst.msk [vmem:[#allocation2 + $0x29c] sm:$0xf] %vm1444, %v2053
  %2088 = vst.msk [vmem:[#allocation2 + $0x2a0] sm:$0xf] %vm1444, %v2054
  %2089 = vst.msk [vmem:[#allocation2 + $0x2a4] sm:$0xf] %vm1444, %v2055
  %2090 = vst.msk [vmem:[#allocation2 + $0x2a8] sm:$0xf] %vm1444, %v2056
  %2091 = vst.msk [vmem:[#allocation2 + $0x2ac] sm:$0xf] %vm1444, %v2057
  %2092 = vst.msk [vmem:[#allocation2 + $0x2b0] sm:$0xf] %vm1444, %v2058
  %2093 = vst.msk [vmem:[#allocation2 + $0x2b4] sm:$0xf] %vm1444, %v2059
  %2094 = vst.msk [vmem:[#allocation2 + $0x2b8] sm:$0xf] %vm1444, %v2060
  %2095 = vst.msk [vmem:[#allocation2 + $0x2bc] sm:$0xf] %vm1444, %v2061
  %2096 = vst.msk [vmem:[#allocation2 + $0x2c0] sm:$0xf] %vm1444, %v2062
  %2097 = vst.msk [vmem:[#allocation2 + $0x2c4] sm:$0xf] %vm1444, %v2063
  %2098 = vst.msk [vmem:[#allocation2 + $0x2c8] sm:$0xf] %vm1444, %v1512
  %2099 = vst.msk [vmem:[#allocation2 + $0x2cc] sm:$0xf] %vm1444, %v1513
  %v2100 = vld [vmem:[#allocation2] sm:$0xf]
  %v2101 = vld [vmem:[#allocation2 + $0x4] sm:$0xf]
  %v2102 = vld [vmem:[#allocation2 + $0x8] sm:$0xf]
  %v2103 = vld [vmem:[#allocation2 + $0xc] sm:$0xf]
  %v2104 = vld [vmem:[#allocation2 + $0x10] sm:$0xf]
  %v2105 = vld [vmem:[#allocation2 + $0x14] sm:$0xf]
  %v2106 = vld [vmem:[#allocation2 + $0x18] sm:$0xf]
  %v2107 = vld [vmem:[#allocation2 + $0x1c] sm:$0xf]
  %v2108 = vld [vmem:[#allocation2 + $0x20] sm:$0xf]
  %v2109 = vld [vmem:[#allocation2 + $0x24] sm:$0xf]
  %v2110 = vld [vmem:[#allocation2 + $0x28] sm:$0xf]
  %v2111 = vld [vmem:[#allocation2 + $0x2c] sm:$0xf]
  %v2112 = vld [vmem:[#allocation2 + $0x30] sm:$0xf]
  %v2113 = vld [vmem:[#allocation2 + $0x34] sm:$0xf]
  %v2114 = vld [vmem:[#allocation2 + $0x38] sm:$0xf]
  %v2115 = vld [vmem:[#allocation2 + $0x3c] sm:$0xf]
  %v2116 = vld [vmem:[#allocation2 + $0x40] sm:$0xf]
  %v2117 = vld [vmem:[#allocation2 + $0x44] sm:$0xf]
  %v2118 = vld [vmem:[#allocation2 + $0x48] sm:$0xf]
  %v2119 = vld [vmem:[#allocation2 + $0x4c] sm:$0xf]
  %v2120 = vld [vmem:[#allocation2 + $0x50] sm:$0xf]
  %v2121 = vld [vmem:[#allocation2 + $0x54] sm:$0xf]
  %v2122 = vld [vmem:[#allocation2 + $0x58] sm:$0xf]
  %v2123 = vld [vmem:[#allocation2 + $0x5c] sm:$0xf]
  %v2124 = vld [vmem:[#allocation2 + $0x60] sm:$0xf]
  %v2125 = vld [vmem:[#allocation2 + $0x64] sm:$0xf]
  %v2126 = vld [vmem:[#allocation2 + $0x68] sm:$0xf]
  %v2127 = vld [vmem:[#allocation2 + $0x6c] sm:$0xf]
  %v2128 = vld [vmem:[#allocation2 + $0x70] sm:$0xf]
  %v2129 = vld [vmem:[#allocation2 + $0x74] sm:$0xf]
  %v2130 = vld [vmem:[#allocation2 + $0x78] sm:$0xf]
  %v2131 = vld [vmem:[#allocation2 + $0x7c] sm:$0xf]
  %v2132 = vld [vmem:[#allocation2 + $0x80] sm:$0xf]
  %v2133 = vld [vmem:[#allocation2 + $0x84] sm:$0xf]
  %v2134 = vld [vmem:[#allocation2 + $0x88] sm:$0xf]
  %v2135 = vld [vmem:[#allocation2 + $0x8c] sm:$0xf]
  %v2136 = vld [vmem:[#allocation2 + $0x90] sm:$0xf]
  %v2137 = vld [vmem:[#allocation2 + $0x94] sm:$0xf]
  %v2138 = vld [vmem:[#allocation2 + $0x98] sm:$0xf]
  %v2139 = vld [vmem:[#allocation2 + $0x9c] sm:$0xf]
  %v2140 = vld [vmem:[#allocation2 + $0xa0] sm:$0xf]
  %v2141 = vld [vmem:[#allocation2 + $0xa4] sm:$0xf]
  %v2142 = vld [vmem:[#allocation2 + $0xa8] sm:$0xf]
  %v2143 = vld [vmem:[#allocation2 + $0xac] sm:$0xf]
  %v2144 = vld [vmem:[#allocation2 + $0xb0] sm:$0xf]
  %v2145 = vld [vmem:[#allocation2 + $0xb4] sm:$0xf]
  %v2146 = vld [vmem:[#allocation2 + $0xb8] sm:$0xf]
  %v2147 = vld [vmem:[#allocation2 + $0xbc] sm:$0xf]
  %v2148 = vld [vmem:[#allocation2 + $0xc0] sm:$0xf]
  %v2149 = vld [vmem:[#allocation2 + $0xc4] sm:$0xf]
  %v2150 = vld [vmem:[#allocation2 + $0xc8] sm:$0xf]
  %v2151 = vld [vmem:[#allocation2 + $0xcc] sm:$0xf]
  %v2152 = vld [vmem:[#allocation2 + $0xd0] sm:$0xf]
  %v2153 = vld [vmem:[#allocation2 + $0xd4] sm:$0xf]
  %v2154 = vld [vmem:[#allocation2 + $0xd8] sm:$0xf]
  %v2155 = vld [vmem:[#allocation2 + $0xdc] sm:$0xf]
  %v2156 = vld [vmem:[#allocation2 + $0xe0] sm:$0xf]
  %v2157 = vld [vmem:[#allocation2 + $0xe4] sm:$0xf]
  %v2158 = vld [vmem:[#allocation2 + $0xe8] sm:$0xf]
  %v2159 = vld [vmem:[#allocation2 + $0xec] sm:$0xf]
  %v2160 = vld [vmem:[#allocation2 + $0xf0] sm:$0xf]
  %v2161 = vld [vmem:[#allocation2 + $0xf4] sm:$0xf]
  %v2162 = vld [vmem:[#allocation2 + $0xf8] sm:$0xf]
  %v2163 = vld [vmem:[#allocation2 + $0xfc] sm:$0xf]
  %v2164 = vld [vmem:[#allocation2 + $0x100] sm:$0xf]
  %v2165 = vld [vmem:[#allocation2 + $0x104] sm:$0xf]
  %v2166 = vld [vmem:[#allocation2 + $0x108] sm:$0xf]
  %v2167 = vld [vmem:[#allocation2 + $0x10c] sm:$0xf]
  %v2168 = vld [vmem:[#allocation2 + $0x110] sm:$0xf]
  %v2169 = vld [vmem:[#allocation2 + $0x114] sm:$0xf]
  %v2170 = vld [vmem:[#allocation2 + $0x118] sm:$0xf]
  %v2171 = vld [vmem:[#allocation2 + $0x11c] sm:$0xf]
  %v2172 = vld [vmem:[#allocation2 + $0x120] sm:$0xf]
  %v2173 = vld [vmem:[#allocation2 + $0x124] sm:$0xf]
  %v2174 = vld [vmem:[#allocation2 + $0x128] sm:$0xf]
  %v2175 = vld [vmem:[#allocation2 + $0x12c] sm:$0xf]
  %v2176 = vld [vmem:[#allocation2 + $0x130] sm:$0xf]
  %v2177 = vld [vmem:[#allocation2 + $0x134] sm:$0xf]
  %v2178 = vld [vmem:[#allocation2 + $0x138] sm:$0xf]
  %v2179 = vld [vmem:[#allocation2 + $0x13c] sm:$0xf]
  %v2180 = vld [vmem:[#allocation2 + $0x140] sm:$0xf]
  %v2181 = vld [vmem:[#allocation2 + $0x144] sm:$0xf]
  %v2182 = vld [vmem:[#allocation2 + $0x148] sm:$0xf]
  %v2183 = vld [vmem:[#allocation2 + $0x14c] sm:$0xf]
  %v2184 = vld [vmem:[#allocation2 + $0x150] sm:$0xf]
  %v2185 = vld [vmem:[#allocation2 + $0x154] sm:$0xf]
  %v2186 = vld [vmem:[#allocation2 + $0x158] sm:$0xf]
  %v2187 = vld [vmem:[#allocation2 + $0x15c] sm:$0xf]
  %v2188 = vld [vmem:[#allocation2 + $0x160] sm:$0xf]
  %v2189 = vld [vmem:[#allocation2 + $0x164] sm:$0xf]
  %v2190 = vld [vmem:[#allocation2 + $0x168] sm:$0xf]
  %v2191 = vld [vmem:[#allocation2 + $0x16c] sm:$0xf]
  %v2192 = vld [vmem:[#allocation2 + $0x170] sm:$0xf]
  %v2193 = vld [vmem:[#allocation2 + $0x174] sm:$0xf]
  %v2194 = vld [vmem:[#allocation2 + $0x178] sm:$0xf]
  %v2195 = vld [vmem:[#allocation2 + $0x17c] sm:$0xf]
  %v2196 = vld [vmem:[#allocation2 + $0x180] sm:$0xf]
  %v2197 = vld [vmem:[#allocation2 + $0x184] sm:$0xf]
  %v2198 = vld [vmem:[#allocation2 + $0x188] sm:$0xf]
  %v2199 = vld [vmem:[#allocation2 + $0x18c] sm:$0xf]
  %v2200 = vld [vmem:[#allocation2 + $0x190] sm:$0xf]
  %v2201 = vld [vmem:[#allocation2 + $0x194] sm:$0xf]
  %v2202 = vld [vmem:[#allocation2 + $0x198] sm:$0xf]
  %v2203 = vld [vmem:[#allocation2 + $0x19c] sm:$0xf]
  %v2204 = vld [vmem:[#allocation2 + $0x1a0] sm:$0xf]
  %v2205 = vld [vmem:[#allocation2 + $0x1a4] sm:$0xf]
  %v2206 = vld [vmem:[#allocation2 + $0x1a8] sm:$0xf]
  %v2207 = vld [vmem:[#allocation2 + $0x1ac] sm:$0xf]
  %v2208 = vld [vmem:[#allocation2 + $0x1b0] sm:$0xf]
  %v2209 = vld [vmem:[#allocation2 + $0x1b4] sm:$0xf]
  %v2210 = vld [vmem:[#allocation2 + $0x1b8] sm:$0xf]
  %v2211 = vld [vmem:[#allocation2 + $0x1bc] sm:$0xf]
  %v2212 = vld [vmem:[#allocation2 + $0x1c0] sm:$0xf]
  %v2213 = vld [vmem:[#allocation2 + $0x1c4] sm:$0xf]
  %v2214 = vld [vmem:[#allocation2 + $0x1c8] sm:$0xf]
  %v2215 = vld [vmem:[#allocation2 + $0x1cc] sm:$0xf]
  %v2216 = vld [vmem:[#allocation2 + $0x1d0] sm:$0xf]
  %v2217 = vld [vmem:[#allocation2 + $0x1d4] sm:$0xf]
  %v2218 = vld [vmem:[#allocation2 + $0x1d8] sm:$0xf]
  %v2219 = vld [vmem:[#allocation2 + $0x1dc] sm:$0xf]
  %v2220 = vld [vmem:[#allocation2 + $0x1e0] sm:$0xf]
  %v2221 = vld [vmem:[#allocation2 + $0x1e4] sm:$0xf]
  %v2222 = vld [vmem:[#allocation2 + $0x1e8] sm:$0xf]
  %v2223 = vld [vmem:[#allocation2 + $0x1ec] sm:$0xf]
  %v2224 = vld [vmem:[#allocation2 + $0x1f0] sm:$0xf]
  %v2225 = vld [vmem:[#allocation2 + $0x1f4] sm:$0xf]
  %v2226 = vld [vmem:[#allocation2 + $0x1f8] sm:$0xf]
  %v2227 = vld [vmem:[#allocation2 + $0x1fc] sm:$0xf]
  %v2228 = vld [vmem:[#allocation2 + $0x200] sm:$0xf]
  %v2229 = vld [vmem:[#allocation2 + $0x204] sm:$0xf]
  %v2230 = vld [vmem:[#allocation2 + $0x208] sm:$0xf]
  %v2231 = vld [vmem:[#allocation2 + $0x20c] sm:$0xf]
  %v2232 = vld [vmem:[#allocation2 + $0x210] sm:$0xf]
  %v2233 = vld [vmem:[#allocation2 + $0x214] sm:$0xf]
  %v2234 = vld [vmem:[#allocation2 + $0x218] sm:$0xf]
  %v2235 = vld [vmem:[#allocation2 + $0x21c] sm:$0xf]
  %v2236 = vld [vmem:[#allocation2 + $0x220] sm:$0xf]
  %v2237 = vld [vmem:[#allocation2 + $0x224] sm:$0xf]
  %v2238 = vld [vmem:[#allocation2 + $0x228] sm:$0xf]
  %v2239 = vld [vmem:[#allocation2 + $0x22c] sm:$0xf]
  %v2240 = vld [vmem:[#allocation2 + $0x230] sm:$0xf]
  %v2241 = vld [vmem:[#allocation2 + $0x234] sm:$0xf]
  %v2242 = vld [vmem:[#allocation2 + $0x238] sm:$0xf]
  %v2243 = vld [vmem:[#allocation2 + $0x23c] sm:$0xf]
  %v2244 = vld [vmem:[#allocation2 + $0x240] sm:$0xf]
  %v2245 = vld [vmem:[#allocation2 + $0x244] sm:$0xf]
  %v2246 = vld [vmem:[#allocation2 + $0x248] sm:$0xf]
  %v2247 = vld [vmem:[#allocation2 + $0x24c] sm:$0xf]
  %v2248 = vld [vmem:[#allocation2 + $0x250] sm:$0xf]
  %v2249 = vld [vmem:[#allocation2 + $0x254] sm:$0xf]
  %v2250 = vld [vmem:[#allocation2 + $0x258] sm:$0xf]
  %v2251 = vld [vmem:[#allocation2 + $0x25c] sm:$0xf]
  %v2252 = vld [vmem:[#allocation2 + $0x260] sm:$0xf]
  %v2253 = vld [vmem:[#allocation2 + $0x264] sm:$0xf]
  %v2254 = vld [vmem:[#allocation2 + $0x268] sm:$0xf]
  %v2255 = vld [vmem:[#allocation2 + $0x26c] sm:$0xf]
  %v2256 = vld [vmem:[#allocation2 + $0x270] sm:$0xf]
  %v2257 = vld [vmem:[#allocation2 + $0x274] sm:$0xf]
  %v2258 = vld [vmem:[#allocation2 + $0x278] sm:$0xf]
  %v2259 = vld [vmem:[#allocation2 + $0x27c] sm:$0xf]
  %v2260 = vld [vmem:[#allocation2 + $0x280] sm:$0xf]
  %v2261 = vld [vmem:[#allocation2 + $0x284] sm:$0xf]
  %v2262 = vld [vmem:[#allocation2 + $0x288] sm:$0xf]
  %v2263 = vld [vmem:[#allocation2 + $0x28c] sm:$0xf]
  %v2264 = vld [vmem:[#allocation2 + $0x290] sm:$0xf]
  %v2265 = vld [vmem:[#allocation2 + $0x294] sm:$0xf]
  %v2266 = vld [vmem:[#allocation2 + $0x298] sm:$0xf]
  %v2267 = vld [vmem:[#allocation2 + $0x29c] sm:$0xf]
  %v2268 = vld [vmem:[#allocation2 + $0x2a0] sm:$0xf]
  %v2269 = vld [vmem:[#allocation2 + $0x2a4] sm:$0xf]
  %v2270 = vld [vmem:[#allocation2 + $0x2a8] sm:$0xf]
  %v2271 = vld [vmem:[#allocation2 + $0x2ac] sm:$0xf]
  %v2272 = vld [vmem:[#allocation2 + $0x2b0] sm:$0xf]
  %v2273 = vld [vmem:[#allocation2 + $0x2b4] sm:$0xf]
  %v2274 = vld [vmem:[#allocation2 + $0x2b8] sm:$0xf]
  %v2275 = vld [vmem:[#allocation2 + $0x2bc] sm:$0xf]
  %v2276 = vld [vmem:[#allocation2 + $0x2c0] sm:$0xf]
  %v2277 = vld [vmem:[#allocation2 + $0x2c4] sm:$0xf]
  %v2278 = vld [vmem:[#allocation2 + $0x2c8] sm:$0xf]
  %v2279 = vld [vmem:[#allocation2 + $0x2cc] sm:$0xf]
  %v2280 = vld [vmem:[#allocation2 + $0x2d0] sm:$0xf]
  %v2281 = vld [vmem:[#allocation2 + $0x2d4] sm:$0xf]
  %v2282 = vld [vmem:[#allocation2 + $0x2d8] sm:$0xf]
  %v2283 = vld [vmem:[#allocation2 + $0x2dc] sm:$0xf]
  %v2424 = vunpack.c.l.b16 %v2100
  %v2425 = vunpack.c.l.b16 %v2101
  %v2426 = vunpack.c.l.b16 %v2102
  %v2427 = vunpack.c.l.b16 %v2103
  %v2428 = vunpack.c.l.b16 %v2104
  %v2429 = vunpack.c.l.b16 %v2105
  %v2430 = vunpack.c.l.b16 %v2106
  %v2431 = vunpack.c.l.b16 %v2107
  %v2432 = vunpack.c.l.b16 %v2108
  %v2433 = vunpack.c.l.b16 %v2109
  %v2434 = vunpack.c.l.b16 %v2110
  %v2435 = vunpack.c.l.b16 %v2111
  %v2436 = vunpack.c.l.b16 %v2112
  %v2437 = vunpack.c.l.b16 %v2113
  %v2438 = vunpack.c.l.b16 %v2114
  %v2439 = vunpack.c.l.b16 %v2115
  %v2440 = vunpack.c.l.b16 %v2116
  %v2441 = vunpack.c.l.b16 %v2117
  %v2442 = vunpack.c.l.b16 %v2118
  %v2443 = vunpack.c.l.b16 %v2119
  %v2444 = vunpack.c.l.b16 %v2120
  %v2445 = vunpack.c.l.b16 %v2121
  %v2446 = vunpack.c.l.b16 %v2122
  %v2447 = vunpack.c.l.b16 %v2123
  %v2448 = vunpack.c.l.b16 %v2124
  %v2449 = vunpack.c.l.b16 %v2125
  %v2450 = vunpack.c.l.b16 %v2126
  %v2451 = vunpack.c.l.b16 %v2127
  %v2452 = vunpack.c.l.b16 %v2128
  %v2453 = vunpack.c.l.b16 %v2129
  %v2454 = vunpack.c.l.b16 %v2130
  %v2455 = vunpack.c.l.b16 %v2131
  %v2456 = vunpack.c.l.b16 %v2132
  %v2457 = vunpack.c.l.b16 %v2133
  %v2458 = vunpack.c.l.b16 %v2134
  %v2459 = vunpack.c.l.b16 %v2135
  %v2460 = vunpack.c.l.b16 %v2136
  %v2461 = vunpack.c.l.b16 %v2137
  %v2462 = vunpack.c.l.b16 %v2138
  %v2463 = vunpack.c.l.b16 %v2139
  %v2464 = vunpack.c.l.b16 %v2140
  %v2465 = vunpack.c.l.b16 %v2141
  %v2466 = vunpack.c.l.b16 %v2142
  %v2467 = vunpack.c.l.b16 %v2143
  %v2468 = vunpack.c.l.b16 %v2144
  %v2469 = vunpack.c.l.b16 %v2145
  %v2470 = vunpack.c.l.b16 %v2146
  %v2471 = vunpack.c.l.b16 %v2147
  %v2472 = vunpack.c.l.b16 %v2148
  %v2473 = vunpack.c.l.b16 %v2149
  %v2474 = vunpack.c.l.b16 %v2150
  %v2475 = vunpack.c.l.b16 %v2151
  %v2476 = vunpack.c.l.b16 %v2152
  %v2477 = vunpack.c.l.b16 %v2153
  %v2478 = vunpack.c.l.b16 %v2154
  %v2479 = vunpack.c.l.b16 %v2155
  %v2480 = vunpack.c.l.b16 %v2156
  %v2481 = vunpack.c.l.b16 %v2157
  %v2482 = vunpack.c.l.b16 %v2158
  %v2483 = vunpack.c.l.b16 %v2159
  %v2484 = vunpack.c.l.b16 %v2160
  %v2485 = vunpack.c.l.b16 %v2161
  %v2486 = vunpack.c.l.b16 %v2162
  %v2487 = vunpack.c.l.b16 %v2163
  %v2488 = vunpack.c.l.b16 %v2164
  %v2489 = vunpack.c.l.b16 %v2165
  %v2490 = vunpack.c.l.b16 %v2166
  %v2491 = vunpack.c.l.b16 %v2167
  %v2492 = vunpack.c.l.b16 %v2168
  %v2493 = vunpack.c.l.b16 %v2169
  %v2494 = vunpack.c.l.b16 %v2170
  %v2495 = vunpack.c.l.b16 %v2171
  %v2496 = vunpack.c.l.b16 %v2172
  %v2497 = vunpack.c.l.b16 %v2173
  %v2498 = vunpack.c.l.b16 %v2174
  %v2499 = vunpack.c.l.b16 %v2175
  %v2500 = vunpack.c.l.b16 %v2176
  %v2501 = vunpack.c.l.b16 %v2177
  %v2502 = vunpack.c.l.b16 %v2178
  %v2503 = vunpack.c.l.b16 %v2179
  %v2504 = vunpack.c.l.b16 %v2180
  %v2505 = vunpack.c.l.b16 %v2181
  %v2506 = vunpack.c.l.b16 %v2182
  %v2507 = vunpack.c.l.b16 %v2183
  %v2508 = vunpack.c.l.b16 %v2184
  %v2509 = vunpack.c.l.b16 %v2185
  %v2510 = vunpack.c.l.b16 %v2186
  %v2511 = vunpack.c.l.b16 %v2187
  %v2512 = vunpack.c.l.b16 %v2188
  %v2513 = vunpack.c.l.b16 %v2189
  %v2514 = vunpack.c.l.b16 %v2190
  %v2515 = vunpack.c.l.b16 %v2191
  %v2516 = vunpack.c.l.b16 %v2192
  %v2517 = vunpack.c.l.b16 %v2193
  %v2518 = vunpack.c.l.b16 %v2194
  %v2519 = vunpack.c.l.b16 %v2195
  %v2520 = vunpack.c.l.b16 %v2196
  %v2521 = vunpack.c.l.b16 %v2197
  %v2522 = vunpack.c.l.b16 %v2198
  %v2523 = vunpack.c.l.b16 %v2199
  %v2524 = vunpack.c.l.b16 %v2200
  %v2525 = vunpack.c.l.b16 %v2201
  %v2526 = vunpack.c.l.b16 %v2202
  %v2527 = vunpack.c.l.b16 %v2203
  %v2528 = vunpack.c.l.b16 %v2204
  %v2529 = vunpack.c.l.b16 %v2205
  %v2530 = vunpack.c.l.b16 %v2206
  %v2531 = vunpack.c.l.b16 %v2207
  %v2532 = vunpack.c.l.b16 %v2208
  %v2533 = vunpack.c.l.b16 %v2209
  %v2534 = vunpack.c.l.b16 %v2210
  %v2535 = vunpack.c.l.b16 %v2211
  %v2536 = vunpack.c.l.b16 %v2212
  %v2537 = vunpack.c.l.b16 %v2213
  %v2538 = vunpack.c.l.b16 %v2214
  %v2539 = vunpack.c.l.b16 %v2215
  %v2540 = vunpack.c.l.b16 %v2216
  %v2541 = vunpack.c.l.b16 %v2217
  %v2542 = vunpack.c.l.b16 %v2218
  %v2543 = vunpack.c.l.b16 %v2219
  %v2544 = vunpack.c.l.b16 %v2220
  %v2545 = vunpack.c.l.b16 %v2221
  %v2546 = vunpack.c.l.b16 %v2222
  %v2547 = vunpack.c.l.b16 %v2223
  %v2548 = vunpack.c.l.b16 %v2224
  %v2549 = vunpack.c.l.b16 %v2225
  %v2550 = vunpack.c.l.b16 %v2226
  %v2551 = vunpack.c.l.b16 %v2227
  %v2552 = vunpack.c.l.b16 %v2228
  %v2553 = vunpack.c.l.b16 %v2229
  %v2554 = vunpack.c.l.b16 %v2230
  %v2555 = vunpack.c.l.b16 %v2231
  %v2556 = vunpack.c.l.b16 %v2232
  %v2557 = vunpack.c.l.b16 %v2233
  %v2558 = vunpack.c.l.b16 %v2234
  %v2559 = vunpack.c.l.b16 %v2235
  %v2560 = vunpack.c.l.b16 %v2236
  %v2561 = vunpack.c.l.b16 %v2237
  %v2562 = vunpack.c.l.b16 %v2238
  %v2563 = vunpack.c.l.b16 %v2239
  %v2564 = vpack.c.b16 %v2425, %v2424
  %v2565 = vpack.c.b16 %v2427, %v2426
  %v2566 = vpack.c.b16 %v2429, %v2428
  %v2567 = vpack.c.b16 %v2431, %v2430
  %v2568 = vpack.c.b16 %v2433, %v2432
  %v2569 = vpack.c.b16 %v2435, %v2434
  %v2570 = vpack.c.b16 %v2437, %v2436
  %v2571 = vpack.c.b16 %v2439, %v2438
  %v2572 = vpack.c.b16 %v2441, %v2440
  %v2573 = vpack.c.b16 %v2443, %v2442
  %v2574 = vpack.c.b16 %v2445, %v2444
  %v2575 = vpack.c.b16 %v2447, %v2446
  %v2576 = vpack.c.b16 %v2449, %v2448
  %v2577 = vpack.c.b16 %v2451, %v2450
  %v2578 = vpack.c.b16 %v2453, %v2452
  %v2579 = vpack.c.b16 %v2455, %v2454
  %v2580 = vpack.c.b16 %v2457, %v2456
  %v2581 = vpack.c.b16 %v2459, %v2458
  %v2582 = vpack.c.b16 %v2461, %v2460
  %v2583 = vpack.c.b16 %v2463, %v2462
  %v2584 = vpack.c.b16 %v2465, %v2464
  %v2585 = vpack.c.b16 %v2467, %v2466
  %v2586 = vpack.c.b16 %v2469, %v2468
  %v2587 = vpack.c.b16 %v2471, %v2470
  %v2588 = vpack.c.b16 %v2473, %v2472
  %v2589 = vpack.c.b16 %v2475, %v2474
  %v2590 = vpack.c.b16 %v2477, %v2476
  %v2591 = vpack.c.b16 %v2479, %v2478
  %v2592 = vpack.c.b16 %v2481, %v2480
  %v2593 = vpack.c.b16 %v2483, %v2482
  %v2594 = vpack.c.b16 %v2485, %v2484
  %v2595 = vpack.c.b16 %v2487, %v2486
  %v2596 = vpack.c.b16 %v2489, %v2488
  %v2597 = vpack.c.b16 %v2491, %v2490
  %v2598 = vpack.c.b16 %v2493, %v2492
  %v2599 = vpack.c.b16 %v2495, %v2494
  %v2600 = vpack.c.b16 %v2497, %v2496
  %v2601 = vpack.c.b16 %v2499, %v2498
  %v2602 = vpack.c.b16 %v2501, %v2500
  %v2603 = vpack.c.b16 %v2503, %v2502
  %v2604 = vpack.c.b16 %v2505, %v2504
  %v2605 = vpack.c.b16 %v2507, %v2506
  %v2606 = vpack.c.b16 %v2509, %v2508
  %v2607 = vpack.c.b16 %v2511, %v2510
  %v2608 = vpack.c.b16 %v2513, %v2512
  %v2609 = vpack.c.b16 %v2515, %v2514
  %v2610 = vpack.c.b16 %v2517, %v2516
  %v2611 = vpack.c.b16 %v2519, %v2518
  %v2612 = vpack.c.b16 %v2521, %v2520
  %v2613 = vpack.c.b16 %v2523, %v2522
  %v2614 = vpack.c.b16 %v2525, %v2524
  %v2615 = vpack.c.b16 %v2527, %v2526
  %v2616 = vpack.c.b16 %v2529, %v2528
  %v2617 = vpack.c.b16 %v2531, %v2530
  %v2618 = vpack.c.b16 %v2533, %v2532
  %v2619 = vpack.c.b16 %v2535, %v2534
  %v2620 = vpack.c.b16 %v2537, %v2536
  %v2621 = vpack.c.b16 %v2539, %v2538
  %v2622 = vpack.c.b16 %v2541, %v2540
  %v2623 = vpack.c.b16 %v2543, %v2542
  %v2624 = vpack.c.b16 %v2545, %v2544
  %v2625 = vpack.c.b16 %v2547, %v2546
  %v2626 = vpack.c.b16 %v2549, %v2548
  %v2627 = vpack.c.b16 %v2551, %v2550
  %v2628 = vpack.c.b16 %v2553, %v2552
  %v2629 = vpack.c.b16 %v2555, %v2554
  %v2630 = vpack.c.b16 %v2557, %v2556
  %v2631 = vpack.c.b16 %v2559, %v2558
  %v2632 = vpack.c.b16 %v2561, %v2560
  %v2633 = vpack.c.b16 %v2563, %v2562
  %v2636 = vunpack.c.l.b16 %v2240
  %v2637 = vunpack.c.l.b16 %v2241
  %v2638 = vpack.c.b16 %v2637, %v2636
  %2639 = vrot.lane.b32.xlu0 %v2565, 8
  %v2640 = vpop.permute.xlu0 %2639
  %2641 = vrot.lane.b32.xlu0 %v2566, 8
  %v2642 = vpop.permute.xlu0 %2641
  %2643 = vrot.lane.b32.xlu0 %v2567, 8
  %v2644 = vpop.permute.xlu0 %2643
  %2645 = vrot.lane.b32.xlu0 %v2568, 8
  %v2646 = vpop.permute.xlu0 %2645
  %2647 = vrot.lane.b32.xlu0 %v2569, 8
  %v2648 = vpop.permute.xlu0 %2647
  %2649 = vrot.lane.b32.xlu0 %v2570, 8
  %v2650 = vpop.permute.xlu0 %2649
  %2651 = vrot.lane.b32.xlu0 %v2571, 8
  %v2652 = vpop.permute.xlu0 %2651
  %2653 = vrot.lane.b32.xlu0 %v2572, 8
  %v2654 = vpop.permute.xlu0 %2653
  %2655 = vrot.lane.b32.xlu0 %v2573, 8
  %v2656 = vpop.permute.xlu0 %2655
  %2657 = vrot.lane.b32.xlu0 %v2574, 8
  %v2658 = vpop.permute.xlu0 %2657
  %2659 = vrot.lane.b32.xlu0 %v2575, 8
  %v2660 = vpop.permute.xlu0 %2659
  %2661 = vrot.lane.b32.xlu0 %v2576, 8
  %v2662 = vpop.permute.xlu0 %2661
  %2663 = vrot.lane.b32.xlu0 %v2577, 8
  %v2664 = vpop.permute.xlu0 %2663
  %2665 = vrot.lane.b32.xlu0 %v2578, 8
  %v2666 = vpop.permute.xlu0 %2665
  %2667 = vrot.lane.b32.xlu0 %v2579, 8
  %v2668 = vpop.permute.xlu0 %2667
  %2669 = vrot.lane.b32.xlu0 %v2580, 8
  %v2670 = vpop.permute.xlu0 %2669
  %2671 = vrot.lane.b32.xlu0 %v2581, 8
  %v2672 = vpop.permute.xlu0 %2671
  %2673 = vrot.lane.b32.xlu0 %v2582, 8
  %v2674 = vpop.permute.xlu0 %2673
  %2675 = vrot.lane.b32.xlu0 %v2583, 8
  %v2676 = vpop.permute.xlu0 %2675
  %2677 = vrot.lane.b32.xlu0 %v2584, 8
  %v2678 = vpop.permute.xlu0 %2677
  %2679 = vrot.lane.b32.xlu0 %v2585, 8
  %v2680 = vpop.permute.xlu0 %2679
  %2681 = vrot.lane.b32.xlu0 %v2586, 8
  %v2682 = vpop.permute.xlu0 %2681
  %2683 = vrot.lane.b32.xlu0 %v2587, 8
  %v2684 = vpop.permute.xlu0 %2683
  %2685 = vrot.lane.b32.xlu0 %v2588, 8
  %v2686 = vpop.permute.xlu0 %2685
  %2687 = vrot.lane.b32.xlu0 %v2589, 8
  %v2688 = vpop.permute.xlu0 %2687
  %2689 = vrot.lane.b32.xlu0 %v2590, 8
  %v2690 = vpop.permute.xlu0 %2689
  %2691 = vrot.lane.b32.xlu0 %v2591, 8
  %v2692 = vpop.permute.xlu0 %2691
  %2693 = vrot.lane.b32.xlu0 %v2592, 8
  %v2694 = vpop.permute.xlu0 %2693
  %2695 = vrot.lane.b32.xlu0 %v2593, 8
  %v2696 = vpop.permute.xlu0 %2695
  %2697 = vrot.lane.b32.xlu0 %v2594, 8
  %v2698 = vpop.permute.xlu0 %2697
  %2699 = vrot.lane.b32.xlu0 %v2595, 8
  %v2700 = vpop.permute.xlu0 %2699
  %2701 = vrot.lane.b32.xlu0 %v2596, 8
  %v2702 = vpop.permute.xlu0 %2701
  %2703 = vrot.lane.b32.xlu0 %v2597, 8
  %v2704 = vpop.permute.xlu0 %2703
  %2705 = vrot.lane.b32.xlu0 %v2598, 8
  %v2706 = vpop.permute.xlu0 %2705
  %2707 = vrot.lane.b32.xlu0 %v2599, 8
  %v2708 = vpop.permute.xlu0 %2707
  %2709 = vrot.lane.b32.xlu0 %v2600, 8
  %v2710 = vpop.permute.xlu0 %2709
  %2711 = vrot.lane.b32.xlu0 %v2601, 8
  %v2712 = vpop.permute.xlu0 %2711
  %2713 = vrot.lane.b32.xlu0 %v2602, 8
  %v2714 = vpop.permute.xlu0 %2713
  %2715 = vrot.lane.b32.xlu0 %v2603, 8
  %v2716 = vpop.permute.xlu0 %2715
  %2717 = vrot.lane.b32.xlu0 %v2604, 8
  %v2718 = vpop.permute.xlu0 %2717
  %2719 = vrot.lane.b32.xlu0 %v2605, 8
  %v2720 = vpop.permute.xlu0 %2719
  %2721 = vrot.lane.b32.xlu0 %v2606, 8
  %v2722 = vpop.permute.xlu0 %2721
  %2723 = vrot.lane.b32.xlu0 %v2607, 8
  %v2724 = vpop.permute.xlu0 %2723
  %2725 = vrot.lane.b32.xlu0 %v2608, 8
  %v2726 = vpop.permute.xlu0 %2725
  %2727 = vrot.lane.b32.xlu0 %v2609, 8
  %v2728 = vpop.permute.xlu0 %2727
  %2729 = vrot.lane.b32.xlu0 %v2610, 8
  %v2730 = vpop.permute.xlu0 %2729
  %2731 = vrot.lane.b32.xlu0 %v2611, 8
  %v2732 = vpop.permute.xlu0 %2731
  %2733 = vrot.lane.b32.xlu0 %v2612, 8
  %v2734 = vpop.permute.xlu0 %2733
  %2735 = vrot.lane.b32.xlu0 %v2613, 8
  %v2736 = vpop.permute.xlu0 %2735
  %2737 = vrot.lane.b32.xlu0 %v2614, 8
  %v2738 = vpop.permute.xlu0 %2737
  %2739 = vrot.lane.b32.xlu0 %v2615, 8
  %v2740 = vpop.permute.xlu0 %2739
  %2741 = vrot.lane.b32.xlu0 %v2616, 8
  %v2742 = vpop.permute.xlu0 %2741
  %2743 = vrot.lane.b32.xlu0 %v2617, 8
  %v2744 = vpop.permute.xlu0 %2743
  %2745 = vrot.lane.b32.xlu0 %v2618, 8
  %v2746 = vpop.permute.xlu0 %2745
  %2747 = vrot.lane.b32.xlu0 %v2619, 8
  %v2748 = vpop.permute.xlu0 %2747
  %2749 = vrot.lane.b32.xlu0 %v2620, 8
  %v2750 = vpop.permute.xlu0 %2749
  %2751 = vrot.lane.b32.xlu0 %v2621, 8
  %v2752 = vpop.permute.xlu0 %2751
  %2753 = vrot.lane.b32.xlu0 %v2622, 8
  %v2754 = vpop.permute.xlu0 %2753
  %2755 = vrot.lane.b32.xlu0 %v2623, 8
  %v2756 = vpop.permute.xlu0 %2755
  %2757 = vrot.lane.b32.xlu0 %v2624, 8
  %v2758 = vpop.permute.xlu0 %2757
  %2759 = vrot.lane.b32.xlu0 %v2625, 8
  %v2760 = vpop.permute.xlu0 %2759
  %2761 = vrot.lane.b32.xlu0 %v2626, 8
  %v2762 = vpop.permute.xlu0 %2761
  %2763 = vrot.lane.b32.xlu0 %v2627, 8
  %v2764 = vpop.permute.xlu0 %2763
  %2765 = vrot.lane.b32.xlu0 %v2628, 8
  %v2766 = vpop.permute.xlu0 %2765
  %2767 = vrot.lane.b32.xlu0 %v2629, 8
  %v2768 = vpop.permute.xlu0 %2767
  %2769 = vrot.lane.b32.xlu0 %v2630, 8
  %v2770 = vpop.permute.xlu0 %2769
  %2771 = vrot.lane.b32.xlu0 %v2631, 8
  %v2772 = vpop.permute.xlu0 %2771
  %2773 = vrot.lane.b32.xlu0 %v2632, 8
  %v2774 = vpop.permute.xlu0 %2773
  %2775 = vrot.lane.b32.xlu0 %v2633, 8
  %v2776 = vpop.permute.xlu0 %2775
  %2777 = vrot.lane.b32.xlu0 %v2638, 8
  %v2778 = vpop.permute.xlu0 %2777
  %v2781 = vunpack.c.l.b16 %v2242
  %v2782 = vunpack.c.l.b16 %v2243
  %v2783 = vpack.c.b16 %v2782, %v2781
  %2784 = vrot.lane.b32.xlu0 %v2566, 16
  %v2785 = vpop.permute.xlu0 %2784
  %2786 = vrot.lane.b32.xlu0 %v2567, 16
  %v2787 = vpop.permute.xlu0 %2786
  %2788 = vrot.lane.b32.xlu0 %v2568, 16
  %v2789 = vpop.permute.xlu0 %2788
  %2790 = vrot.lane.b32.xlu0 %v2569, 16
  %v2791 = vpop.permute.xlu0 %2790
  %2792 = vrot.lane.b32.xlu0 %v2570, 16
  %v2793 = vpop.permute.xlu0 %2792
  %2794 = vrot.lane.b32.xlu0 %v2571, 16
  %v2795 = vpop.permute.xlu0 %2794
  %2796 = vrot.lane.b32.xlu0 %v2572, 16
  %v2797 = vpop.permute.xlu0 %2796
  %2798 = vrot.lane.b32.xlu0 %v2573, 16
  %v2799 = vpop.permute.xlu0 %2798
  %2800 = vrot.lane.b32.xlu0 %v2574, 16
  %v2801 = vpop.permute.xlu0 %2800
  %2802 = vrot.lane.b32.xlu0 %v2575, 16
  %v2803 = vpop.permute.xlu0 %2802
  %2804 = vrot.lane.b32.xlu0 %v2576, 16
  %v2805 = vpop.permute.xlu0 %2804
  %2806 = vrot.lane.b32.xlu0 %v2577, 16
  %v2807 = vpop.permute.xlu0 %2806
  %2808 = vrot.lane.b32.xlu0 %v2578, 16
  %v2809 = vpop.permute.xlu0 %2808
  %2810 = vrot.lane.b32.xlu0 %v2579, 16
  %v2811 = vpop.permute.xlu0 %2810
  %2812 = vrot.lane.b32.xlu0 %v2580, 16
  %v2813 = vpop.permute.xlu0 %2812
  %2814 = vrot.lane.b32.xlu0 %v2581, 16
  %v2815 = vpop.permute.xlu0 %2814
  %2816 = vrot.lane.b32.xlu0 %v2582, 16
  %v2817 = vpop.permute.xlu0 %2816
  %2818 = vrot.lane.b32.xlu0 %v2583, 16
  %v2819 = vpop.permute.xlu0 %2818
  %2820 = vrot.lane.b32.xlu0 %v2584, 16
  %v2821 = vpop.permute.xlu0 %2820
  %2822 = vrot.lane.b32.xlu0 %v2585, 16
  %v2823 = vpop.permute.xlu0 %2822
  %2824 = vrot.lane.b32.xlu0 %v2586, 16
  %v2825 = vpop.permute.xlu0 %2824
  %2826 = vrot.lane.b32.xlu0 %v2587, 16
  %v2827 = vpop.permute.xlu0 %2826
  %2828 = vrot.lane.b32.xlu0 %v2588, 16
  %v2829 = vpop.permute.xlu0 %2828
  %2830 = vrot.lane.b32.xlu0 %v2589, 16
  %v2831 = vpop.permute.xlu0 %2830
  %2832 = vrot.lane.b32.xlu0 %v2590, 16
  %v2833 = vpop.permute.xlu0 %2832
  %2834 = vrot.lane.b32.xlu0 %v2591, 16
  %v2835 = vpop.permute.xlu0 %2834
  %2836 = vrot.lane.b32.xlu0 %v2592, 16
  %v2837 = vpop.permute.xlu0 %2836
  %2838 = vrot.lane.b32.xlu0 %v2593, 16
  %v2839 = vpop.permute.xlu0 %2838
  %2840 = vrot.lane.b32.xlu0 %v2594, 16
  %v2841 = vpop.permute.xlu0 %2840
  %2842 = vrot.lane.b32.xlu0 %v2595, 16
  %v2843 = vpop.permute.xlu0 %2842
  %2844 = vrot.lane.b32.xlu0 %v2596, 16
  %v2845 = vpop.permute.xlu0 %2844
  %2846 = vrot.lane.b32.xlu0 %v2597, 16
  %v2847 = vpop.permute.xlu0 %2846
  %2848 = vrot.lane.b32.xlu0 %v2598, 16
  %v2849 = vpop.permute.xlu0 %2848
  %2850 = vrot.lane.b32.xlu0 %v2599, 16
  %v2851 = vpop.permute.xlu0 %2850
  %2852 = vrot.lane.b32.xlu0 %v2600, 16
  %v2853 = vpop.permute.xlu0 %2852
  %2854 = vrot.lane.b32.xlu0 %v2601, 16
  %v2855 = vpop.permute.xlu0 %2854
  %2856 = vrot.lane.b32.xlu0 %v2602, 16
  %v2857 = vpop.permute.xlu0 %2856
  %2858 = vrot.lane.b32.xlu0 %v2603, 16
  %v2859 = vpop.permute.xlu0 %2858
  %2860 = vrot.lane.b32.xlu0 %v2604, 16
  %v2861 = vpop.permute.xlu0 %2860
  %2862 = vrot.lane.b32.xlu0 %v2605, 16
  %v2863 = vpop.permute.xlu0 %2862
  %2864 = vrot.lane.b32.xlu0 %v2606, 16
  %v2865 = vpop.permute.xlu0 %2864
  %2866 = vrot.lane.b32.xlu0 %v2607, 16
  %v2867 = vpop.permute.xlu0 %2866
  %2868 = vrot.lane.b32.xlu0 %v2608, 16
  %v2869 = vpop.permute.xlu0 %2868
  %2870 = vrot.lane.b32.xlu0 %v2609, 16
  %v2871 = vpop.permute.xlu0 %2870
  %2872 = vrot.lane.b32.xlu0 %v2610, 16
  %v2873 = vpop.permute.xlu0 %2872
  %2874 = vrot.lane.b32.xlu0 %v2611, 16
  %v2875 = vpop.permute.xlu0 %2874
  %2876 = vrot.lane.b32.xlu0 %v2612, 16
  %v2877 = vpop.permute.xlu0 %2876
  %2878 = vrot.lane.b32.xlu0 %v2613, 16
  %v2879 = vpop.permute.xlu0 %2878
  %2880 = vrot.lane.b32.xlu0 %v2614, 16
  %v2881 = vpop.permute.xlu0 %2880
  %2882 = vrot.lane.b32.xlu0 %v2615, 16
  %v2883 = vpop.permute.xlu0 %2882
  %2884 = vrot.lane.b32.xlu0 %v2616, 16
  %v2885 = vpop.permute.xlu0 %2884
  %2886 = vrot.lane.b32.xlu0 %v2617, 16
  %v2887 = vpop.permute.xlu0 %2886
  %2888 = vrot.lane.b32.xlu0 %v2618, 16
  %v2889 = vpop.permute.xlu0 %2888
  %2890 = vrot.lane.b32.xlu0 %v2619, 16
  %v2891 = vpop.permute.xlu0 %2890
  %2892 = vrot.lane.b32.xlu0 %v2620, 16
  %v2893 = vpop.permute.xlu0 %2892
  %2894 = vrot.lane.b32.xlu0 %v2621, 16
  %v2895 = vpop.permute.xlu0 %2894
  %2896 = vrot.lane.b32.xlu0 %v2622, 16
  %v2897 = vpop.permute.xlu0 %2896
  %2898 = vrot.lane.b32.xlu0 %v2623, 16
  %v2899 = vpop.permute.xlu0 %2898
  %2900 = vrot.lane.b32.xlu0 %v2624, 16
  %v2901 = vpop.permute.xlu0 %2900
  %2902 = vrot.lane.b32.xlu0 %v2625, 16
  %v2903 = vpop.permute.xlu0 %2902
  %2904 = vrot.lane.b32.xlu0 %v2626, 16
  %v2905 = vpop.permute.xlu0 %2904
  %2906 = vrot.lane.b32.xlu0 %v2627, 16
  %v2907 = vpop.permute.xlu0 %2906
  %2908 = vrot.lane.b32.xlu0 %v2628, 16
  %v2909 = vpop.permute.xlu0 %2908
  %2910 = vrot.lane.b32.xlu0 %v2629, 16
  %v2911 = vpop.permute.xlu0 %2910
  %2912 = vrot.lane.b32.xlu0 %v2630, 16
  %v2913 = vpop.permute.xlu0 %2912
  %2914 = vrot.lane.b32.xlu0 %v2631, 16
  %v2915 = vpop.permute.xlu0 %2914
  %2916 = vrot.lane.b32.xlu0 %v2632, 16
  %v2917 = vpop.permute.xlu0 %2916
  %2918 = vrot.lane.b32.xlu0 %v2633, 16
  %v2919 = vpop.permute.xlu0 %2918
  %2920 = vrot.lane.b32.xlu0 %v2638, 16
  %v2921 = vpop.permute.xlu0 %2920
  %2922 = vrot.lane.b32.xlu0 %v2783, 16
  %v2923 = vpop.permute.xlu0 %2922
  %v2940 = vunpack.c.l.b16 %v2244
  %v2941 = vunpack.c.l.b16 %v2245
  %v2942 = vunpack.c.l.b16 %v2246
  %v2943 = vunpack.c.l.b16 %v2247
  %v2944 = vunpack.c.l.b16 %v2248
  %v2945 = vunpack.c.l.b16 %v2249
  %v2946 = vunpack.c.l.b16 %v2250
  %v2947 = vunpack.c.l.b16 %v2251
  %v2948 = vunpack.c.l.b16 %v2252
  %v2949 = vunpack.c.l.b16 %v2253
  %v2950 = vunpack.c.l.b16 %v2254
  %v2951 = vunpack.c.l.b16 %v2255
  %v2952 = vunpack.c.l.b16 %v2256
  %v2953 = vunpack.c.l.b16 %v2257
  %v2954 = vunpack.c.l.b16 %v2258
  %v2955 = vunpack.c.l.b16 %v2259
  %v2956 = vpack.c.b16 %v2941, %v2940
  %v2957 = vpack.c.b16 %v2943, %v2942
  %v2958 = vpack.c.b16 %v2945, %v2944
  %v2959 = vpack.c.b16 %v2947, %v2946
  %v2960 = vpack.c.b16 %v2949, %v2948
  %v2961 = vpack.c.b16 %v2951, %v2950
  %v2962 = vpack.c.b16 %v2953, %v2952
  %v2963 = vpack.c.b16 %v2955, %v2954
  %2964 = vrot.lane.b32.xlu0 %v2574, 24
  %v2965 = vpop.permute.xlu0 %2964
  %2966 = vrot.lane.b32.xlu0 %v2575, 24
  %v2967 = vpop.permute.xlu0 %2966
  %2968 = vrot.lane.b32.xlu0 %v2576, 24
  %v2969 = vpop.permute.xlu0 %2968
  %2970 = vrot.lane.b32.xlu0 %v2577, 24
  %v2971 = vpop.permute.xlu0 %2970
  %2972 = vrot.lane.b32.xlu0 %v2578, 24
  %v2973 = vpop.permute.xlu0 %2972
  %2974 = vrot.lane.b32.xlu0 %v2579, 24
  %v2975 = vpop.permute.xlu0 %2974
  %2976 = vrot.lane.b32.xlu0 %v2580, 24
  %v2977 = vpop.permute.xlu0 %2976
  %2978 = vrot.lane.b32.xlu0 %v2581, 24
  %v2979 = vpop.permute.xlu0 %2978
  %2980 = vrot.lane.b32.xlu0 %v2582, 24
  %v2981 = vpop.permute.xlu0 %2980
  %2982 = vrot.lane.b32.xlu0 %v2583, 24
  %v2983 = vpop.permute.xlu0 %2982
  %2984 = vrot.lane.b32.xlu0 %v2584, 24
  %v2985 = vpop.permute.xlu0 %2984
  %2986 = vrot.lane.b32.xlu0 %v2585, 24
  %v2987 = vpop.permute.xlu0 %2986
  %2988 = vrot.lane.b32.xlu0 %v2586, 24
  %v2989 = vpop.permute.xlu0 %2988
  %2990 = vrot.lane.b32.xlu0 %v2587, 24
  %v2991 = vpop.permute.xlu0 %2990
  %2992 = vrot.lane.b32.xlu0 %v2588, 24
  %v2993 = vpop.permute.xlu0 %2992
  %2994 = vrot.lane.b32.xlu0 %v2589, 24
  %v2995 = vpop.permute.xlu0 %2994
  %2996 = vrot.lane.b32.xlu0 %v2590, 24
  %v2997 = vpop.permute.xlu0 %2996
  %2998 = vrot.lane.b32.xlu0 %v2591, 24
  %v2999 = vpop.permute.xlu0 %2998
  %3000 = vrot.lane.b32.xlu0 %v2592, 24
  %v3001 = vpop.permute.xlu0 %3000
  %3002 = vrot.lane.b32.xlu0 %v2593, 24
  %v3003 = vpop.permute.xlu0 %3002
  %3004 = vrot.lane.b32.xlu0 %v2594, 24
  %v3005 = vpop.permute.xlu0 %3004
  %3006 = vrot.lane.b32.xlu0 %v2595, 24
  %v3007 = vpop.permute.xlu0 %3006
  %3008 = vrot.lane.b32.xlu0 %v2596, 24
  %v3009 = vpop.permute.xlu0 %3008
  %3010 = vrot.lane.b32.xlu0 %v2597, 24
  %v3011 = vpop.permute.xlu0 %3010
  %3012 = vrot.lane.b32.xlu0 %v2598, 24
  %v3013 = vpop.permute.xlu0 %3012
  %3014 = vrot.lane.b32.xlu0 %v2599, 24
  %v3015 = vpop.permute.xlu0 %3014
  %3016 = vrot.lane.b32.xlu0 %v2600, 24
  %v3017 = vpop.permute.xlu0 %3016
  %3018 = vrot.lane.b32.xlu0 %v2601, 24
  %v3019 = vpop.permute.xlu0 %3018
  %3020 = vrot.lane.b32.xlu0 %v2602, 24
  %v3021 = vpop.permute.xlu0 %3020
  %3022 = vrot.lane.b32.xlu0 %v2603, 24
  %v3023 = vpop.permute.xlu0 %3022
  %3024 = vrot.lane.b32.xlu0 %v2604, 24
  %v3025 = vpop.permute.xlu0 %3024
  %3026 = vrot.lane.b32.xlu0 %v2605, 24
  %v3027 = vpop.permute.xlu0 %3026
  %3028 = vrot.lane.b32.xlu0 %v2606, 24
  %v3029 = vpop.permute.xlu0 %3028
  %3030 = vrot.lane.b32.xlu0 %v2607, 24
  %v3031 = vpop.permute.xlu0 %3030
  %3032 = vrot.lane.b32.xlu0 %v2608, 24
  %v3033 = vpop.permute.xlu0 %3032
  %3034 = vrot.lane.b32.xlu0 %v2609, 24
  %v3035 = vpop.permute.xlu0 %3034
  %3036 = vrot.lane.b32.xlu0 %v2610, 24
  %v3037 = vpop.permute.xlu0 %3036
  %3038 = vrot.lane.b32.xlu0 %v2611, 24
  %v3039 = vpop.permute.xlu0 %3038
  %3040 = vrot.lane.b32.xlu0 %v2612, 24
  %v3041 = vpop.permute.xlu0 %3040
  %3042 = vrot.lane.b32.xlu0 %v2613, 24
  %v3043 = vpop.permute.xlu0 %3042
  %3044 = vrot.lane.b32.xlu0 %v2614, 24
  %v3045 = vpop.permute.xlu0 %3044
  %3046 = vrot.lane.b32.xlu0 %v2615, 24
  %v3047 = vpop.permute.xlu0 %3046
  %3048 = vrot.lane.b32.xlu0 %v2616, 24
  %v3049 = vpop.permute.xlu0 %3048
  %3050 = vrot.lane.b32.xlu0 %v2617, 24
  %v3051 = vpop.permute.xlu0 %3050
  %3052 = vrot.lane.b32.xlu0 %v2618, 24
  %v3053 = vpop.permute.xlu0 %3052
  %3054 = vrot.lane.b32.xlu0 %v2619, 24
  %v3055 = vpop.permute.xlu0 %3054
  %3056 = vrot.lane.b32.xlu0 %v2620, 24
  %v3057 = vpop.permute.xlu0 %3056
  %3058 = vrot.lane.b32.xlu0 %v2621, 24
  %v3059 = vpop.permute.xlu0 %3058
  %3060 = vrot.lane.b32.xlu0 %v2622, 24
  %v3061 = vpop.permute.xlu0 %3060
  %3062 = vrot.lane.b32.xlu0 %v2623, 24
  %v3063 = vpop.permute.xlu0 %3062
  %3064 = vrot.lane.b32.xlu0 %v2624, 24
  %v3065 = vpop.permute.xlu0 %3064
  %3066 = vrot.lane.b32.xlu0 %v2625, 24
  %v3067 = vpop.permute.xlu0 %3066
  %3068 = vrot.lane.b32.xlu0 %v2626, 24
  %v3069 = vpop.permute.xlu0 %3068
  %3070 = vrot.lane.b32.xlu0 %v2627, 24
  %v3071 = vpop.permute.xlu0 %3070
  %3072 = vrot.lane.b32.xlu0 %v2628, 24
  %v3073 = vpop.permute.xlu0 %3072
  %3074 = vrot.lane.b32.xlu0 %v2629, 24
  %v3075 = vpop.permute.xlu0 %3074
  %3076 = vrot.lane.b32.xlu0 %v2630, 24
  %v3077 = vpop.permute.xlu0 %3076
  %3078 = vrot.lane.b32.xlu0 %v2631, 24
  %v3079 = vpop.permute.xlu0 %3078
  %3080 = vrot.lane.b32.xlu0 %v2632, 24
  %v3081 = vpop.permute.xlu0 %3080
  %3082 = vrot.lane.b32.xlu0 %v2633, 24
  %v3083 = vpop.permute.xlu0 %3082
  %3084 = vrot.lane.b32.xlu0 %v2638, 24
  %v3085 = vpop.permute.xlu0 %3084
  %3086 = vrot.lane.b32.xlu0 %v2783, 24
  %v3087 = vpop.permute.xlu0 %3086
  %3088 = vrot.lane.b32.xlu0 %v2956, 24
  %v3089 = vpop.permute.xlu0 %3088
  %3090 = vrot.lane.b32.xlu0 %v2957, 24
  %v3091 = vpop.permute.xlu0 %3090
  %3092 = vrot.lane.b32.xlu0 %v2958, 24
  %v3093 = vpop.permute.xlu0 %3092
  %3094 = vrot.lane.b32.xlu0 %v2959, 24
  %v3095 = vpop.permute.xlu0 %3094
  %3096 = vrot.lane.b32.xlu0 %v2960, 24
  %v3097 = vpop.permute.xlu0 %3096
  %3098 = vrot.lane.b32.xlu0 %v2961, 24
  %v3099 = vpop.permute.xlu0 %3098
  %3100 = vrot.lane.b32.xlu0 %v2962, 24
  %v3101 = vpop.permute.xlu0 %3100
  %3102 = vrot.lane.b32.xlu0 %v2963, 24
  %v3103 = vpop.permute.xlu0 %3102
  %v3106 = vunpack.c.l.b16 %v2260
  %v3107 = vunpack.c.l.b16 %v2261
  %v3108 = vpack.c.b16 %v3107, %v3106
  %3109 = vrot.lane.b32.xlu0 %v2575, 32
  %v3110 = vpop.permute.xlu0 %3109
  %3111 = vrot.lane.b32.xlu0 %v2576, 32
  %v3112 = vpop.permute.xlu0 %3111
  %3113 = vrot.lane.b32.xlu0 %v2577, 32
  %v3114 = vpop.permute.xlu0 %3113
  %3115 = vrot.lane.b32.xlu0 %v2578, 32
  %v3116 = vpop.permute.xlu0 %3115
  %3117 = vrot.lane.b32.xlu0 %v2579, 32
  %v3118 = vpop.permute.xlu0 %3117
  %3119 = vrot.lane.b32.xlu0 %v2580, 32
  %v3120 = vpop.permute.xlu0 %3119
  %3121 = vrot.lane.b32.xlu0 %v2581, 32
  %v3122 = vpop.permute.xlu0 %3121
  %3123 = vrot.lane.b32.xlu0 %v2582, 32
  %v3124 = vpop.permute.xlu0 %3123
  %3125 = vrot.lane.b32.xlu0 %v2583, 32
  %v3126 = vpop.permute.xlu0 %3125
  %3127 = vrot.lane.b32.xlu0 %v2584, 32
  %v3128 = vpop.permute.xlu0 %3127
  %3129 = vrot.lane.b32.xlu0 %v2585, 32
  %v3130 = vpop.permute.xlu0 %3129
  %3131 = vrot.lane.b32.xlu0 %v2586, 32
  %v3132 = vpop.permute.xlu0 %3131
  %3133 = vrot.lane.b32.xlu0 %v2587, 32
  %v3134 = vpop.permute.xlu0 %3133
  %3135 = vrot.lane.b32.xlu0 %v2588, 32
  %v3136 = vpop.permute.xlu0 %3135
  %3137 = vrot.lane.b32.xlu0 %v2589, 32
  %v3138 = vpop.permute.xlu0 %3137
  %3139 = vrot.lane.b32.xlu0 %v2590, 32
  %v3140 = vpop.permute.xlu0 %3139
  %3141 = vrot.lane.b32.xlu0 %v2591, 32
  %v3142 = vpop.permute.xlu0 %3141
  %3143 = vrot.lane.b32.xlu0 %v2592, 32
  %v3144 = vpop.permute.xlu0 %3143
  %3145 = vrot.lane.b32.xlu0 %v2593, 32
  %v3146 = vpop.permute.xlu0 %3145
  %3147 = vrot.lane.b32.xlu0 %v2594, 32
  %v3148 = vpop.permute.xlu0 %3147
  %3149 = vrot.lane.b32.xlu0 %v2595, 32
  %v3150 = vpop.permute.xlu0 %3149
  %3151 = vrot.lane.b32.xlu0 %v2596, 32
  %v3152 = vpop.permute.xlu0 %3151
  %3153 = vrot.lane.b32.xlu0 %v2597, 32
  %v3154 = vpop.permute.xlu0 %3153
  %3155 = vrot.lane.b32.xlu0 %v2598, 32
  %v3156 = vpop.permute.xlu0 %3155
  %3157 = vrot.lane.b32.xlu0 %v2599, 32
  %v3158 = vpop.permute.xlu0 %3157
  %3159 = vrot.lane.b32.xlu0 %v2600, 32
  %v3160 = vpop.permute.xlu0 %3159
  %3161 = vrot.lane.b32.xlu0 %v2601, 32
  %v3162 = vpop.permute.xlu0 %3161
  %3163 = vrot.lane.b32.xlu0 %v2602, 32
  %v3164 = vpop.permute.xlu0 %3163
  %3165 = vrot.lane.b32.xlu0 %v2603, 32
  %v3166 = vpop.permute.xlu0 %3165
  %3167 = vrot.lane.b32.xlu0 %v2604, 32
  %v3168 = vpop.permute.xlu0 %3167
  %3169 = vrot.lane.b32.xlu0 %v2605, 32
  %v3170 = vpop.permute.xlu0 %3169
  %3171 = vrot.lane.b32.xlu0 %v2606, 32
  %v3172 = vpop.permute.xlu0 %3171
  %3173 = vrot.lane.b32.xlu0 %v2607, 32
  %v3174 = vpop.permute.xlu0 %3173
  %3175 = vrot.lane.b32.xlu0 %v2608, 32
  %v3176 = vpop.permute.xlu0 %3175
  %3177 = vrot.lane.b32.xlu0 %v2609, 32
  %v3178 = vpop.permute.xlu0 %3177
  %3179 = vrot.lane.b32.xlu0 %v2610, 32
  %v3180 = vpop.permute.xlu0 %3179
  %3181 = vrot.lane.b32.xlu0 %v2611, 32
  %v3182 = vpop.permute.xlu0 %3181
  %3183 = vrot.lane.b32.xlu0 %v2612, 32
  %v3184 = vpop.permute.xlu0 %3183
  %3185 = vrot.lane.b32.xlu0 %v2613, 32
  %v3186 = vpop.permute.xlu0 %3185
  %3187 = vrot.lane.b32.xlu0 %v2614, 32
  %v3188 = vpop.permute.xlu0 %3187
  %3189 = vrot.lane.b32.xlu0 %v2615, 32
  %v3190 = vpop.permute.xlu0 %3189
  %3191 = vrot.lane.b32.xlu0 %v2616, 32
  %v3192 = vpop.permute.xlu0 %3191
  %3193 = vrot.lane.b32.xlu0 %v2617, 32
  %v3194 = vpop.permute.xlu0 %3193
  %3195 = vrot.lane.b32.xlu0 %v2618, 32
  %v3196 = vpop.permute.xlu0 %3195
  %3197 = vrot.lane.b32.xlu0 %v2619, 32
  %v3198 = vpop.permute.xlu0 %3197
  %3199 = vrot.lane.b32.xlu0 %v2620, 32
  %v3200 = vpop.permute.xlu0 %3199
  %3201 = vrot.lane.b32.xlu0 %v2621, 32
  %v3202 = vpop.permute.xlu0 %3201
  %3203 = vrot.lane.b32.xlu0 %v2622, 32
  %v3204 = vpop.permute.xlu0 %3203
  %3205 = vrot.lane.b32.xlu0 %v2623, 32
  %v3206 = vpop.permute.xlu0 %3205
  %3207 = vrot.lane.b32.xlu0 %v2624, 32
  %v3208 = vpop.permute.xlu0 %3207
  %3209 = vrot.lane.b32.xlu0 %v2625, 32
  %v3210 = vpop.permute.xlu0 %3209
  %3211 = vrot.lane.b32.xlu0 %v2626, 32
  %v3212 = vpop.permute.xlu0 %3211
  %3213 = vrot.lane.b32.xlu0 %v2627, 32
  %v3214 = vpop.permute.xlu0 %3213
  %3215 = vrot.lane.b32.xlu0 %v2628, 32
  %v3216 = vpop.permute.xlu0 %3215
  %3217 = vrot.lane.b32.xlu0 %v2629, 32
  %v3218 = vpop.permute.xlu0 %3217
  %3219 = vrot.lane.b32.xlu0 %v2630, 32
  %v3220 = vpop.permute.xlu0 %3219
  %3221 = vrot.lane.b32.xlu0 %v2631, 32
  %v3222 = vpop.permute.xlu0 %3221
  %3223 = vrot.lane.b32.xlu0 %v2632, 32
  %v3224 = vpop.permute.xlu0 %3223
  %3225 = vrot.lane.b32.xlu0 %v2633, 32
  %v3226 = vpop.permute.xlu0 %3225
  %3227 = vrot.lane.b32.xlu0 %v2638, 32
  %v3228 = vpop.permute.xlu0 %3227
  %3229 = vrot.lane.b32.xlu0 %v2783, 32
  %v3230 = vpop.permute.xlu0 %3229
  %3231 = vrot.lane.b32.xlu0 %v2956, 32
  %v3232 = vpop.permute.xlu0 %3231
  %3233 = vrot.lane.b32.xlu0 %v2957, 32
  %v3234 = vpop.permute.xlu0 %3233
  %3235 = vrot.lane.b32.xlu0 %v2958, 32
  %v3236 = vpop.permute.xlu0 %3235
  %3237 = vrot.lane.b32.xlu0 %v2959, 32
  %v3238 = vpop.permute.xlu0 %3237
  %3239 = vrot.lane.b32.xlu0 %v2960, 32
  %v3240 = vpop.permute.xlu0 %3239
  %3241 = vrot.lane.b32.xlu0 %v2961, 32
  %v3242 = vpop.permute.xlu0 %3241
  %3243 = vrot.lane.b32.xlu0 %v2962, 32
  %v3244 = vpop.permute.xlu0 %3243
  %3245 = vrot.lane.b32.xlu0 %v2963, 32
  %v3246 = vpop.permute.xlu0 %3245
  %3247 = vrot.lane.b32.xlu0 %v3108, 32
  %v3248 = vpop.permute.xlu0 %3247
  %v3251 = vunpack.c.l.b16 %v2262
  %v3252 = vunpack.c.l.b16 %v2263
  %v3253 = vpack.c.b16 %v3252, %v3251
  %3254 = vrot.lane.b32.xlu0 %v2576, 40
  %v3255 = vpop.permute.xlu0 %3254
  %3256 = vrot.lane.b32.xlu0 %v2577, 40
  %v3257 = vpop.permute.xlu0 %3256
  %3258 = vrot.lane.b32.xlu0 %v2578, 40
  %v3259 = vpop.permute.xlu0 %3258
  %3260 = vrot.lane.b32.xlu0 %v2579, 40
  %v3261 = vpop.permute.xlu0 %3260
  %3262 = vrot.lane.b32.xlu0 %v2580, 40
  %v3263 = vpop.permute.xlu0 %3262
  %3264 = vrot.lane.b32.xlu0 %v2581, 40
  %v3265 = vpop.permute.xlu0 %3264
  %3266 = vrot.lane.b32.xlu0 %v2582, 40
  %v3267 = vpop.permute.xlu0 %3266
  %3268 = vrot.lane.b32.xlu0 %v2583, 40
  %v3269 = vpop.permute.xlu0 %3268
  %3270 = vrot.lane.b32.xlu0 %v2584, 40
  %v3271 = vpop.permute.xlu0 %3270
  %3272 = vrot.lane.b32.xlu0 %v2585, 40
  %v3273 = vpop.permute.xlu0 %3272
  %3274 = vrot.lane.b32.xlu0 %v2586, 40
  %v3275 = vpop.permute.xlu0 %3274
  %3276 = vrot.lane.b32.xlu0 %v2587, 40
  %v3277 = vpop.permute.xlu0 %3276
  %3278 = vrot.lane.b32.xlu0 %v2588, 40
  %v3279 = vpop.permute.xlu0 %3278
  %3280 = vrot.lane.b32.xlu0 %v2589, 40
  %v3281 = vpop.permute.xlu0 %3280
  %3282 = vrot.lane.b32.xlu0 %v2590, 40
  %v3283 = vpop.permute.xlu0 %3282
  %3284 = vrot.lane.b32.xlu0 %v2591, 40
  %v3285 = vpop.permute.xlu0 %3284
  %3286 = vrot.lane.b32.xlu0 %v2592, 40
  %v3287 = vpop.permute.xlu0 %3286
  %3288 = vrot.lane.b32.xlu0 %v2593, 40
  %v3289 = vpop.permute.xlu0 %3288
  %3290 = vrot.lane.b32.xlu0 %v2594, 40
  %v3291 = vpop.permute.xlu0 %3290
  %3292 = vrot.lane.b32.xlu0 %v2595, 40
  %v3293 = vpop.permute.xlu0 %3292
  %3294 = vrot.lane.b32.xlu0 %v2596, 40
  %v3295 = vpop.permute.xlu0 %3294
  %3296 = vrot.lane.b32.xlu0 %v2597, 40
  %v3297 = vpop.permute.xlu0 %3296
  %3298 = vrot.lane.b32.xlu0 %v2598, 40
  %v3299 = vpop.permute.xlu0 %3298
  %3300 = vrot.lane.b32.xlu0 %v2599, 40
  %v3301 = vpop.permute.xlu0 %3300
  %3302 = vrot.lane.b32.xlu0 %v2600, 40
  %v3303 = vpop.permute.xlu0 %3302
  %3304 = vrot.lane.b32.xlu0 %v2601, 40
  %v3305 = vpop.permute.xlu0 %3304
  %3306 = vrot.lane.b32.xlu0 %v2602, 40
  %v3307 = vpop.permute.xlu0 %3306
  %3308 = vrot.lane.b32.xlu0 %v2603, 40
  %v3309 = vpop.permute.xlu0 %3308
  %3310 = vrot.lane.b32.xlu0 %v2604, 40
  %v3311 = vpop.permute.xlu0 %3310
  %3312 = vrot.lane.b32.xlu0 %v2605, 40
  %v3313 = vpop.permute.xlu0 %3312
  %3314 = vrot.lane.b32.xlu0 %v2606, 40
  %v3315 = vpop.permute.xlu0 %3314
  %3316 = vrot.lane.b32.xlu0 %v2607, 40
  %v3317 = vpop.permute.xlu0 %3316
  %3318 = vrot.lane.b32.xlu0 %v2608, 40
  %v3319 = vpop.permute.xlu0 %3318
  %3320 = vrot.lane.b32.xlu0 %v2609, 40
  %v3321 = vpop.permute.xlu0 %3320
  %3322 = vrot.lane.b32.xlu0 %v2610, 40
  %v3323 = vpop.permute.xlu0 %3322
  %3324 = vrot.lane.b32.xlu0 %v2611, 40
  %v3325 = vpop.permute.xlu0 %3324
  %3326 = vrot.lane.b32.xlu0 %v2612, 40
  %v3327 = vpop.permute.xlu0 %3326
  %3328 = vrot.lane.b32.xlu0 %v2613, 40
  %v3329 = vpop.permute.xlu0 %3328
  %3330 = vrot.lane.b32.xlu0 %v2614, 40
  %v3331 = vpop.permute.xlu0 %3330
  %3332 = vrot.lane.b32.xlu0 %v2615, 40
  %v3333 = vpop.permute.xlu0 %3332
  %3334 = vrot.lane.b32.xlu0 %v2616, 40
  %v3335 = vpop.permute.xlu0 %3334
  %3336 = vrot.lane.b32.xlu0 %v2617, 40
  %v3337 = vpop.permute.xlu0 %3336
  %3338 = vrot.lane.b32.xlu0 %v2618, 40
  %v3339 = vpop.permute.xlu0 %3338
  %3340 = vrot.lane.b32.xlu0 %v2619, 40
  %v3341 = vpop.permute.xlu0 %3340
  %3342 = vrot.lane.b32.xlu0 %v2620, 40
  %v3343 = vpop.permute.xlu0 %3342
  %3344 = vrot.lane.b32.xlu0 %v2621, 40
  %v3345 = vpop.permute.xlu0 %3344
  %3346 = vrot.lane.b32.xlu0 %v2622, 40
  %v3347 = vpop.permute.xlu0 %3346
  %3348 = vrot.lane.b32.xlu0 %v2623, 40
  %v3349 = vpop.permute.xlu0 %3348
  %3350 = vrot.lane.b32.xlu0 %v2624, 40
  %v3351 = vpop.permute.xlu0 %3350
  %3352 = vrot.lane.b32.xlu0 %v2625, 40
  %v3353 = vpop.permute.xlu0 %3352
  %3354 = vrot.lane.b32.xlu0 %v2626, 40
  %v3355 = vpop.permute.xlu0 %3354
  %3356 = vrot.lane.b32.xlu0 %v2627, 40
  %v3357 = vpop.permute.xlu0 %3356
  %3358 = vrot.lane.b32.xlu0 %v2628, 40
  %v3359 = vpop.permute.xlu0 %3358
  %3360 = vrot.lane.b32.xlu0 %v2629, 40
  %v3361 = vpop.permute.xlu0 %3360
  %3362 = vrot.lane.b32.xlu0 %v2630, 40
  %v3363 = vpop.permute.xlu0 %3362
  %3364 = vrot.lane.b32.xlu0 %v2631, 40
  %v3365 = vpop.permute.xlu0 %3364
  %3366 = vrot.lane.b32.xlu0 %v2632, 40
  %v3367 = vpop.permute.xlu0 %3366
  %3368 = vrot.lane.b32.xlu0 %v2633, 40
  %v3369 = vpop.permute.xlu0 %3368
  %3370 = vrot.lane.b32.xlu0 %v2638, 40
  %v3371 = vpop.permute.xlu0 %3370
  %3372 = vrot.lane.b32.xlu0 %v2783, 40
  %v3373 = vpop.permute.xlu0 %3372
  %3374 = vrot.lane.b32.xlu0 %v2956, 40
  %v3375 = vpop.permute.xlu0 %3374
  %3376 = vrot.lane.b32.xlu0 %v2957, 40
  %v3377 = vpop.permute.xlu0 %3376
  %3378 = vrot.lane.b32.xlu0 %v2958, 40
  %v3379 = vpop.permute.xlu0 %3378
  %3380 = vrot.lane.b32.xlu0 %v2959, 40
  %v3381 = vpop.permute.xlu0 %3380
  %3382 = vrot.lane.b32.xlu0 %v2960, 40
  %v3383 = vpop.permute.xlu0 %3382
  %3384 = vrot.lane.b32.xlu0 %v2961, 40
  %v3385 = vpop.permute.xlu0 %3384
  %3386 = vrot.lane.b32.xlu0 %v2962, 40
  %v3387 = vpop.permute.xlu0 %3386
  %3388 = vrot.lane.b32.xlu0 %v2963, 40
  %v3389 = vpop.permute.xlu0 %3388
  %3390 = vrot.lane.b32.xlu0 %v3108, 40
  %v3391 = vpop.permute.xlu0 %3390
  %3392 = vrot.lane.b32.xlu0 %v3253, 40
  %v3393 = vpop.permute.xlu0 %3392
  %v3410 = vunpack.c.l.b16 %v2264
  %v3411 = vunpack.c.l.b16 %v2265
  %v3412 = vunpack.c.l.b16 %v2266
  %v3413 = vunpack.c.l.b16 %v2267
  %v3414 = vunpack.c.l.b16 %v2268
  %v3415 = vunpack.c.l.b16 %v2269
  %v3416 = vunpack.c.l.b16 %v2270
  %v3417 = vunpack.c.l.b16 %v2271
  %v3418 = vunpack.c.l.b16 %v2272
  %v3419 = vunpack.c.l.b16 %v2273
  %v3420 = vunpack.c.l.b16 %v2274
  %v3421 = vunpack.c.l.b16 %v2275
  %v3422 = vunpack.c.l.b16 %v2276
  %v3423 = vunpack.c.l.b16 %v2277
  %v3424 = vunpack.c.l.b16 %v2278
  %v3425 = vunpack.c.l.b16 %v2279
  %v3426 = vpack.c.b16 %v3411, %v3410
  %v3427 = vpack.c.b16 %v3413, %v3412
  %v3428 = vpack.c.b16 %v3415, %v3414
  %v3429 = vpack.c.b16 %v3417, %v3416
  %v3430 = vpack.c.b16 %v3419, %v3418
  %v3431 = vpack.c.b16 %v3421, %v3420
  %v3432 = vpack.c.b16 %v3423, %v3422
  %v3433 = vpack.c.b16 %v3425, %v3424
  %3434 = vrot.lane.b32.xlu0 %v2584, 48
  %v3435 = vpop.permute.xlu0 %3434
  %3436 = vrot.lane.b32.xlu0 %v2585, 48
  %v3437 = vpop.permute.xlu0 %3436
  %3438 = vrot.lane.b32.xlu0 %v2586, 48
  %v3439 = vpop.permute.xlu0 %3438
  %3440 = vrot.lane.b32.xlu0 %v2587, 48
  %v3441 = vpop.permute.xlu0 %3440
  %3442 = vrot.lane.b32.xlu0 %v2588, 48
  %v3443 = vpop.permute.xlu0 %3442
  %3444 = vrot.lane.b32.xlu0 %v2589, 48
  %v3445 = vpop.permute.xlu0 %3444
  %3446 = vrot.lane.b32.xlu0 %v2590, 48
  %v3447 = vpop.permute.xlu0 %3446
  %3448 = vrot.lane.b32.xlu0 %v2591, 48
  %v3449 = vpop.permute.xlu0 %3448
  %3450 = vrot.lane.b32.xlu0 %v2592, 48
  %v3451 = vpop.permute.xlu0 %3450
  %3452 = vrot.lane.b32.xlu0 %v2593, 48
  %v3453 = vpop.permute.xlu0 %3452
  %3454 = vrot.lane.b32.xlu0 %v2594, 48
  %v3455 = vpop.permute.xlu0 %3454
  %3456 = vrot.lane.b32.xlu0 %v2595, 48
  %v3457 = vpop.permute.xlu0 %3456
  %3458 = vrot.lane.b32.xlu0 %v2596, 48
  %v3459 = vpop.permute.xlu0 %3458
  %3460 = vrot.lane.b32.xlu0 %v2597, 48
  %v3461 = vpop.permute.xlu0 %3460
  %3462 = vrot.lane.b32.xlu0 %v2598, 48
  %v3463 = vpop.permute.xlu0 %3462
  %3464 = vrot.lane.b32.xlu0 %v2599, 48
  %v3465 = vpop.permute.xlu0 %3464
  %3466 = vrot.lane.b32.xlu0 %v2600, 48
  %v3467 = vpop.permute.xlu0 %3466
  %3468 = vrot.lane.b32.xlu0 %v2601, 48
  %v3469 = vpop.permute.xlu0 %3468
  %3470 = vrot.lane.b32.xlu0 %v2602, 48
  %v3471 = vpop.permute.xlu0 %3470
  %3472 = vrot.lane.b32.xlu0 %v2603, 48
  %v3473 = vpop.permute.xlu0 %3472
  %3474 = vrot.lane.b32.xlu0 %v2604, 48
  %v3475 = vpop.permute.xlu0 %3474
  %3476 = vrot.lane.b32.xlu0 %v2605, 48
  %v3477 = vpop.permute.xlu0 %3476
  %3478 = vrot.lane.b32.xlu0 %v2606, 48
  %v3479 = vpop.permute.xlu0 %3478
  %3480 = vrot.lane.b32.xlu0 %v2607, 48
  %v3481 = vpop.permute.xlu0 %3480
  %3482 = vrot.lane.b32.xlu0 %v2608, 48
  %v3483 = vpop.permute.xlu0 %3482
  %3484 = vrot.lane.b32.xlu0 %v2609, 48
  %v3485 = vpop.permute.xlu0 %3484
  %3486 = vrot.lane.b32.xlu0 %v2610, 48
  %v3487 = vpop.permute.xlu0 %3486
  %3488 = vrot.lane.b32.xlu0 %v2611, 48
  %v3489 = vpop.permute.xlu0 %3488
  %3490 = vrot.lane.b32.xlu0 %v2612, 48
  %v3491 = vpop.permute.xlu0 %3490
  %3492 = vrot.lane.b32.xlu0 %v2613, 48
  %v3493 = vpop.permute.xlu0 %3492
  %3494 = vrot.lane.b32.xlu0 %v2614, 48
  %v3495 = vpop.permute.xlu0 %3494
  %3496 = vrot.lane.b32.xlu0 %v2615, 48
  %v3497 = vpop.permute.xlu0 %3496
  %3498 = vrot.lane.b32.xlu0 %v2616, 48
  %v3499 = vpop.permute.xlu0 %3498
  %3500 = vrot.lane.b32.xlu0 %v2617, 48
  %v3501 = vpop.permute.xlu0 %3500
  %3502 = vrot.lane.b32.xlu0 %v2618, 48
  %v3503 = vpop.permute.xlu0 %3502
  %3504 = vrot.lane.b32.xlu0 %v2619, 48
  %v3505 = vpop.permute.xlu0 %3504
  %3506 = vrot.lane.b32.xlu0 %v2620, 48
  %v3507 = vpop.permute.xlu0 %3506
  %3508 = vrot.lane.b32.xlu0 %v2621, 48
  %v3509 = vpop.permute.xlu0 %3508
  %3510 = vrot.lane.b32.xlu0 %v2622, 48
  %v3511 = vpop.permute.xlu0 %3510
  %3512 = vrot.lane.b32.xlu0 %v2623, 48
  %v3513 = vpop.permute.xlu0 %3512
  %3514 = vrot.lane.b32.xlu0 %v2624, 48
  %v3515 = vpop.permute.xlu0 %3514
  %3516 = vrot.lane.b32.xlu0 %v2625, 48
  %v3517 = vpop.permute.xlu0 %3516
  %3518 = vrot.lane.b32.xlu0 %v2626, 48
  %v3519 = vpop.permute.xlu0 %3518
  %3520 = vrot.lane.b32.xlu0 %v2627, 48
  %v3521 = vpop.permute.xlu0 %3520
  %3522 = vrot.lane.b32.xlu0 %v2628, 48
  %v3523 = vpop.permute.xlu0 %3522
  %3524 = vrot.lane.b32.xlu0 %v2629, 48
  %v3525 = vpop.permute.xlu0 %3524
  %3526 = vrot.lane.b32.xlu0 %v2630, 48
  %v3527 = vpop.permute.xlu0 %3526
  %3528 = vrot.lane.b32.xlu0 %v2631, 48
  %v3529 = vpop.permute.xlu0 %3528
  %3530 = vrot.lane.b32.xlu0 %v2632, 48
  %v3531 = vpop.permute.xlu0 %3530
  %3532 = vrot.lane.b32.xlu0 %v2633, 48
  %v3533 = vpop.permute.xlu0 %3532
  %3534 = vrot.lane.b32.xlu0 %v2638, 48
  %v3535 = vpop.permute.xlu0 %3534
  %3536 = vrot.lane.b32.xlu0 %v2783, 48
  %v3537 = vpop.permute.xlu0 %3536
  %3538 = vrot.lane.b32.xlu0 %v2956, 48
  %v3539 = vpop.permute.xlu0 %3538
  %3540 = vrot.lane.b32.xlu0 %v2957, 48
  %v3541 = vpop.permute.xlu0 %3540
  %3542 = vrot.lane.b32.xlu0 %v2958, 48
  %v3543 = vpop.permute.xlu0 %3542
  %3544 = vrot.lane.b32.xlu0 %v2959, 48
  %v3545 = vpop.permute.xlu0 %3544
  %3546 = vrot.lane.b32.xlu0 %v2960, 48
  %v3547 = vpop.permute.xlu0 %3546
  %3548 = vrot.lane.b32.xlu0 %v2961, 48
  %v3549 = vpop.permute.xlu0 %3548
  %3550 = vrot.lane.b32.xlu0 %v2962, 48
  %v3551 = vpop.permute.xlu0 %3550
  %3552 = vrot.lane.b32.xlu0 %v2963, 48
  %v3553 = vpop.permute.xlu0 %3552
  %3554 = vrot.lane.b32.xlu0 %v3108, 48
  %v3555 = vpop.permute.xlu0 %3554
  %3556 = vrot.lane.b32.xlu0 %v3253, 48
  %v3557 = vpop.permute.xlu0 %3556
  %3558 = vrot.lane.b32.xlu0 %v3426, 48
  %v3559 = vpop.permute.xlu0 %3558
  %3560 = vrot.lane.b32.xlu0 %v3427, 48
  %v3561 = vpop.permute.xlu0 %3560
  %3562 = vrot.lane.b32.xlu0 %v3428, 48
  %v3563 = vpop.permute.xlu0 %3562
  %3564 = vrot.lane.b32.xlu0 %v3429, 48
  %v3565 = vpop.permute.xlu0 %3564
  %3566 = vrot.lane.b32.xlu0 %v3430, 48
  %v3567 = vpop.permute.xlu0 %3566
  %3568 = vrot.lane.b32.xlu0 %v3431, 48
  %v3569 = vpop.permute.xlu0 %3568
  %3570 = vrot.lane.b32.xlu0 %v3432, 48
  %v3571 = vpop.permute.xlu0 %3570
  %3572 = vrot.lane.b32.xlu0 %v3433, 48
  %v3573 = vpop.permute.xlu0 %3572
  %v3576 = vunpack.c.l.b16 %v2280
  %v3577 = vunpack.c.l.b16 %v2281
  %v3578 = vpack.c.b16 %v3577, %v3576
  %3579 = vrot.lane.b32.xlu0 %v2585, 56
  %v3580 = vpop.permute.xlu0 %3579
  %3581 = vrot.lane.b32.xlu0 %v2586, 56
  %v3582 = vpop.permute.xlu0 %3581
  %3583 = vrot.lane.b32.xlu0 %v2587, 56
  %v3584 = vpop.permute.xlu0 %3583
  %3585 = vrot.lane.b32.xlu0 %v2588, 56
  %v3586 = vpop.permute.xlu0 %3585
  %3587 = vrot.lane.b32.xlu0 %v2589, 56
  %v3588 = vpop.permute.xlu0 %3587
  %3589 = vrot.lane.b32.xlu0 %v2590, 56
  %v3590 = vpop.permute.xlu0 %3589
  %3591 = vrot.lane.b32.xlu0 %v2591, 56
  %v3592 = vpop.permute.xlu0 %3591
  %3593 = vrot.lane.b32.xlu0 %v2592, 56
  %v3594 = vpop.permute.xlu0 %3593
  %3595 = vrot.lane.b32.xlu0 %v2593, 56
  %v3596 = vpop.permute.xlu0 %3595
  %3597 = vrot.lane.b32.xlu0 %v2594, 56
  %v3598 = vpop.permute.xlu0 %3597
  %3599 = vrot.lane.b32.xlu0 %v2595, 56
  %v3600 = vpop.permute.xlu0 %3599
  %3601 = vrot.lane.b32.xlu0 %v2596, 56
  %v3602 = vpop.permute.xlu0 %3601
  %3603 = vrot.lane.b32.xlu0 %v2597, 56
  %v3604 = vpop.permute.xlu0 %3603
  %3605 = vrot.lane.b32.xlu0 %v2598, 56
  %v3606 = vpop.permute.xlu0 %3605
  %3607 = vrot.lane.b32.xlu0 %v2599, 56
  %v3608 = vpop.permute.xlu0 %3607
  %3609 = vrot.lane.b32.xlu0 %v2600, 56
  %v3610 = vpop.permute.xlu0 %3609
  %3611 = vrot.lane.b32.xlu0 %v2601, 56
  %v3612 = vpop.permute.xlu0 %3611
  %3613 = vrot.lane.b32.xlu0 %v2602, 56
  %v3614 = vpop.permute.xlu0 %3613
  %3615 = vrot.lane.b32.xlu0 %v2603, 56
  %v3616 = vpop.permute.xlu0 %3615
  %3617 = vrot.lane.b32.xlu0 %v2604, 56
  %v3618 = vpop.permute.xlu0 %3617
  %3619 = vrot.lane.b32.xlu0 %v2605, 56
  %v3620 = vpop.permute.xlu0 %3619
  %3621 = vrot.lane.b32.xlu0 %v2606, 56
  %v3622 = vpop.permute.xlu0 %3621
  %3623 = vrot.lane.b32.xlu0 %v2607, 56
  %v3624 = vpop.permute.xlu0 %3623
  %3625 = vrot.lane.b32.xlu0 %v2608, 56
  %v3626 = vpop.permute.xlu0 %3625
  %3627 = vrot.lane.b32.xlu0 %v2609, 56
  %v3628 = vpop.permute.xlu0 %3627
  %3629 = vrot.lane.b32.xlu0 %v2610, 56
  %v3630 = vpop.permute.xlu0 %3629
  %3631 = vrot.lane.b32.xlu0 %v2611, 56
  %v3632 = vpop.permute.xlu0 %3631
  %3633 = vrot.lane.b32.xlu0 %v2612, 56
  %v3634 = vpop.permute.xlu0 %3633
  %3635 = vrot.lane.b32.xlu0 %v2613, 56
  %v3636 = vpop.permute.xlu0 %3635
  %3637 = vrot.lane.b32.xlu0 %v2614, 56
  %v3638 = vpop.permute.xlu0 %3637
  %3639 = vrot.lane.b32.xlu0 %v2615, 56
  %v3640 = vpop.permute.xlu0 %3639
  %3641 = vrot.lane.b32.xlu0 %v2616, 56
  %v3642 = vpop.permute.xlu0 %3641
  %3643 = vrot.lane.b32.xlu0 %v2617, 56
  %v3644 = vpop.permute.xlu0 %3643
  %3645 = vrot.lane.b32.xlu0 %v2618, 56
  %v3646 = vpop.permute.xlu0 %3645
  %3647 = vrot.lane.b32.xlu0 %v2619, 56
  %v3648 = vpop.permute.xlu0 %3647
  %3649 = vrot.lane.b32.xlu0 %v2620, 56
  %v3650 = vpop.permute.xlu0 %3649
  %3651 = vrot.lane.b32.xlu0 %v2621, 56
  %v3652 = vpop.permute.xlu0 %3651
  %3653 = vrot.lane.b32.xlu0 %v2622, 56
  %v3654 = vpop.permute.xlu0 %3653
  %3655 = vrot.lane.b32.xlu0 %v2623, 56
  %v3656 = vpop.permute.xlu0 %3655
  %3657 = vrot.lane.b32.xlu0 %v2624, 56
  %v3658 = vpop.permute.xlu0 %3657
  %3659 = vrot.lane.b32.xlu0 %v2625, 56
  %v3660 = vpop.permute.xlu0 %3659
  %3661 = vrot.lane.b32.xlu0 %v2626, 56
  %v3662 = vpop.permute.xlu0 %3661
  %3663 = vrot.lane.b32.xlu0 %v2627, 56
  %v3664 = vpop.permute.xlu0 %3663
  %3665 = vrot.lane.b32.xlu0 %v2628, 56
  %v3666 = vpop.permute.xlu0 %3665
  %3667 = vrot.lane.b32.xlu0 %v2629, 56
  %v3668 = vpop.permute.xlu0 %3667
  %3669 = vrot.lane.b32.xlu0 %v2630, 56
  %v3670 = vpop.permute.xlu0 %3669
  %3671 = vrot.lane.b32.xlu0 %v2631, 56
  %v3672 = vpop.permute.xlu0 %3671
  %3673 = vrot.lane.b32.xlu0 %v2632, 56
  %v3674 = vpop.permute.xlu0 %3673
  %3675 = vrot.lane.b32.xlu0 %v2633, 56
  %v3676 = vpop.permute.xlu0 %3675
  %3677 = vrot.lane.b32.xlu0 %v2638, 56
  %v3678 = vpop.permute.xlu0 %3677
  %3679 = vrot.lane.b32.xlu0 %v2783, 56
  %v3680 = vpop.permute.xlu0 %3679
  %3681 = vrot.lane.b32.xlu0 %v2956, 56
  %v3682 = vpop.permute.xlu0 %3681
  %3683 = vrot.lane.b32.xlu0 %v2957, 56
  %v3684 = vpop.permute.xlu0 %3683
  %3685 = vrot.lane.b32.xlu0 %v2958, 56
  %v3686 = vpop.permute.xlu0 %3685
  %3687 = vrot.lane.b32.xlu0 %v2959, 56
  %v3688 = vpop.permute.xlu0 %3687
  %3689 = vrot.lane.b32.xlu0 %v2960, 56
  %v3690 = vpop.permute.xlu0 %3689
  %3691 = vrot.lane.b32.xlu0 %v2961, 56
  %v3692 = vpop.permute.xlu0 %3691
  %3693 = vrot.lane.b32.xlu0 %v2962, 56
  %v3694 = vpop.permute.xlu0 %3693
  %3695 = vrot.lane.b32.xlu0 %v2963, 56
  %v3696 = vpop.permute.xlu0 %3695
  %3697 = vrot.lane.b32.xlu0 %v3108, 56
  %v3698 = vpop.permute.xlu0 %3697
  %3699 = vrot.lane.b32.xlu0 %v3253, 56
  %v3700 = vpop.permute.xlu0 %3699
  %3701 = vrot.lane.b32.xlu0 %v3426, 56
  %v3702 = vpop.permute.xlu0 %3701
  %3703 = vrot.lane.b32.xlu0 %v3427, 56
  %v3704 = vpop.permute.xlu0 %3703
  %3705 = vrot.lane.b32.xlu0 %v3428, 56
  %v3706 = vpop.permute.xlu0 %3705
  %3707 = vrot.lane.b32.xlu0 %v3429, 56
  %v3708 = vpop.permute.xlu0 %3707
  %3709 = vrot.lane.b32.xlu0 %v3430, 56
  %v3710 = vpop.permute.xlu0 %3709
  %3711 = vrot.lane.b32.xlu0 %v3431, 56
  %v3712 = vpop.permute.xlu0 %3711
  %3713 = vrot.lane.b32.xlu0 %v3432, 56
  %v3714 = vpop.permute.xlu0 %3713
  %3715 = vrot.lane.b32.xlu0 %v3433, 56
  %v3716 = vpop.permute.xlu0 %3715
  %3717 = vrot.lane.b32.xlu0 %v3578, 56
  %v3718 = vpop.permute.xlu0 %3717
  %v3721 = vunpack.c.l.b16 %v2282
  %v3722 = vunpack.c.l.b16 %v2283
  %v3723 = vpack.c.b16 %v3722, %v3721
  %3724 = vrot.lane.b32.xlu0 %v2586, 64
  %v3725 = vpop.permute.xlu0 %3724
  %3726 = vrot.lane.b32.xlu0 %v2587, 64
  %v3727 = vpop.permute.xlu0 %3726
  %3728 = vrot.lane.b32.xlu0 %v2588, 64
  %v3729 = vpop.permute.xlu0 %3728
  %3730 = vrot.lane.b32.xlu0 %v2589, 64
  %v3731 = vpop.permute.xlu0 %3730
  %3732 = vrot.lane.b32.xlu0 %v2590, 64
  %v3733 = vpop.permute.xlu0 %3732
  %3734 = vrot.lane.b32.xlu0 %v2591, 64
  %v3735 = vpop.permute.xlu0 %3734
  %3736 = vrot.lane.b32.xlu0 %v2592, 64
  %v3737 = vpop.permute.xlu0 %3736
  %3738 = vrot.lane.b32.xlu0 %v2593, 64
  %v3739 = vpop.permute.xlu0 %3738
  %3740 = vrot.lane.b32.xlu0 %v2594, 64
  %v3741 = vpop.permute.xlu0 %3740
  %3742 = vrot.lane.b32.xlu0 %v2595, 64
  %v3743 = vpop.permute.xlu0 %3742
  %3744 = vrot.lane.b32.xlu0 %v2596, 64
  %v3745 = vpop.permute.xlu0 %3744
  %3746 = vrot.lane.b32.xlu0 %v2597, 64
  %v3747 = vpop.permute.xlu0 %3746
  %3748 = vrot.lane.b32.xlu0 %v2598, 64
  %v3749 = vpop.permute.xlu0 %3748
  %3750 = vrot.lane.b32.xlu0 %v2599, 64
  %v3751 = vpop.permute.xlu0 %3750
  %3752 = vrot.lane.b32.xlu0 %v2600, 64
  %v3753 = vpop.permute.xlu0 %3752
  %3754 = vrot.lane.b32.xlu0 %v2601, 64
  %v3755 = vpop.permute.xlu0 %3754
  %3756 = vrot.lane.b32.xlu0 %v2602, 64
  %v3757 = vpop.permute.xlu0 %3756
  %3758 = vrot.lane.b32.xlu0 %v2603, 64
  %v3759 = vpop.permute.xlu0 %3758
  %3760 = vrot.lane.b32.xlu0 %v2604, 64
  %v3761 = vpop.permute.xlu0 %3760
  %3762 = vrot.lane.b32.xlu0 %v2605, 64
  %v3763 = vpop.permute.xlu0 %3762
  %3764 = vrot.lane.b32.xlu0 %v2606, 64
  %v3765 = vpop.permute.xlu0 %3764
  %3766 = vrot.lane.b32.xlu0 %v2607, 64
  %v3767 = vpop.permute.xlu0 %3766
  %3768 = vrot.lane.b32.xlu0 %v2608, 64
  %v3769 = vpop.permute.xlu0 %3768
  %3770 = vrot.lane.b32.xlu0 %v2609, 64
  %v3771 = vpop.permute.xlu0 %3770
  %3772 = vrot.lane.b32.xlu0 %v2610, 64
  %v3773 = vpop.permute.xlu0 %3772
  %3774 = vrot.lane.b32.xlu0 %v2611, 64
  %v3775 = vpop.permute.xlu0 %3774
  %3776 = vrot.lane.b32.xlu0 %v2612, 64
  %v3777 = vpop.permute.xlu0 %3776
  %3778 = vrot.lane.b32.xlu0 %v2613, 64
  %v3779 = vpop.permute.xlu0 %3778
  %3780 = vrot.lane.b32.xlu0 %v2614, 64
  %v3781 = vpop.permute.xlu0 %3780
  %3782 = vrot.lane.b32.xlu0 %v2615, 64
  %v3783 = vpop.permute.xlu0 %3782
  %3784 = vrot.lane.b32.xlu0 %v2616, 64
  %v3785 = vpop.permute.xlu0 %3784
  %3786 = vrot.lane.b32.xlu0 %v2617, 64
  %v3787 = vpop.permute.xlu0 %3786
  %3788 = vrot.lane.b32.xlu0 %v2618, 64
  %v3789 = vpop.permute.xlu0 %3788
  %3790 = vrot.lane.b32.xlu0 %v2619, 64
  %v3791 = vpop.permute.xlu0 %3790
  %3792 = vrot.lane.b32.xlu0 %v2620, 64
  %v3793 = vpop.permute.xlu0 %3792
  %3794 = vrot.lane.b32.xlu0 %v2621, 64
  %v3795 = vpop.permute.xlu0 %3794
  %3796 = vrot.lane.b32.xlu0 %v2622, 64
  %v3797 = vpop.permute.xlu0 %3796
  %3798 = vrot.lane.b32.xlu0 %v2623, 64
  %v3799 = vpop.permute.xlu0 %3798
  %3800 = vrot.lane.b32.xlu0 %v2624, 64
  %v3801 = vpop.permute.xlu0 %3800
  %3802 = vrot.lane.b32.xlu0 %v2625, 64
  %v3803 = vpop.permute.xlu0 %3802
  %3804 = vrot.lane.b32.xlu0 %v2626, 64
  %v3805 = vpop.permute.xlu0 %3804
  %3806 = vrot.lane.b32.xlu0 %v2627, 64
  %v3807 = vpop.permute.xlu0 %3806
  %3808 = vrot.lane.b32.xlu0 %v2628, 64
  %v3809 = vpop.permute.xlu0 %3808
  %3810 = vrot.lane.b32.xlu0 %v2629, 64
  %v3811 = vpop.permute.xlu0 %3810
  %3812 = vrot.lane.b32.xlu0 %v2630, 64
  %v3813 = vpop.permute.xlu0 %3812
  %3814 = vrot.lane.b32.xlu0 %v2631, 64
  %v3815 = vpop.permute.xlu0 %3814
  %3816 = vrot.lane.b32.xlu0 %v2632, 64
  %v3817 = vpop.permute.xlu0 %3816
  %3818 = vrot.lane.b32.xlu0 %v2633, 64
  %v3819 = vpop.permute.xlu0 %3818
  %3820 = vrot.lane.b32.xlu0 %v2638, 64
  %v3821 = vpop.permute.xlu0 %3820
  %3822 = vrot.lane.b32.xlu0 %v2783, 64
  %v3823 = vpop.permute.xlu0 %3822
  %3824 = vrot.lane.b32.xlu0 %v2956, 64
  %v3825 = vpop.permute.xlu0 %3824
  %3826 = vrot.lane.b32.xlu0 %v2957, 64
  %v3827 = vpop.permute.xlu0 %3826
  %3828 = vrot.lane.b32.xlu0 %v2958, 64
  %v3829 = vpop.permute.xlu0 %3828
  %3830 = vrot.lane.b32.xlu0 %v2959, 64
  %v3831 = vpop.permute.xlu0 %3830
  %3832 = vrot.lane.b32.xlu0 %v2960, 64
  %v3833 = vpop.permute.xlu0 %3832
  %3834 = vrot.lane.b32.xlu0 %v2961, 64
  %v3835 = vpop.permute.xlu0 %3834
  %3836 = vrot.lane.b32.xlu0 %v2962, 64
  %v3837 = vpop.permute.xlu0 %3836
  %3838 = vrot.lane.b32.xlu0 %v2963, 64
  %v3839 = vpop.permute.xlu0 %3838
  %3840 = vrot.lane.b32.xlu0 %v3108, 64
  %v3841 = vpop.permute.xlu0 %3840
  %3842 = vrot.lane.b32.xlu0 %v3253, 64
  %v3843 = vpop.permute.xlu0 %3842
  %3844 = vrot.lane.b32.xlu0 %v3426, 64
  %v3845 = vpop.permute.xlu0 %3844
  %3846 = vrot.lane.b32.xlu0 %v3427, 64
  %v3847 = vpop.permute.xlu0 %3846
  %3848 = vrot.lane.b32.xlu0 %v3428, 64
  %v3849 = vpop.permute.xlu0 %3848
  %3850 = vrot.lane.b32.xlu0 %v3429, 64
  %v3851 = vpop.permute.xlu0 %3850
  %3852 = vrot.lane.b32.xlu0 %v3430, 64
  %v3853 = vpop.permute.xlu0 %3852
  %3854 = vrot.lane.b32.xlu0 %v3431, 64
  %v3855 = vpop.permute.xlu0 %3854
  %3856 = vrot.lane.b32.xlu0 %v3432, 64
  %v3857 = vpop.permute.xlu0 %3856
  %3858 = vrot.lane.b32.xlu0 %v3433, 64
  %v3859 = vpop.permute.xlu0 %3858
  %3860 = vrot.lane.b32.xlu0 %v3578, 64
  %v3861 = vpop.permute.xlu0 %3860
  %3862 = vrot.lane.b32.xlu0 %v3723, 64
  %v3863 = vpop.permute.xlu0 %3862
  %vm3864 = vcmask 64512
  %v3867 = vsel %vm3864, %v2564, %v2640
  %v3870 = vsel %vm3864, %v2565, %v2642
  %v3873 = vsel %vm3864, %v2566, %v2644
  %v3876 = vsel %vm3864, %v2567, %v2646
  %v3879 = vsel %vm3864, %v2568, %v2648
  %v3882 = vsel %vm3864, %v2569, %v2650
  %v3885 = vsel %vm3864, %v2570, %v2652
  %v3888 = vsel %vm3864, %v2571, %v2654
  %v3891 = vsel %vm3864, %v2572, %v2656
  %v3894 = vsel %vm3864, %v2573, %v2658
  %v3897 = vsel %vm3864, %v2574, %v2660
  %v3900 = vsel %vm3864, %v2575, %v2662
  %v3903 = vsel %vm3864, %v2576, %v2664
  %v3906 = vsel %vm3864, %v2577, %v2666
  %v3909 = vsel %vm3864, %v2578, %v2668
  %v3912 = vsel %vm3864, %v2579, %v2670
  %v3915 = vsel %vm3864, %v2580, %v2672
  %v3918 = vsel %vm3864, %v2581, %v2674
  %v3921 = vsel %vm3864, %v2582, %v2676
  %v3924 = vsel %vm3864, %v2583, %v2678
  %v3927 = vsel %vm3864, %v2584, %v2680
  %v3930 = vsel %vm3864, %v2585, %v2682
  %v3933 = vsel %vm3864, %v2586, %v2684
  %v3936 = vsel %vm3864, %v2587, %v2686
  %v3939 = vsel %vm3864, %v2588, %v2688
  %v3942 = vsel %vm3864, %v2589, %v2690
  %v3945 = vsel %vm3864, %v2590, %v2692
  %v3948 = vsel %vm3864, %v2591, %v2694
  %v3951 = vsel %vm3864, %v2592, %v2696
  %v3954 = vsel %vm3864, %v2593, %v2698
  %v3957 = vsel %vm3864, %v2594, %v2700
  %v3960 = vsel %vm3864, %v2595, %v2702
  %v3963 = vsel %vm3864, %v2596, %v2704
  %v3966 = vsel %vm3864, %v2597, %v2706
  %v3969 = vsel %vm3864, %v2598, %v2708
  %v3972 = vsel %vm3864, %v2599, %v2710
  %v3975 = vsel %vm3864, %v2600, %v2712
  %v3978 = vsel %vm3864, %v2601, %v2714
  %v3981 = vsel %vm3864, %v2602, %v2716
  %v3984 = vsel %vm3864, %v2603, %v2718
  %v3987 = vsel %vm3864, %v2604, %v2720
  %v3990 = vsel %vm3864, %v2605, %v2722
  %v3993 = vsel %vm3864, %v2606, %v2724
  %v3996 = vsel %vm3864, %v2607, %v2726
  %v3999 = vsel %vm3864, %v2608, %v2728
  %v4002 = vsel %vm3864, %v2609, %v2730
  %v4005 = vsel %vm3864, %v2610, %v2732
  %v4008 = vsel %vm3864, %v2611, %v2734
  %v4011 = vsel %vm3864, %v2612, %v2736
  %v4014 = vsel %vm3864, %v2613, %v2738
  %v4017 = vsel %vm3864, %v2614, %v2740
  %v4020 = vsel %vm3864, %v2615, %v2742
  %v4023 = vsel %vm3864, %v2616, %v2744
  %v4026 = vsel %vm3864, %v2617, %v2746
  %v4029 = vsel %vm3864, %v2618, %v2748
  %v4032 = vsel %vm3864, %v2619, %v2750
  %v4035 = vsel %vm3864, %v2620, %v2752
  %v4038 = vsel %vm3864, %v2621, %v2754
  %v4041 = vsel %vm3864, %v2622, %v2756
  %v4044 = vsel %vm3864, %v2623, %v2758
  %v4047 = vsel %vm3864, %v2624, %v2760
  %v4050 = vsel %vm3864, %v2625, %v2762
  %v4053 = vsel %vm3864, %v2626, %v2764
  %v4056 = vsel %vm3864, %v2627, %v2766
  %v4059 = vsel %vm3864, %v2628, %v2768
  %v4062 = vsel %vm3864, %v2629, %v2770
  %v4065 = vsel %vm3864, %v2630, %v2772
  %v4068 = vsel %vm3864, %v2631, %v2774
  %v4071 = vsel %vm3864, %v2632, %v2776
  %v4074 = vsel %vm3864, %v2633, %v2778
  %vm4075 = vcmask 130048
  %v4077 = vsel %vm4075, %v3867, %v2785
  %v4079 = vsel %vm4075, %v3870, %v2787
  %v4081 = vsel %vm4075, %v3873, %v2789
  %v4083 = vsel %vm4075, %v3876, %v2791
  %v4085 = vsel %vm4075, %v3879, %v2793
  %v4087 = vsel %vm4075, %v3882, %v2795
  %v4089 = vsel %vm4075, %v3885, %v2797
  %v4091 = vsel %vm4075, %v3888, %v2799
  %v4093 = vsel %vm4075, %v3891, %v2801
  %v4095 = vsel %vm4075, %v3894, %v2803
  %v4097 = vsel %vm4075, %v3897, %v2805
  %v4099 = vsel %vm4075, %v3900, %v2807
  %v4101 = vsel %vm4075, %v3903, %v2809
  %v4103 = vsel %vm4075, %v3906, %v2811
  %v4105 = vsel %vm4075, %v3909, %v2813
  %v4107 = vsel %vm4075, %v3912, %v2815
  %v4109 = vsel %vm4075, %v3915, %v2817
  %v4111 = vsel %vm4075, %v3918, %v2819
  %v4113 = vsel %vm4075, %v3921, %v2821
  %v4115 = vsel %vm4075, %v3924, %v2823
  %v4117 = vsel %vm4075, %v3927, %v2825
  %v4119 = vsel %vm4075, %v3930, %v2827
  %v4121 = vsel %vm4075, %v3933, %v2829
  %v4123 = vsel %vm4075, %v3936, %v2831
  %v4125 = vsel %vm4075, %v3939, %v2833
  %v4127 = vsel %vm4075, %v3942, %v2835
  %v4129 = vsel %vm4075, %v3945, %v2837
  %v4131 = vsel %vm4075, %v3948, %v2839
  %v4133 = vsel %vm4075, %v3951, %v2841
  %v4135 = vsel %vm4075, %v3954, %v2843
  %v4137 = vsel %vm4075, %v3957, %v2845
  %v4139 = vsel %vm4075, %v3960, %v2847
  %v4141 = vsel %vm4075, %v3963, %v2849
  %v4143 = vsel %vm4075, %v3966, %v2851
  %v4145 = vsel %vm4075, %v3969, %v2853
  %v4147 = vsel %vm4075, %v3972, %v2855
  %v4149 = vsel %vm4075, %v3975, %v2857
  %v4151 = vsel %vm4075, %v3978, %v2859
  %v4153 = vsel %vm4075, %v3981, %v2861
  %v4155 = vsel %vm4075, %v3984, %v2863
  %v4157 = vsel %vm4075, %v3987, %v2865
  %v4159 = vsel %vm4075, %v3990, %v2867
  %v4161 = vsel %vm4075, %v3993, %v2869
  %v4163 = vsel %vm4075, %v3996, %v2871
  %v4165 = vsel %vm4075, %v3999, %v2873
  %v4167 = vsel %vm4075, %v4002, %v2875
  %v4169 = vsel %vm4075, %v4005, %v2877
  %v4171 = vsel %vm4075, %v4008, %v2879
  %v4173 = vsel %vm4075, %v4011, %v2881
  %v4175 = vsel %vm4075, %v4014, %v2883
  %v4177 = vsel %vm4075, %v4017, %v2885
  %v4179 = vsel %vm4075, %v4020, %v2887
  %v4181 = vsel %vm4075, %v4023, %v2889
  %v4183 = vsel %vm4075, %v4026, %v2891
  %v4185 = vsel %vm4075, %v4029, %v2893
  %v4187 = vsel %vm4075, %v4032, %v2895
  %v4189 = vsel %vm4075, %v4035, %v2897
  %v4191 = vsel %vm4075, %v4038, %v2899
  %v4193 = vsel %vm4075, %v4041, %v2901
  %v4195 = vsel %vm4075, %v4044, %v2903
  %v4197 = vsel %vm4075, %v4047, %v2905
  %v4199 = vsel %vm4075, %v4050, %v2907
  %v4201 = vsel %vm4075, %v4053, %v2909
  %v4203 = vsel %vm4075, %v4056, %v2911
  %v4205 = vsel %vm4075, %v4059, %v2913
  %v4207 = vsel %vm4075, %v4062, %v2915
  %v4209 = vsel %vm4075, %v4065, %v2917
  %v4211 = vsel %vm4075, %v4068, %v2919
  %v4213 = vsel %vm4075, %v4071, %v2921
  %v4215 = vsel %vm4075, %v4074, %v2923
  %vm4216 = vcmask 195584
  %v4218 = vsel %vm4216, %v4077, %v2965
  %v4220 = vsel %vm4216, %v4079, %v2967
  %v4222 = vsel %vm4216, %v4081, %v2969
  %v4224 = vsel %vm4216, %v4083, %v2971
  %v4226 = vsel %vm4216, %v4085, %v2973
  %v4228 = vsel %vm4216, %v4087, %v2975
  %v4230 = vsel %vm4216, %v4089, %v2977
  %v4232 = vsel %vm4216, %v4091, %v2979
  %v4234 = vsel %vm4216, %v4093, %v2981
  %v4236 = vsel %vm4216, %v4095, %v2983
  %v4238 = vsel %vm4216, %v4097, %v2985
  %v4240 = vsel %vm4216, %v4099, %v2987
  %v4242 = vsel %vm4216, %v4101, %v2989
  %v4244 = vsel %vm4216, %v4103, %v2991
  %v4246 = vsel %vm4216, %v4105, %v2993
  %v4248 = vsel %vm4216, %v4107, %v2995
  %v4250 = vsel %vm4216, %v4109, %v2997
  %v4252 = vsel %vm4216, %v4111, %v2999
  %v4254 = vsel %vm4216, %v4113, %v3001
  %v4256 = vsel %vm4216, %v4115, %v3003
  %v4258 = vsel %vm4216, %v4117, %v3005
  %v4260 = vsel %vm4216, %v4119, %v3007
  %v4262 = vsel %vm4216, %v4121, %v3009
  %v4264 = vsel %vm4216, %v4123, %v3011
  %v4266 = vsel %vm4216, %v4125, %v3013
  %v4268 = vsel %vm4216, %v4127, %v3015
  %v4270 = vsel %vm4216, %v4129, %v3017
  %v4272 = vsel %vm4216, %v4131, %v3019
  %v4274 = vsel %vm4216, %v4133, %v3021
  %v4276 = vsel %vm4216, %v4135, %v3023
  %v4278 = vsel %vm4216, %v4137, %v3025
  %v4280 = vsel %vm4216, %v4139, %v3027
  %v4282 = vsel %vm4216, %v4141, %v3029
  %v4284 = vsel %vm4216, %v4143, %v3031
  %v4286 = vsel %vm4216, %v4145, %v3033
  %v4288 = vsel %vm4216, %v4147, %v3035
  %v4290 = vsel %vm4216, %v4149, %v3037
  %v4292 = vsel %vm4216, %v4151, %v3039
  %v4294 = vsel %vm4216, %v4153, %v3041
  %v4296 = vsel %vm4216, %v4155, %v3043
  %v4298 = vsel %vm4216, %v4157, %v3045
  %v4300 = vsel %vm4216, %v4159, %v3047
  %v4302 = vsel %vm4216, %v4161, %v3049
  %v4304 = vsel %vm4216, %v4163, %v3051
  %v4306 = vsel %vm4216, %v4165, %v3053
  %v4308 = vsel %vm4216, %v4167, %v3055
  %v4310 = vsel %vm4216, %v4169, %v3057
  %v4312 = vsel %vm4216, %v4171, %v3059
  %v4314 = vsel %vm4216, %v4173, %v3061
  %v4316 = vsel %vm4216, %v4175, %v3063
  %v4318 = vsel %vm4216, %v4177, %v3065
  %v4320 = vsel %vm4216, %v4179, %v3067
  %v4322 = vsel %vm4216, %v4181, %v3069
  %v4324 = vsel %vm4216, %v4183, %v3071
  %v4326 = vsel %vm4216, %v4185, %v3073
  %v4328 = vsel %vm4216, %v4187, %v3075
  %v4330 = vsel %vm4216, %v4189, %v3077
  %v4332 = vsel %vm4216, %v4191, %v3079
  %v4334 = vsel %vm4216, %v4193, %v3081
  %v4336 = vsel %vm4216, %v4195, %v3083
  %v4338 = vsel %vm4216, %v4197, %v3085
  %v4340 = vsel %vm4216, %v4199, %v3087
  %v4342 = vsel %vm4216, %v4201, %v3089
  %v4344 = vsel %vm4216, %v4203, %v3091
  %v4346 = vsel %vm4216, %v4205, %v3093
  %v4348 = vsel %vm4216, %v4207, %v3095
  %v4350 = vsel %vm4216, %v4209, %v3097
  %v4352 = vsel %vm4216, %v4211, %v3099
  %v4354 = vsel %vm4216, %v4213, %v3101
  %v4356 = vsel %vm4216, %v4215, %v3103
  %vm4357 = vcmask 261120
  %v4359 = vsel %vm4357, %v4218, %v3110
  %v4361 = vsel %vm4357, %v4220, %v3112
  %v4363 = vsel %vm4357, %v4222, %v3114
  %v4365 = vsel %vm4357, %v4224, %v3116
  %v4367 = vsel %vm4357, %v4226, %v3118
  %v4369 = vsel %vm4357, %v4228, %v3120
  %v4371 = vsel %vm4357, %v4230, %v3122
  %v4373 = vsel %vm4357, %v4232, %v3124
  %v4375 = vsel %vm4357, %v4234, %v3126
  %v4377 = vsel %vm4357, %v4236, %v3128
  %v4379 = vsel %vm4357, %v4238, %v3130
  %v4381 = vsel %vm4357, %v4240, %v3132
  %v4383 = vsel %vm4357, %v4242, %v3134
  %v4385 = vsel %vm4357, %v4244, %v3136
  %v4387 = vsel %vm4357, %v4246, %v3138
  %v4389 = vsel %vm4357, %v4248, %v3140
  %v4391 = vsel %vm4357, %v4250, %v3142
  %v4393 = vsel %vm4357, %v4252, %v3144
  %v4395 = vsel %vm4357, %v4254, %v3146
  %v4397 = vsel %vm4357, %v4256, %v3148
  %v4399 = vsel %vm4357, %v4258, %v3150
  %v4401 = vsel %vm4357, %v4260, %v3152
  %v4403 = vsel %vm4357, %v4262, %v3154
  %v4405 = vsel %vm4357, %v4264, %v3156
  %v4407 = vsel %vm4357, %v4266, %v3158
  %v4409 = vsel %vm4357, %v4268, %v3160
  %v4411 = vsel %vm4357, %v4270, %v3162
  %v4413 = vsel %vm4357, %v4272, %v3164
  %v4415 = vsel %vm4357, %v4274, %v3166
  %v4417 = vsel %vm4357, %v4276, %v3168
  %v4419 = vsel %vm4357, %v4278, %v3170
  %v4421 = vsel %vm4357, %v4280, %v3172
  %v4423 = vsel %vm4357, %v4282, %v3174
  %v4425 = vsel %vm4357, %v4284, %v3176
  %v4427 = vsel %vm4357, %v4286, %v3178
  %v4429 = vsel %vm4357, %v4288, %v3180
  %v4431 = vsel %vm4357, %v4290, %v3182
  %v4433 = vsel %vm4357, %v4292, %v3184
  %v4435 = vsel %vm4357, %v4294, %v3186
  %v4437 = vsel %vm4357, %v4296, %v3188
  %v4439 = vsel %vm4357, %v4298, %v3190
  %v4441 = vsel %vm4357, %v4300, %v3192
  %v4443 = vsel %vm4357, %v4302, %v3194
  %v4445 = vsel %vm4357, %v4304, %v3196
  %v4447 = vsel %vm4357, %v4306, %v3198
  %v4449 = vsel %vm4357, %v4308, %v3200
  %v4451 = vsel %vm4357, %v4310, %v3202
  %v4453 = vsel %vm4357, %v4312, %v3204
  %v4455 = vsel %vm4357, %v4314, %v3206
  %v4457 = vsel %vm4357, %v4316, %v3208
  %v4459 = vsel %vm4357, %v4318, %v3210
  %v4461 = vsel %vm4357, %v4320, %v3212
  %v4463 = vsel %vm4357, %v4322, %v3214
  %v4465 = vsel %vm4357, %v4324, %v3216
  %v4467 = vsel %vm4357, %v4326, %v3218
  %v4469 = vsel %vm4357, %v4328, %v3220
  %v4471 = vsel %vm4357, %v4330, %v3222
  %v4473 = vsel %vm4357, %v4332, %v3224
  %v4475 = vsel %vm4357, %v4334, %v3226
  %v4477 = vsel %vm4357, %v4336, %v3228
  %v4479 = vsel %vm4357, %v4338, %v3230
  %v4481 = vsel %vm4357, %v4340, %v3232
  %v4483 = vsel %vm4357, %v4342, %v3234
  %v4485 = vsel %vm4357, %v4344, %v3236
  %v4487 = vsel %vm4357, %v4346, %v3238
  %v4489 = vsel %vm4357, %v4348, %v3240
  %v4491 = vsel %vm4357, %v4350, %v3242
  %v4493 = vsel %vm4357, %v4352, %v3244
  %v4495 = vsel %vm4357, %v4354, %v3246
  %v4497 = vsel %vm4357, %v4356, %v3248
  %vm4498 = vcmask 326656
  %v4500 = vsel %vm4498, %v4359, %v3255
  %v4502 = vsel %vm4498, %v4361, %v3257
  %v4504 = vsel %vm4498, %v4363, %v3259
  %v4506 = vsel %vm4498, %v4365, %v3261
  %v4508 = vsel %vm4498, %v4367, %v3263
  %v4510 = vsel %vm4498, %v4369, %v3265
  %v4512 = vsel %vm4498, %v4371, %v3267
  %v4514 = vsel %vm4498, %v4373, %v3269
  %v4516 = vsel %vm4498, %v4375, %v3271
  %v4518 = vsel %vm4498, %v4377, %v3273
  %v4520 = vsel %vm4498, %v4379, %v3275
  %v4522 = vsel %vm4498, %v4381, %v3277
  %v4524 = vsel %vm4498, %v4383, %v3279
  %v4526 = vsel %vm4498, %v4385, %v3281
  %v4528 = vsel %vm4498, %v4387, %v3283
  %v4530 = vsel %vm4498, %v4389, %v3285
  %v4532 = vsel %vm4498, %v4391, %v3287
  %v4534 = vsel %vm4498, %v4393, %v3289
  %v4536 = vsel %vm4498, %v4395, %v3291
  %v4538 = vsel %vm4498, %v4397, %v3293
  %v4540 = vsel %vm4498, %v4399, %v3295
  %v4542 = vsel %vm4498, %v4401, %v3297
  %v4544 = vsel %vm4498, %v4403, %v3299
  %v4546 = vsel %vm4498, %v4405, %v3301
  %v4548 = vsel %vm4498, %v4407, %v3303
  %v4550 = vsel %vm4498, %v4409, %v3305
  %v4552 = vsel %vm4498, %v4411, %v3307
  %v4554 = vsel %vm4498, %v4413, %v3309
  %v4556 = vsel %vm4498, %v4415, %v3311
  %v4558 = vsel %vm4498, %v4417, %v3313
  %v4560 = vsel %vm4498, %v4419, %v3315
  %v4562 = vsel %vm4498, %v4421, %v3317
  %v4564 = vsel %vm4498, %v4423, %v3319
  %v4566 = vsel %vm4498, %v4425, %v3321
  %v4568 = vsel %vm4498, %v4427, %v3323
  %v4570 = vsel %vm4498, %v4429, %v3325
  %v4572 = vsel %vm4498, %v4431, %v3327
  %v4574 = vsel %vm4498, %v4433, %v3329
  %v4576 = vsel %vm4498, %v4435, %v3331
  %v4578 = vsel %vm4498, %v4437, %v3333
  %v4580 = vsel %vm4498, %v4439, %v3335
  %v4582 = vsel %vm4498, %v4441, %v3337
  %v4584 = vsel %vm4498, %v4443, %v3339
  %v4586 = vsel %vm4498, %v4445, %v3341
  %v4588 = vsel %vm4498, %v4447, %v3343
  %v4590 = vsel %vm4498, %v4449, %v3345
  %v4592 = vsel %vm4498, %v4451, %v3347
  %v4594 = vsel %vm4498, %v4453, %v3349
  %v4596 = vsel %vm4498, %v4455, %v3351
  %v4598 = vsel %vm4498, %v4457, %v3353
  %v4600 = vsel %vm4498, %v4459, %v3355
  %v4602 = vsel %vm4498, %v4461, %v3357
  %v4604 = vsel %vm4498, %v4463, %v3359
  %v4606 = vsel %vm4498, %v4465, %v3361
  %v4608 = vsel %vm4498, %v4467, %v3363
  %v4610 = vsel %vm4498, %v4469, %v3365
  %v4612 = vsel %vm4498, %v4471, %v3367
  %v4614 = vsel %vm4498, %v4473, %v3369
  %v4616 = vsel %vm4498, %v4475, %v3371
  %v4618 = vsel %vm4498, %v4477, %v3373
  %v4620 = vsel %vm4498, %v4479, %v3375
  %v4622 = vsel %vm4498, %v4481, %v3377
  %v4624 = vsel %vm4498, %v4483, %v3379
  %v4626 = vsel %vm4498, %v4485, %v3381
  %v4628 = vsel %vm4498, %v4487, %v3383
  %v4630 = vsel %vm4498, %v4489, %v3385
  %v4632 = vsel %vm4498, %v4491, %v3387
  %v4634 = vsel %vm4498, %v4493, %v3389
  %v4636 = vsel %vm4498, %v4495, %v3391
  %v4638 = vsel %vm4498, %v4497, %v3393
  %vm4639 = vcmask 392192
  %v4641 = vsel %vm4639, %v4500, %v3435
  %v4643 = vsel %vm4639, %v4502, %v3437
  %v4645 = vsel %vm4639, %v4504, %v3439
  %v4647 = vsel %vm4639, %v4506, %v3441
  %v4649 = vsel %vm4639, %v4508, %v3443
  %v4651 = vsel %vm4639, %v4510, %v3445
  %v4653 = vsel %vm4639, %v4512, %v3447
  %v4655 = vsel %vm4639, %v4514, %v3449
  %v4657 = vsel %vm4639, %v4516, %v3451
  %v4659 = vsel %vm4639, %v4518, %v3453
  %v4661 = vsel %vm4639, %v4520, %v3455
  %v4663 = vsel %vm4639, %v4522, %v3457
  %v4665 = vsel %vm4639, %v4524, %v3459
  %v4667 = vsel %vm4639, %v4526, %v3461
  %v4669 = vsel %vm4639, %v4528, %v3463
  %v4671 = vsel %vm4639, %v4530, %v3465
  %v4673 = vsel %vm4639, %v4532, %v3467
  %v4675 = vsel %vm4639, %v4534, %v3469
  %v4677 = vsel %vm4639, %v4536, %v3471
  %v4679 = vsel %vm4639, %v4538, %v3473
  %v4681 = vsel %vm4639, %v4540, %v3475
  %v4683 = vsel %vm4639, %v4542, %v3477
  %v4685 = vsel %vm4639, %v4544, %v3479
  %v4687 = vsel %vm4639, %v4546, %v3481
  %v4689 = vsel %vm4639, %v4548, %v3483
  %v4691 = vsel %vm4639, %v4550, %v3485
  %v4693 = vsel %vm4639, %v4552, %v3487
  %v4695 = vsel %vm4639, %v4554, %v3489
  %v4697 = vsel %vm4639, %v4556, %v3491
  %v4699 = vsel %vm4639, %v4558, %v3493
  %v4701 = vsel %vm4639, %v4560, %v3495
  %v4703 = vsel %vm4639, %v4562, %v3497
  %v4705 = vsel %vm4639, %v4564, %v3499
  %v4707 = vsel %vm4639, %v4566, %v3501
  %v4709 = vsel %vm4639, %v4568, %v3503
  %v4711 = vsel %vm4639, %v4570, %v3505
  %v4713 = vsel %vm4639, %v4572, %v3507
  %v4715 = vsel %vm4639, %v4574, %v3509
  %v4717 = vsel %vm4639, %v4576, %v3511
  %v4719 = vsel %vm4639, %v4578, %v3513
  %v4721 = vsel %vm4639, %v4580, %v3515
  %v4723 = vsel %vm4639, %v4582, %v3517
  %v4725 = vsel %vm4639, %v4584, %v3519
  %v4727 = vsel %vm4639, %v4586, %v3521
  %v4729 = vsel %vm4639, %v4588, %v3523
  %v4731 = vsel %vm4639, %v4590, %v3525
  %v4733 = vsel %vm4639, %v4592, %v3527
  %v4735 = vsel %vm4639, %v4594, %v3529
  %v4737 = vsel %vm4639, %v4596, %v3531
  %v4739 = vsel %vm4639, %v4598, %v3533
  %v4741 = vsel %vm4639, %v4600, %v3535
  %v4743 = vsel %vm4639, %v4602, %v3537
  %v4745 = vsel %vm4639, %v4604, %v3539
  %v4747 = vsel %vm4639, %v4606, %v3541
  %v4749 = vsel %vm4639, %v4608, %v3543
  %v4751 = vsel %vm4639, %v4610, %v3545
  %v4753 = vsel %vm4639, %v4612, %v3547
  %v4755 = vsel %vm4639, %v4614, %v3549
  %v4757 = vsel %vm4639, %v4616, %v3551
  %v4759 = vsel %vm4639, %v4618, %v3553
  %v4761 = vsel %vm4639, %v4620, %v3555
  %v4763 = vsel %vm4639, %v4622, %v3557
  %v4765 = vsel %vm4639, %v4624, %v3559
  %v4767 = vsel %vm4639, %v4626, %v3561
  %v4769 = vsel %vm4639, %v4628, %v3563
  %v4771 = vsel %vm4639, %v4630, %v3565
  %v4773 = vsel %vm4639, %v4632, %v3567
  %v4775 = vsel %vm4639, %v4634, %v3569
  %v4777 = vsel %vm4639, %v4636, %v3571
  %v4779 = vsel %vm4639, %v4638, %v3573
  %vm4780 = vcmask 457728
  %v4782 = vsel %vm4780, %v4641, %v3580
  %v4784 = vsel %vm4780, %v4643, %v3582
  %v4786 = vsel %vm4780, %v4645, %v3584
  %v4788 = vsel %vm4780, %v4647, %v3586
  %v4790 = vsel %vm4780, %v4649, %v3588
  %v4792 = vsel %vm4780, %v4651, %v3590
  %v4794 = vsel %vm4780, %v4653, %v3592
  %v4796 = vsel %vm4780, %v4655, %v3594
  %v4798 = vsel %vm4780, %v4657, %v3596
  %v4800 = vsel %vm4780, %v4659, %v3598
  %v4802 = vsel %vm4780, %v4661, %v3600
  %v4804 = vsel %vm4780, %v4663, %v3602
  %v4806 = vsel %vm4780, %v4665, %v3604
  %v4808 = vsel %vm4780, %v4667, %v3606
  %v4810 = vsel %vm4780, %v4669, %v3608
  %v4812 = vsel %vm4780, %v4671, %v3610
  %v4814 = vsel %vm4780, %v4673, %v3612
  %v4816 = vsel %vm4780, %v4675, %v3614
  %v4818 = vsel %vm4780, %v4677, %v3616
  %v4820 = vsel %vm4780, %v4679, %v3618
  %v4822 = vsel %vm4780, %v4681, %v3620
  %v4824 = vsel %vm4780, %v4683, %v3622
  %v4826 = vsel %vm4780, %v4685, %v3624
  %v4828 = vsel %vm4780, %v4687, %v3626
  %v4830 = vsel %vm4780, %v4689, %v3628
  %v4832 = vsel %vm4780, %v4691, %v3630
  %v4834 = vsel %vm4780, %v4693, %v3632
  %v4836 = vsel %vm4780, %v4695, %v3634
  %v4838 = vsel %vm4780, %v4697, %v3636
  %v4840 = vsel %vm4780, %v4699, %v3638
  %v4842 = vsel %vm4780, %v4701, %v3640
  %v4844 = vsel %vm4780, %v4703, %v3642
  %v4846 = vsel %vm4780, %v4705, %v3644
  %v4848 = vsel %vm4780, %v4707, %v3646
  %v4850 = vsel %vm4780, %v4709, %v3648
  %v4852 = vsel %vm4780, %v4711, %v3650
  %v4854 = vsel %vm4780, %v4713, %v3652
  %v4856 = vsel %vm4780, %v4715, %v3654
  %v4858 = vsel %vm4780, %v4717, %v3656
  %v4860 = vsel %vm4780, %v4719, %v3658
  %v4862 = vsel %vm4780, %v4721, %v3660
  %v4864 = vsel %vm4780, %v4723, %v3662
  %v4866 = vsel %vm4780, %v4725, %v3664
  %v4868 = vsel %vm4780, %v4727, %v3666
  %v4870 = vsel %vm4780, %v4729, %v3668
  %v4872 = vsel %vm4780, %v4731, %v3670
  %v4874 = vsel %vm4780, %v4733, %v3672
  %v4876 = vsel %vm4780, %v4735, %v3674
  %v4878 = vsel %vm4780, %v4737, %v3676
  %v4880 = vsel %vm4780, %v4739, %v3678
  %v4882 = vsel %vm4780, %v4741, %v3680
  %v4884 = vsel %vm4780, %v4743, %v3682
  %v4886 = vsel %vm4780, %v4745, %v3684
  %v4888 = vsel %vm4780, %v4747, %v3686
  %v4890 = vsel %vm4780, %v4749, %v3688
  %v4892 = vsel %vm4780, %v4751, %v3690
  %v4894 = vsel %vm4780, %v4753, %v3692
  %v4896 = vsel %vm4780, %v4755, %v3694
  %v4898 = vsel %vm4780, %v4757, %v3696
  %v4900 = vsel %vm4780, %v4759, %v3698
  %v4902 = vsel %vm4780, %v4761, %v3700
  %v4904 = vsel %vm4780, %v4763, %v3702
  %v4906 = vsel %vm4780, %v4765, %v3704
  %v4908 = vsel %vm4780, %v4767, %v3706
  %v4910 = vsel %vm4780, %v4769, %v3708
  %v4912 = vsel %vm4780, %v4771, %v3710
  %v4914 = vsel %vm4780, %v4773, %v3712
  %v4916 = vsel %vm4780, %v4775, %v3714
  %v4918 = vsel %vm4780, %v4777, %v3716
  %v4920 = vsel %vm4780, %v4779, %v3718
  %vm4921 = vcmask 523264
  %v4923 = vsel %vm4921, %v4782, %v3725
  %v4925 = vsel %vm4921, %v4784, %v3727
  %v4927 = vsel %vm4921, %v4786, %v3729
  %v4929 = vsel %vm4921, %v4788, %v3731
  %v4931 = vsel %vm4921, %v4790, %v3733
  %v4933 = vsel %vm4921, %v4792, %v3735
  %v4935 = vsel %vm4921, %v4794, %v3737
  %v4937 = vsel %vm4921, %v4796, %v3739
  %v4939 = vsel %vm4921, %v4798, %v3741
  %v4941 = vsel %vm4921, %v4800, %v3743
  %v4943 = vsel %vm4921, %v4802, %v3745
  %v4945 = vsel %vm4921, %v4804, %v3747
  %v4947 = vsel %vm4921, %v4806, %v3749
  %v4949 = vsel %vm4921, %v4808, %v3751
  %v4951 = vsel %vm4921, %v4810, %v3753
  %v4953 = vsel %vm4921, %v4812, %v3755
  %v4955 = vsel %vm4921, %v4814, %v3757
  %v4957 = vsel %vm4921, %v4816, %v3759
  %v4959 = vsel %vm4921, %v4818, %v3761
  %v4961 = vsel %vm4921, %v4820, %v3763
  %v4963 = vsel %vm4921, %v4822, %v3765
  %v4965 = vsel %vm4921, %v4824, %v3767
  %v4967 = vsel %vm4921, %v4826, %v3769
  %v4969 = vsel %vm4921, %v4828, %v3771
  %v4971 = vsel %vm4921, %v4830, %v3773
  %v4973 = vsel %vm4921, %v4832, %v3775
  %v4975 = vsel %vm4921, %v4834, %v3777
  %v4977 = vsel %vm4921, %v4836, %v3779
  %v4979 = vsel %vm4921, %v4838, %v3781
  %v4981 = vsel %vm4921, %v4840, %v3783
  %v4983 = vsel %vm4921, %v4842, %v3785
  %v4985 = vsel %vm4921, %v4844, %v3787
  %v4987 = vsel %vm4921, %v4846, %v3789
  %v4989 = vsel %vm4921, %v4848, %v3791
  %v4991 = vsel %vm4921, %v4850, %v3793
  %v4993 = vsel %vm4921, %v4852, %v3795
  %v4995 = vsel %vm4921, %v4854, %v3797
  %v4997 = vsel %vm4921, %v4856, %v3799
  %v4999 = vsel %vm4921, %v4858, %v3801
  %v5001 = vsel %vm4921, %v4860, %v3803
  %v5003 = vsel %vm4921, %v4862, %v3805
  %v5005 = vsel %vm4921, %v4864, %v3807
  %v5007 = vsel %vm4921, %v4866, %v3809
  %v5009 = vsel %vm4921, %v4868, %v3811
  %v5011 = vsel %vm4921, %v4870, %v3813
  %v5013 = vsel %vm4921, %v4872, %v3815
  %v5015 = vsel %vm4921, %v4874, %v3817
  %v5017 = vsel %vm4921, %v4876, %v3819
  %v5019 = vsel %vm4921, %v4878, %v3821
  %v5021 = vsel %vm4921, %v4880, %v3823
  %v5023 = vsel %vm4921, %v4882, %v3825
  %v5025 = vsel %vm4921, %v4884, %v3827
  %v5027 = vsel %vm4921, %v4886, %v3829
  %v5029 = vsel %vm4921, %v4888, %v3831
  %v5031 = vsel %vm4921, %v4890, %v3833
  %v5033 = vsel %vm4921, %v4892, %v3835
  %v5035 = vsel %vm4921, %v4894, %v3837
  %v5037 = vsel %vm4921, %v4896, %v3839
  %v5039 = vsel %vm4921, %v4898, %v3841
  %v5041 = vsel %vm4921, %v4900, %v3843
  %v5043 = vsel %vm4921, %v4902, %v3845
  %v5045 = vsel %vm4921, %v4904, %v3847
  %v5047 = vsel %vm4921, %v4906, %v3849
  %v5049 = vsel %vm4921, %v4908, %v3851
  %v5051 = vsel %vm4921, %v4910, %v3853
  %v5053 = vsel %vm4921, %v4912, %v3855
  %v5055 = vsel %vm4921, %v4914, %v3857
  %v5057 = vsel %vm4921, %v4916, %v3859
  %v5059 = vsel %vm4921, %v4918, %v3861
  %v5061 = vsel %vm4921, %v4920, %v3863
  %v5062 = vld [vmem:[%s2] sm:$0xf]
  %v5063 = vld [vmem:[%s2 + $0x4] sm:$0xf]
  %v5064 = vld [vmem:[%s2 + $0x8] sm:$0xf]
  %v5065 = vld [vmem:[%s2 + $0xc] sm:$0xf]
  %v5066 = vld [vmem:[%s2 + $0x10] sm:$0xf]
  %v5067 = vld [vmem:[%s2 + $0x14] sm:$0xf]
  %v5068 = vld [vmem:[%s2 + $0x18] sm:$0xf]
  %v5069 = vld [vmem:[%s2 + $0x1c] sm:$0xf]
  %v5070 = vld [vmem:[%s2 + $0x20] sm:$0xf]
  %v5071 = vld [vmem:[%s4] sm:$0x1]
  %v5073 = vlaneseq
  %v5074 = vshrl.u32 %v5073, 7
  %v5075 = vsub.s32 0, %v5074
  %v5076 = vrot.slane %v5071, %v5075
  %v5087 = vunpack.c.l.b16 %v5062
  %v5088 = vunpack.c.l.b16 %v5063
  %v5089 = vunpack.c.l.b16 %v5064
  %v5090 = vunpack.c.l.b16 %v5065
  %v5091 = vunpack.c.l.b16 %v5066
  %v5092 = vunpack.c.l.b16 %v5067
  %v5093 = vunpack.c.l.b16 %v5068
  %v5094 = vunpack.c.l.b16 %v5069
  %v5095 = vunpack.c.l.b16 %v5070
  %v5096 = vpack.c.b16 %v5088, %v5087
  %v5097 = vpack.c.b16 %v5090, %v5089
  %v5098 = vpack.c.b16 %v5092, %v5091
  %v5099 = vpack.c.b16 %v5094, %v5093
  %v5100 = vpack.c.b16 %v5095, %v5095
  %vm5105 = vcmask 588800
  %v5106 = vsel %vm5105, %v4923, 0
  %v5108 = vsel %vm5105, %v4925, 0
  %v5110 = vsel %vm5105, %v4927, 0
  %v5112 = vsel %vm5105, %v4929, 0
  %v5114 = vsel %vm5105, %v4931, 0
  %v5116 = vsel %vm5105, %v4933, 0
  %v5118 = vsel %vm5105, %v4935, 0
  %v5120 = vsel %vm5105, %v4937, 0
  %v5122 = vsel %vm5105, %v4939, 0
  %v5124 = vsel %vm5105, %v4941, 0
  %v5126 = vsel %vm5105, %v4943, 0
  %v5128 = vsel %vm5105, %v4945, 0
  %v5130 = vsel %vm5105, %v4947, 0
  %v5132 = vsel %vm5105, %v4949, 0
  %v5134 = vsel %vm5105, %v4951, 0
  %v5136 = vsel %vm5105, %v4953, 0
  %v5138 = vsel %vm5105, %v4955, 0
  %v5140 = vsel %vm5105, %v4957, 0
  %v5142 = vsel %vm5105, %v4959, 0
  %v5144 = vsel %vm5105, %v4961, 0
  %v5146 = vsel %vm5105, %v4963, 0
  %v5148 = vsel %vm5105, %v4965, 0
  %v5150 = vsel %vm5105, %v4967, 0
  %v5152 = vsel %vm5105, %v4969, 0
  %v5154 = vsel %vm5105, %v4971, 0
  %v5156 = vsel %vm5105, %v4973, 0
  %v5158 = vsel %vm5105, %v4975, 0
  %v5160 = vsel %vm5105, %v4977, 0
  %v5162 = vsel %vm5105, %v4979, 0
  %v5164 = vsel %vm5105, %v4981, 0
  %v5166 = vsel %vm5105, %v4983, 0
  %v5168 = vsel %vm5105, %v4985, 0
  %v5170 = vsel %vm5105, %v4987, 0
  %v5172 = vsel %vm5105, %v4989, 0
  %v5174 = vsel %vm5105, %v4991, 0
  %v5176 = vsel %vm5105, %v4993, 0
  %v5178 = vsel %vm5105, %v4995, 0
  %v5180 = vsel %vm5105, %v4997, 0
  %v5182 = vsel %vm5105, %v4999, 0
  %v5184 = vsel %vm5105, %v5001, 0
  %v5186 = vsel %vm5105, %v5003, 0
  %v5188 = vsel %vm5105, %v5005, 0
  %v5190 = vsel %vm5105, %v5007, 0
  %v5192 = vsel %vm5105, %v5009, 0
  %v5194 = vsel %vm5105, %v5011, 0
  %v5196 = vsel %vm5105, %v5013, 0
  %v5198 = vsel %vm5105, %v5015, 0
  %v5200 = vsel %vm5105, %v5017, 0
  %v5202 = vsel %vm5105, %v5019, 0
  %v5204 = vsel %vm5105, %v5021, 0
  %v5206 = vsel %vm5105, %v5023, 0
  %v5208 = vsel %vm5105, %v5025, 0
  %v5210 = vsel %vm5105, %v5027, 0
  %v5212 = vsel %vm5105, %v5029, 0
  %v5214 = vsel %vm5105, %v5031, 0
  %v5216 = vsel %vm5105, %v5033, 0
  %v5218 = vsel %vm5105, %v5035, 0
  %v5220 = vsel %vm5105, %v5037, 0
  %v5222 = vsel %vm5105, %v5039, 0
  %v5224 = vsel %vm5105, %v5041, 0
  %v5226 = vsel %vm5105, %v5043, 0
  %v5228 = vsel %vm5105, %v5045, 0
  %v5230 = vsel %vm5105, %v5047, 0
  %v5232 = vsel %vm5105, %v5049, 0
  %v5234 = vsel %vm5105, %v5051, 0
  %v5236 = vsel %vm5105, %v5053, 0
  %v5238 = vsel %vm5105, %v5055, 0
  %v5240 = vsel %vm5105, %v5057, 0
  %v5242 = vsel %vm5105, %v5059, 0
  %v5244 = vsel %vm5105, %v5061, 0
  %vm5246 = vcmask 1043456
  %v5248 = vsel %vm5246, %v5100, 0
  %5250 = vmatprep.subr.bf16.mxu0 0
  %5251 = vmatpush1.bf16.msra.mxu0 0
  %5252 = vmatprep.subr.bf16.mxu0 0
  %5253 = vmatpush1.bf16.msra.mxu0 0
  %5254 = vmatprep.subr.bf16.mxu0 0
  %5255 = vmatpush1.bf16.msra.mxu0 0
  %5256 = vmatprep.subr.bf16.mxu0 0
  %5257 = vmatpush1.bf16.msra.mxu0 %v5248
  %5258 = vmatprep.subr.bf16.mxu0 0
  %5259 = vmatpush1.bf16.msra.mxu0 %v5099
  %5260 = vmatprep.subr.bf16.mxu0 0
  %5261 = vmatpush1.bf16.msra.mxu0 %v5098
  %5262 = vmatprep.subr.bf16.mxu0 0
  %5263 = vmatpush1.bf16.msra.mxu0 %v5097
  %5264 = vmatprep.subr.bf16.mxu0 0
  %5265 = vmatpush1.bf16.msra.mxu0 %v5096
  %5266 = vmatprep.subr.bf16.mxu0 0
  %5267 = vmatpush2.bf16.msra.mxu0 0
  %5268 = vmatprep.subr.bf16.mxu0 0
  %5269 = vmatpush2.bf16.msra.mxu0 0
  %5270 = vmatprep.subr.bf16.mxu0 0
  %5271 = vmatpush2.bf16.msra.mxu0 0
  %5272 = vmatprep.subr.bf16.mxu0 0
  %5273 = vmatpush2.bf16.msra.mxu0 0
  %5274 = vmatprep.subr.bf16.mxu0 0
  %5275 = vmatpush2.bf16.msra.mxu0 0
  %5276 = vmatprep.subr.bf16.mxu0 0
  %5277 = vmatpush2.bf16.msra.mxu0 0
  %5278 = vmatprep.subr.bf16.mxu0 0
  %5279 = vmatpush2.bf16.msra.mxu0 0
  %5280 = vmatprep.subr.bf16.mxu0 0
  %5281 = vmatpush2.bf16.msra.mxu0 0
  %5282 = vmatprep.mubr.bf16.mxu0 0
  %5283 = vmatmul.mubr.bf16.gmra.mxu0 %v5106
  %v5284 = vpop.f32.mrf.mxu0
  %v5285 = vadd.f32 %v5076, %v5284
  %v5286 = vpop.f32.mrf.mxu0
  %v5287 = vpop.f32.mrf.mxu0
  %v5288 = vadd.f32 %v5076, %v5287
  %v5289 = vpop.f32.mrf.mxu0
  %5290 = vmatprep.mubr.bf16.mxu0 0
  %5291 = vmatmul.mubr.bf16.gmra.mxu0 %v5108
  %v5292 = vpop.f32.mrf.mxu0
  %v5293 = vpop.f32.mrf.mxu0
  %v5294 = vpop.f32.mrf.mxu0
  %v5295 = vpop.f32.mrf.mxu0
  %5296 = vmatprep.mubr.bf16.mxu0 0
  %5297 = vmatmul.mubr.bf16.gmra.mxu0 %v5110
  %v5298 = vpop.f32.mrf.mxu0
  %v5299 = vadd.f32 %v5076, %v5298
  %v5300 = vpop.f32.mrf.mxu0
  %v5301 = vpop.f32.mrf.mxu0
  %v5302 = vadd.f32 %v5076, %v5301
  %v5303 = vpop.f32.mrf.mxu0
  %5304 = vmatprep.mubr.bf16.mxu0 0
  %5305 = vmatmul.mubr.bf16.gmra.mxu0 %v5112
  %v5306 = vpop.f32.mrf.mxu0
  %v5307 = vpop.f32.mrf.mxu0
  %v5308 = vpop.f32.mrf.mxu0
  %v5309 = vpop.f32.mrf.mxu0
  %5310 = vmatprep.mubr.bf16.mxu0 0
  %5311 = vmatmul.mubr.bf16.gmra.mxu0 %v5114
  %v5312 = vpop.f32.mrf.mxu0
  %v5313 = vadd.f32 %v5076, %v5312
  %v5314 = vpop.f32.mrf.mxu0
  %v5315 = vpop.f32.mrf.mxu0
  %v5316 = vadd.f32 %v5076, %v5315
  %v5317 = vpop.f32.mrf.mxu0
  %5318 = vmatprep.mubr.bf16.mxu0 0
  %5319 = vmatmul.mubr.bf16.gmra.mxu0 %v5116
  %v5320 = vpop.f32.mrf.mxu0
  %v5321 = vpop.f32.mrf.mxu0
  %v5322 = vpop.f32.mrf.mxu0
  %v5323 = vpop.f32.mrf.mxu0
  %5324 = vmatprep.mubr.bf16.mxu0 0
  %5325 = vmatmul.mubr.bf16.gmra.mxu0 %v5118
  %v5326 = vpop.f32.mrf.mxu0
  %v5327 = vadd.f32 %v5076, %v5326
  %v5328 = vpop.f32.mrf.mxu0
  %v5329 = vpop.f32.mrf.mxu0
  %v5330 = vadd.f32 %v5076, %v5329
  %v5331 = vpop.f32.mrf.mxu0
  %5332 = vmatprep.mubr.bf16.mxu0 0
  %5333 = vmatmul.mubr.bf16.gmra.mxu0 %v5120
  %v5334 = vpop.f32.mrf.mxu0
  %v5335 = vpop.f32.mrf.mxu0
  %v5336 = vpop.f32.mrf.mxu0
  %v5337 = vpop.f32.mrf.mxu0
  %5338 = vmatprep.mubr.bf16.mxu0 0
  %5339 = vmatmul.mubr.bf16.gmra.mxu0 %v5122
  %v5340 = vpop.f32.mrf.mxu0
  %v5341 = vpop.f32.mrf.mxu0
  %v5342 = vpop.f32.mrf.mxu0
  %v5343 = vpop.f32.mrf.mxu0
  %5344 = vmatprep.mubr.bf16.mxu0 0
  %5345 = vmatmul.mubr.bf16.gmra.mxu0 %v5124
  %v5346 = vpop.f32.mrf.mxu0
  %v5347 = vpop.f32.mrf.mxu0
  %v5348 = vpop.f32.mrf.mxu0
  %v5349 = vpop.f32.mrf.mxu0
  %5350 = vmatprep.mubr.bf16.mxu0 0
  %5351 = vmatmul.mubr.bf16.gmra.mxu0 %v5126
  %v5352 = vpop.f32.mrf.mxu0
  %v5353 = vpop.f32.mrf.mxu0
  %v5354 = vpop.f32.mrf.mxu0
  %v5355 = vpop.f32.mrf.mxu0
  %5356 = vmatprep.mubr.bf16.mxu0 0
  %5357 = vmatmul.mubr.bf16.gmra.mxu0 %v5128
  %v5358 = vpop.f32.mrf.mxu0
  %v5359 = vpop.f32.mrf.mxu0
  %v5360 = vpop.f32.mrf.mxu0
  %v5361 = vpop.f32.mrf.mxu0
  %5362 = vmatprep.mubr.bf16.mxu0 0
  %5363 = vmatmul.mubr.bf16.gmra.mxu0 %v5130
  %v5364 = vpop.f32.mrf.mxu0
  %v5365 = vpop.f32.mrf.mxu0
  %v5366 = vpop.f32.mrf.mxu0
  %v5367 = vpop.f32.mrf.mxu0
  %5368 = vmatprep.mubr.bf16.mxu0 0
  %5369 = vmatmul.mubr.bf16.gmra.mxu0 %v5132
  %v5370 = vpop.f32.mrf.mxu0
  %v5371 = vpop.f32.mrf.mxu0
  %v5372 = vpop.f32.mrf.mxu0
  %v5373 = vpop.f32.mrf.mxu0
  %5374 = vmatprep.mubr.bf16.mxu0 0
  %5375 = vmatmul.mubr.bf16.gmra.mxu0 %v5134
  %v5376 = vpop.f32.mrf.mxu0
  %v5377 = vpop.f32.mrf.mxu0
  %v5378 = vpop.f32.mrf.mxu0
  %v5379 = vpop.f32.mrf.mxu0
  %5380 = vmatprep.mubr.bf16.mxu0 0
  %5381 = vmatmul.mubr.bf16.gmra.mxu0 %v5136
  %v5382 = vpop.f32.mrf.mxu0
  %v5383 = vpop.f32.mrf.mxu0
  %v5384 = vpop.f32.mrf.mxu0
  %v5385 = vpop.f32.mrf.mxu0
  %5386 = vmatprep.mubr.bf16.mxu0 0
  %5387 = vmatmul.mubr.bf16.gmra.mxu0 %v5138
  %v5388 = vpop.f32.mrf.mxu0
  %v5389 = vpop.f32.mrf.mxu0
  %v5390 = vpop.f32.mrf.mxu0
  %v5391 = vpop.f32.mrf.mxu0
  %5392 = vmatprep.mubr.bf16.mxu0 0
  %5393 = vmatmul.mubr.bf16.gmra.mxu0 %v5140
  %v5394 = vpop.f32.mrf.mxu0
  %v5395 = vpop.f32.mrf.mxu0
  %v5396 = vpop.f32.mrf.mxu0
  %v5397 = vpop.f32.mrf.mxu0
  %5398 = vmatprep.mubr.bf16.mxu0 0
  %5399 = vmatmul.mubr.bf16.gmra.mxu0 %v5142
  %v5400 = vpop.f32.mrf.mxu0
  %v5401 = vpop.f32.mrf.mxu0
  %v5402 = vpop.f32.mrf.mxu0
  %v5403 = vpop.f32.mrf.mxu0
  %5404 = vmatprep.mubr.bf16.mxu0 0
  %5405 = vmatmul.mubr.bf16.gmra.mxu0 %v5144
  %v5406 = vpop.f32.mrf.mxu0
  %v5407 = vpop.f32.mrf.mxu0
  %v5408 = vpop.f32.mrf.mxu0
  %v5409 = vpop.f32.mrf.mxu0
  %5410 = vmatprep.mubr.bf16.mxu0 0
  %5411 = vmatmul.mubr.bf16.gmra.mxu0 %v5146
  %v5412 = vpop.f32.mrf.mxu0
  %v5413 = vadd.f32 %v5076, %v5412
  %v5414 = vpop.f32.mrf.mxu0
  %v5415 = vpop.f32.mrf.mxu0
  %v5416 = vadd.f32 %v5076, %v5415
  %v5417 = vpop.f32.mrf.mxu0
  %5418 = vmatprep.mubr.bf16.mxu0 0
  %5419 = vmatmul.mubr.bf16.gmra.mxu0 %v5148
  %v5420 = vpop.f32.mrf.mxu0
  %v5421 = vpop.f32.mrf.mxu0
  %v5422 = vpop.f32.mrf.mxu0
  %v5423 = vpop.f32.mrf.mxu0
  %5424 = vmatprep.mubr.bf16.mxu0 0
  %5425 = vmatmul.mubr.bf16.gmra.mxu0 %v5150
  %v5426 = vpop.f32.mrf.mxu0
  %v5427 = vadd.f32 %v5076, %v5426
  %v5428 = vpop.f32.mrf.mxu0
  %v5429 = vpop.f32.mrf.mxu0
  %v5430 = vadd.f32 %v5076, %v5429
  %v5431 = vpop.f32.mrf.mxu0
  %5432 = vmatprep.mubr.bf16.mxu0 0
  %5433 = vmatmul.mubr.bf16.gmra.mxu0 %v5152
  %v5434 = vpop.f32.mrf.mxu0
  %v5435 = vpop.f32.mrf.mxu0
  %v5436 = vpop.f32.mrf.mxu0
  %v5437 = vpop.f32.mrf.mxu0
  %5438 = vmatprep.mubr.bf16.mxu0 0
  %5439 = vmatmul.mubr.bf16.gmra.mxu0 %v5154
  %v5440 = vpop.f32.mrf.mxu0
  %v5441 = vadd.f32 %v5076, %v5440
  %v5442 = vpop.f32.mrf.mxu0
  %v5443 = vpop.f32.mrf.mxu0
  %v5444 = vadd.f32 %v5076, %v5443
  %v5445 = vpop.f32.mrf.mxu0
  %5446 = vmatprep.mubr.bf16.mxu0 0
  %5447 = vmatmul.mubr.bf16.gmra.mxu0 %v5156
  %v5448 = vpop.f32.mrf.mxu0
  %v5449 = vpop.f32.mrf.mxu0
  %v5450 = vpop.f32.mrf.mxu0
  %v5451 = vpop.f32.mrf.mxu0
  %5452 = vmatprep.mubr.bf16.mxu0 0
  %5453 = vmatmul.mubr.bf16.gmra.mxu0 %v5158
  %v5454 = vpop.f32.mrf.mxu0
  %v5455 = vadd.f32 %v5076, %v5454
  %v5456 = vpop.f32.mrf.mxu0
  %v5457 = vpop.f32.mrf.mxu0
  %v5458 = vadd.f32 %v5076, %v5457
  %v5459 = vpop.f32.mrf.mxu0
  %5460 = vmatprep.mubr.bf16.mxu0 0
  %5461 = vmatmul.mubr.bf16.gmra.mxu0 %v5160
  %v5462 = vpop.f32.mrf.mxu0
  %v5463 = vpop.f32.mrf.mxu0
  %v5464 = vpop.f32.mrf.mxu0
  %v5465 = vpop.f32.mrf.mxu0
  %5466 = vmatprep.mubr.bf16.mxu0 0
  %5467 = vmatmul.mubr.bf16.gmra.mxu0 %v5162
  %v5468 = vpop.f32.mrf.mxu0
  %v5469 = vpop.f32.mrf.mxu0
  %v5470 = vpop.f32.mrf.mxu0
  %v5471 = vpop.f32.mrf.mxu0
  %5472 = vmatprep.mubr.bf16.mxu0 0
  %5473 = vmatmul.mubr.bf16.gmra.mxu0 %v5164
  %v5474 = vpop.f32.mrf.mxu0
  %v5475 = vpop.f32.mrf.mxu0
  %v5476 = vpop.f32.mrf.mxu0
  %v5477 = vpop.f32.mrf.mxu0
  %5478 = vmatprep.mubr.bf16.mxu0 0
  %5479 = vmatmul.mubr.bf16.gmra.mxu0 %v5166
  %v5480 = vpop.f32.mrf.mxu0
  %v5481 = vpop.f32.mrf.mxu0
  %v5482 = vpop.f32.mrf.mxu0
  %v5483 = vpop.f32.mrf.mxu0
  %5484 = vmatprep.mubr.bf16.mxu0 0
  %5485 = vmatmul.mubr.bf16.gmra.mxu0 %v5168
  %v5486 = vpop.f32.mrf.mxu0
  %v5487 = vpop.f32.mrf.mxu0
  %v5488 = vpop.f32.mrf.mxu0
  %v5489 = vpop.f32.mrf.mxu0
  %5490 = vmatprep.mubr.bf16.mxu0 0
  %5491 = vmatmul.mubr.bf16.gmra.mxu0 %v5170
  %v5492 = vpop.f32.mrf.mxu0
  %v5493 = vpop.f32.mrf.mxu0
  %v5494 = vpop.f32.mrf.mxu0
  %v5495 = vpop.f32.mrf.mxu0
  %5496 = vmatprep.mubr.bf16.mxu0 0
  %5497 = vmatmul.mubr.bf16.gmra.mxu0 %v5172
  %v5498 = vpop.f32.mrf.mxu0
  %v5499 = vpop.f32.mrf.mxu0
  %v5500 = vpop.f32.mrf.mxu0
  %v5501 = vpop.f32.mrf.mxu0
  %5502 = vmatprep.mubr.bf16.mxu0 0
  %5503 = vmatmul.mubr.bf16.gmra.mxu0 %v5174
  %v5504 = vpop.f32.mrf.mxu0
  %v5505 = vpop.f32.mrf.mxu0
  %v5506 = vpop.f32.mrf.mxu0
  %v5507 = vpop.f32.mrf.mxu0
  %5508 = vmatprep.mubr.bf16.mxu0 0
  %5509 = vmatmul.mubr.bf16.gmra.mxu0 %v5176
  %v5510 = vpop.f32.mrf.mxu0
  %v5511 = vpop.f32.mrf.mxu0
  %v5512 = vpop.f32.mrf.mxu0
  %v5513 = vpop.f32.mrf.mxu0
  %5514 = vmatprep.mubr.bf16.mxu0 0
  %5515 = vmatmul.mubr.bf16.gmra.mxu0 %v5178
  %v5516 = vpop.f32.mrf.mxu0
  %v5517 = vpop.f32.mrf.mxu0
  %v5518 = vpop.f32.mrf.mxu0
  %v5519 = vpop.f32.mrf.mxu0
  %5520 = vmatprep.mubr.bf16.mxu0 0
  %5521 = vmatmul.mubr.bf16.gmra.mxu0 %v5180
  %v5522 = vpop.f32.mrf.mxu0
  %v5523 = vpop.f32.mrf.mxu0
  %v5524 = vpop.f32.mrf.mxu0
  %v5525 = vpop.f32.mrf.mxu0
  %5526 = vmatprep.mubr.bf16.mxu0 0
  %5527 = vmatmul.mubr.bf16.gmra.mxu0 %v5182
  %v5528 = vpop.f32.mrf.mxu0
  %v5529 = vpop.f32.mrf.mxu0
  %v5530 = vpop.f32.mrf.mxu0
  %v5531 = vpop.f32.mrf.mxu0
  %5532 = vmatprep.mubr.bf16.mxu0 0
  %5533 = vmatmul.mubr.bf16.gmra.mxu0 %v5184
  %v5534 = vpop.f32.mrf.mxu0
  %v5535 = vpop.f32.mrf.mxu0
  %v5536 = vpop.f32.mrf.mxu0
  %v5537 = vpop.f32.mrf.mxu0
  %5538 = vmatprep.mubr.bf16.mxu0 0
  %5539 = vmatmul.mubr.bf16.gmra.mxu0 %v5186
  %v5540 = vpop.f32.mrf.mxu0
  %v5541 = vadd.f32 %v5076, %v5540
  %v5542 = vpop.f32.mrf.mxu0
  %v5543 = vpop.f32.mrf.mxu0
  %v5544 = vadd.f32 %v5076, %v5543
  %v5545 = vpop.f32.mrf.mxu0
  %5546 = vmatprep.mubr.bf16.mxu0 0
  %5547 = vmatmul.mubr.bf16.gmra.mxu0 %v5188
  %v5548 = vpop.f32.mrf.mxu0
  %v5549 = vpop.f32.mrf.mxu0
  %v5550 = vpop.f32.mrf.mxu0
  %v5551 = vpop.f32.mrf.mxu0
  %5552 = vmatprep.mubr.bf16.mxu0 0
  %5553 = vmatmul.mubr.bf16.gmra.mxu0 %v5190
  %v5554 = vpop.f32.mrf.mxu0
  %v5555 = vadd.f32 %v5076, %v5554
  %v5556 = vpop.f32.mrf.mxu0
  %v5557 = vpop.f32.mrf.mxu0
  %v5558 = vadd.f32 %v5076, %v5557
  %v5559 = vpop.f32.mrf.mxu0
  %5560 = vmatprep.mubr.bf16.mxu0 0
  %5561 = vmatmul.mubr.bf16.gmra.mxu0 %v5192
  %v5562 = vpop.f32.mrf.mxu0
  %v5563 = vpop.f32.mrf.mxu0
  %v5564 = vpop.f32.mrf.mxu0
  %v5565 = vpop.f32.mrf.mxu0
  %5566 = vmatprep.mubr.bf16.mxu0 0
  %5567 = vmatmul.mubr.bf16.gmra.mxu0 %v5194
  %v5568 = vpop.f32.mrf.mxu0
  %v5569 = vadd.f32 %v5076, %v5568
  %v5570 = vpop.f32.mrf.mxu0
  %v5571 = vpop.f32.mrf.mxu0
  %v5572 = vadd.f32 %v5076, %v5571
  %v5573 = vpop.f32.mrf.mxu0
  %5574 = vmatprep.mubr.bf16.mxu0 0
  %5575 = vmatmul.mubr.bf16.gmra.mxu0 %v5196
  %v5576 = vpop.f32.mrf.mxu0
  %v5577 = vpop.f32.mrf.mxu0
  %v5578 = vpop.f32.mrf.mxu0
  %v5579 = vpop.f32.mrf.mxu0
  %5580 = vmatprep.mubr.bf16.mxu0 0
  %5581 = vmatmul.mubr.bf16.gmra.mxu0 %v5198
  %v5582 = vpop.f32.mrf.mxu0
  %v5583 = vadd.f32 %v5076, %v5582
  %v5584 = vpop.f32.mrf.mxu0
  %v5585 = vpop.f32.mrf.mxu0
  %v5586 = vadd.f32 %v5076, %v5585
  %v5587 = vpop.f32.mrf.mxu0
  %5588 = vmatprep.mubr.bf16.mxu0 0
  %5589 = vmatmul.mubr.bf16.gmra.mxu0 %v5200
  %v5590 = vpop.f32.mrf.mxu0
  %v5591 = vpop.f32.mrf.mxu0
  %v5592 = vpop.f32.mrf.mxu0
  %v5593 = vpop.f32.mrf.mxu0
  %5594 = vmatprep.mubr.bf16.mxu0 0
  %5595 = vmatmul.mubr.bf16.gmra.mxu0 %v5202
  %v5596 = vpop.f32.mrf.mxu0
  %v5597 = vpop.f32.mrf.mxu0
  %v5598 = vpop.f32.mrf.mxu0
  %v5599 = vpop.f32.mrf.mxu0
  %5600 = vmatprep.mubr.bf16.mxu0 0
  %5601 = vmatmul.mubr.bf16.gmra.mxu0 %v5204
  %v5602 = vpop.f32.mrf.mxu0
  %v5603 = vpop.f32.mrf.mxu0
  %v5604 = vpop.f32.mrf.mxu0
  %v5605 = vpop.f32.mrf.mxu0
  %5606 = vmatprep.mubr.bf16.mxu0 0
  %5607 = vmatmul.mubr.bf16.gmra.mxu0 %v5206
  %v5608 = vpop.f32.mrf.mxu0
  %v5609 = vpop.f32.mrf.mxu0
  %v5610 = vpop.f32.mrf.mxu0
  %v5611 = vpop.f32.mrf.mxu0
  %5612 = vmatprep.mubr.bf16.mxu0 0
  %5613 = vmatmul.mubr.bf16.gmra.mxu0 %v5208
  %v5614 = vpop.f32.mrf.mxu0
  %v5615 = vpop.f32.mrf.mxu0
  %v5616 = vpop.f32.mrf.mxu0
  %v5617 = vpop.f32.mrf.mxu0
  %5618 = vmatprep.mubr.bf16.mxu0 0
  %5619 = vmatmul.mubr.bf16.gmra.mxu0 %v5210
  %v5620 = vpop.f32.mrf.mxu0
  %v5621 = vpop.f32.mrf.mxu0
  %v5622 = vpop.f32.mrf.mxu0
  %v5623 = vpop.f32.mrf.mxu0
  %5624 = vmatprep.mubr.bf16.mxu0 0
  %5625 = vmatmul.mubr.bf16.gmra.mxu0 %v5212
  %v5626 = vpop.f32.mrf.mxu0
  %v5627 = vpop.f32.mrf.mxu0
  %v5628 = vpop.f32.mrf.mxu0
  %v5629 = vpop.f32.mrf.mxu0
  %5630 = vmatprep.mubr.bf16.mxu0 0
  %5631 = vmatmul.mubr.bf16.gmra.mxu0 %v5214
  %v5632 = vpop.f32.mrf.mxu0
  %v5633 = vpop.f32.mrf.mxu0
  %v5634 = vpop.f32.mrf.mxu0
  %v5635 = vpop.f32.mrf.mxu0
  %5636 = vmatprep.mubr.bf16.mxu0 0
  %5637 = vmatmul.mubr.bf16.gmra.mxu0 %v5216
  %v5638 = vpop.f32.mrf.mxu0
  %v5639 = vpop.f32.mrf.mxu0
  %v5640 = vpop.f32.mrf.mxu0
  %v5641 = vpop.f32.mrf.mxu0
  %5642 = vmatprep.mubr.bf16.mxu0 0
  %5643 = vmatmul.mubr.bf16.gmra.mxu0 %v5218
  %v5644 = vpop.f32.mrf.mxu0
  %v5645 = vpop.f32.mrf.mxu0
  %v5646 = vpop.f32.mrf.mxu0
  %v5647 = vpop.f32.mrf.mxu0
  %5648 = vmatprep.mubr.bf16.mxu0 0
  %5649 = vmatmul.mubr.bf16.gmra.mxu0 %v5220
  %v5650 = vpop.f32.mrf.mxu0
  %v5651 = vpop.f32.mrf.mxu0
  %v5652 = vpop.f32.mrf.mxu0
  %v5653 = vpop.f32.mrf.mxu0
  %5654 = vmatprep.mubr.bf16.mxu0 0
  %5655 = vmatmul.mubr.bf16.gmra.mxu0 %v5222
  %v5656 = vpop.f32.mrf.mxu0
  %v5657 = vpop.f32.mrf.mxu0
  %v5658 = vpop.f32.mrf.mxu0
  %v5659 = vpop.f32.mrf.mxu0
  %5660 = vmatprep.mubr.bf16.mxu0 0
  %5661 = vmatmul.mubr.bf16.gmra.mxu0 %v5224
  %v5662 = vpop.f32.mrf.mxu0
  %v5663 = vpop.f32.mrf.mxu0
  %v5664 = vpop.f32.mrf.mxu0
  %v5665 = vpop.f32.mrf.mxu0
  %5666 = vmatprep.mubr.bf16.mxu0 0
  %5667 = vmatmul.mubr.bf16.gmra.mxu0 %v5226
  %v5668 = vpop.f32.mrf.mxu0
  %v5669 = vadd.f32 %v5076, %v5668
  %v5670 = vpop.f32.mrf.mxu0
  %v5671 = vpop.f32.mrf.mxu0
  %v5672 = vadd.f32 %v5076, %v5671
  %v5673 = vpop.f32.mrf.mxu0
  %5674 = vmatprep.mubr.bf16.mxu0 0
  %5675 = vmatmul.mubr.bf16.gmra.mxu0 %v5228
  %v5676 = vpop.f32.mrf.mxu0
  %v5677 = vpop.f32.mrf.mxu0
  %v5678 = vpop.f32.mrf.mxu0
  %v5679 = vpop.f32.mrf.mxu0
  %5680 = vmatprep.mubr.bf16.mxu0 0
  %5681 = vmatmul.mubr.bf16.gmra.mxu0 %v5230
  %v5682 = vpop.f32.mrf.mxu0
  %v5683 = vadd.f32 %v5076, %v5682
  %v5684 = vpop.f32.mrf.mxu0
  %v5685 = vpop.f32.mrf.mxu0
  %v5686 = vadd.f32 %v5076, %v5685
  %v5687 = vpop.f32.mrf.mxu0
  %5688 = vmatprep.mubr.bf16.mxu0 0
  %5689 = vmatmul.mubr.bf16.gmra.mxu0 %v5232
  %v5690 = vpop.f32.mrf.mxu0
  %v5691 = vpop.f32.mrf.mxu0
  %v5692 = vpop.f32.mrf.mxu0
  %v5693 = vpop.f32.mrf.mxu0
  %5694 = vmatprep.mubr.bf16.mxu0 0
  %5695 = vmatmul.mubr.bf16.gmra.mxu0 %v5234
  %v5696 = vpop.f32.mrf.mxu0
  %v5697 = vadd.f32 %v5076, %v5696
  %v5698 = vpop.f32.mrf.mxu0
  %v5699 = vpop.f32.mrf.mxu0
  %v5700 = vadd.f32 %v5076, %v5699
  %v5701 = vpop.f32.mrf.mxu0
  %5702 = vmatprep.mubr.bf16.mxu0 0
  %5703 = vmatmul.mubr.bf16.gmra.mxu0 %v5236
  %v5704 = vpop.f32.mrf.mxu0
  %v5705 = vpop.f32.mrf.mxu0
  %v5706 = vpop.f32.mrf.mxu0
  %v5707 = vpop.f32.mrf.mxu0
  %5708 = vmatprep.mubr.bf16.mxu0 0
  %5709 = vmatmul.mubr.bf16.gmra.mxu0 %v5238
  %v5710 = vpop.f32.mrf.mxu0
  %v5711 = vadd.f32 %v5076, %v5710
  %v5712 = vpop.f32.mrf.mxu0
  %v5713 = vpop.f32.mrf.mxu0
  %v5714 = vadd.f32 %v5076, %v5713
  %v5715 = vpop.f32.mrf.mxu0
  %5716 = vmatprep.mubr.bf16.mxu0 0
  %5717 = vmatmul.mubr.bf16.gmra.mxu0 %v5240
  %v5718 = vpop.f32.mrf.mxu0
  %v5719 = vpop.f32.mrf.mxu0
  %v5720 = vpop.f32.mrf.mxu0
  %v5721 = vpop.f32.mrf.mxu0
  %5722 = vmatprep.mubr.bf16.mxu0 0
  %5723 = vmatmul.mubr.bf16.gmra.mxu0 %v5242
  %v5724 = vpop.f32.mrf.mxu0
  %v5725 = vpop.f32.mrf.mxu0
  %v5726 = vpop.f32.mrf.mxu0
  %v5727 = vpop.f32.mrf.mxu0
  %5728 = vmatprep.mubr.bf16.mxu0 0
  %5729 = vmatmul.mubr.bf16.gmra.mxu0 %v5244
  %v5730 = vpop.f32.mrf.mxu0
  %v5731 = vpop.f32.mrf.mxu0
  %v5732 = vpop.f32.mrf.mxu0
  %v5733 = vpop.f32.mrf.mxu0
  %5734 = vdwg.mxu0
  %v5735 = vmax.f32 %v5285, 0.0
  %v5736 = vmax.f32 %v5288, 0.0
  %v5737 = vmax.f32 %v5299, 0.0
  %v5738 = vmax.f32 %v5302, 0.0
  %v5739 = vmax.f32 %v5313, 0.0
  %v5740 = vmax.f32 %v5316, 0.0
  %v5741 = vmax.f32 %v5327, 0.0
  %v5742 = vmax.f32 %v5330, 0.0
  %v5743 = vmax.f32 %v5413, 0.0
  %v5744 = vmax.f32 %v5416, 0.0
  %v5745 = vmax.f32 %v5427, 0.0
  %v5746 = vmax.f32 %v5430, 0.0
  %v5747 = vmax.f32 %v5441, 0.0
  %v5748 = vmax.f32 %v5444, 0.0
  %v5749 = vmax.f32 %v5455, 0.0
  %v5750 = vmax.f32 %v5458, 0.0
  %v5751 = vmax.f32 %v5541, 0.0
  %v5752 = vmax.f32 %v5544, 0.0
  %v5753 = vmax.f32 %v5555, 0.0
  %v5754 = vmax.f32 %v5558, 0.0
  %v5755 = vmax.f32 %v5569, 0.0
  %v5756 = vmax.f32 %v5572, 0.0
  %v5757 = vmax.f32 %v5583, 0.0
  %v5758 = vmax.f32 %v5586, 0.0
  %v5759 = vmax.f32 %v5669, 0.0
  %v5760 = vmax.f32 %v5672, 0.0
  %v5761 = vmax.f32 %v5683, 0.0
  %v5762 = vmax.f32 %v5686, 0.0
  %v5763 = vmax.f32 %v5697, 0.0
  %v5764 = vmax.f32 %v5700, 0.0
  %v5765 = vmax.f32 %v5711, 0.0
  %v5766 = vmax.f32 %v5714, 0.0
  %v5767 = vpack.c.bf16 %v5736, %v5735
  %v5768 = vpack.c.bf16 %v5738, %v5737
  %v5769 = vpack.c.bf16 %v5740, %v5739
  %v5770 = vpack.c.bf16 %v5742, %v5741
  %v5771 = vpack.c.bf16 %v5744, %v5743
  %v5772 = vpack.c.bf16 %v5746, %v5745
  %v5773 = vpack.c.bf16 %v5748, %v5747
  %v5774 = vpack.c.bf16 %v5750, %v5749
  %v5775 = vpack.c.bf16 %v5752, %v5751
  %v5776 = vpack.c.bf16 %v5754, %v5753
  %v5777 = vpack.c.bf16 %v5756, %v5755
  %v5778 = vpack.c.bf16 %v5758, %v5757
  %v5779 = vpack.c.bf16 %v5760, %v5759
  %v5780 = vpack.c.bf16 %v5762, %v5761
  %v5781 = vpack.c.bf16 %v5764, %v5763
  %v5782 = vpack.c.bf16 %v5766, %v5765
  %5784 = vrot.lane.b32.xlu0 %v5768, 16
  %v5785 = vpop.permute.xlu0 %5784
  %5787 = vrot.lane.b32.xlu0 %v5769, 32
  %v5788 = vpop.permute.xlu0 %5787
  %5790 = vrot.lane.b32.xlu0 %v5770, 48
  %v5791 = vpop.permute.xlu0 %5790
  %5793 = vrot.lane.b32.xlu0 %v5771, 64
  %v5794 = vpop.permute.xlu0 %5793
  %5796 = vrot.lane.b32.xlu0 %v5772, 80
  %v5797 = vpop.permute.xlu0 %5796
  %5799 = vrot.lane.b32.xlu0 %v5773, 96
  %v5800 = vpop.permute.xlu0 %5799
  %5802 = vrot.lane.b32.xlu0 %v5774, 112
  %v5803 = vpop.permute.xlu0 %5802
  %5805 = vrot.lane.b32.xlu0 %v5776, 16
  %v5806 = vpop.permute.xlu0 %5805
  %5808 = vrot.lane.b32.xlu0 %v5777, 32
  %v5809 = vpop.permute.xlu0 %5808
  %5811 = vrot.lane.b32.xlu0 %v5778, 48
  %v5812 = vpop.permute.xlu0 %5811
  %5814 = vrot.lane.b32.xlu0 %v5779, 64
  %v5815 = vpop.permute.xlu0 %5814
  %5817 = vrot.lane.b32.xlu0 %v5780, 80
  %v5818 = vpop.permute.xlu0 %5817
  %5820 = vrot.lane.b32.xlu0 %v5781, 96
  %v5821 = vpop.permute.xlu0 %5820
  %5823 = vrot.lane.b32.xlu0 %v5782, 112
  %v5824 = vpop.permute.xlu0 %5823
  %v5827 = vsel %vm4075, %v5767, %v5785
  %v5829 = vsel %vm4357, %v5827, %v5788
  %v5831 = vsel %vm4639, %v5829, %v5791
  %v5833 = vsel %vm4921, %v5831, %v5794
  %vm5834 = vcmask 654336
  %v5836 = vsel %vm5834, %v5833, %v5797
  %vm5837 = vcmask 785408
  %v5839 = vsel %vm5837, %v5836, %v5800
  %vm5840 = vcmask 916480
  %v5842 = vsel %vm5840, %v5839, %v5803
  %v5846 = vsel %vm4075, %v5775, %v5806
  %v5848 = vsel %vm4357, %v5846, %v5809
  %v5850 = vsel %vm4639, %v5848, %v5812
  %v5852 = vsel %vm4921, %v5850, %v5815
  %v5854 = vsel %vm5834, %v5852, %v5818
  %v5856 = vsel %vm5837, %v5854, %v5821
  %v5858 = vsel %vm5840, %v5856, %v5824
  %v5860 = vld [vmem:[%s5] sm:$0xf]
  %v5861 = vld [vmem:[%s5 + $0x4] sm:$0xf]
  %v5862 = vld [vmem:[%s5 + $0x8] sm:$0xf]
  %v5863 = vld [vmem:[%s5 + $0xc] sm:$0xf]
  %v5864 = vld [vmem:[%s5 + $0x10] sm:$0xf]
  %v5865 = vld [vmem:[%s5 + $0x14] sm:$0xf]
  %v5866 = vld [vmem:[%s5 + $0x18] sm:$0xf]
  %v5867 = vld [vmem:[%s5 + $0x1c] sm:$0xf]
  %v5868 = vld [vmem:[%s5 + $0x20] sm:$0xf]
  %v5869 = vld [vmem:[%s5 + $0x24] sm:$0xf]
  %v5870 = vld [vmem:[%s5 + $0x28] sm:$0xf]
  %v5871 = vld [vmem:[%s5 + $0x2c] sm:$0xf]
  %v5872 = vld [vmem:[%s5 + $0x30] sm:$0xf]
  %v5873 = vld [vmem:[%s5 + $0x34] sm:$0xf]
  %v5874 = vld [vmem:[%s5 + $0x38] sm:$0xf]
  %v5875 = vld [vmem:[%s5 + $0x3c] sm:$0xf]
  %v5876 = vld [vmem:[%s5 + $0x40] sm:$0xf]
  %v5877 = vld [vmem:[%s5 + $0x44] sm:$0xf]
  %v5878 = vld [vmem:[%s5 + $0x48] sm:$0xf]
  %v5879 = vld [vmem:[%s5 + $0x4c] sm:$0xf]
  %v5880 = vld [vmem:[%s5 + $0x50] sm:$0xf]
  %v5881 = vld [vmem:[%s5 + $0x54] sm:$0xf]
  %v5882 = vld [vmem:[%s5 + $0x58] sm:$0xf]
  %v5883 = vld [vmem:[%s5 + $0x5c] sm:$0xf]
  %v5884 = vld [vmem:[%s5 + $0x60] sm:$0xf]
  %v5885 = vld [vmem:[%s5 + $0x64] sm:$0xf]
  %v5886 = vld [vmem:[%s5 + $0x68] sm:$0xf]
  %v5887 = vld [vmem:[%s5 + $0x6c] sm:$0xf]
  %v5888 = vld [vmem:[%s5 + $0x70] sm:$0xf]
  %v5889 = vld [vmem:[%s5 + $0x74] sm:$0xf]
  %v5890 = vld [vmem:[%s5 + $0x78] sm:$0xf]
  %v5891 = vld [vmem:[%s5 + $0x7c] sm:$0xf]
  %v5892 = vld [vmem:[%s7] sm:$0x1]
  %v5894 = vlaneseq
  %v5895 = vshrl.u32 %v5894, 7
  %v5896 = vsub.s32 0, %v5895
  %v5897 = vrot.slane %v5892, %v5896
  %v5931 = vunpack.c.l.b16 %v5860
  %v5932 = vunpack.c.l.b16 %v5861
  %v5933 = vunpack.c.l.b16 %v5862
  %v5934 = vunpack.c.l.b16 %v5863
  %v5935 = vunpack.c.l.b16 %v5864
  %v5936 = vunpack.c.l.b16 %v5865
  %v5937 = vunpack.c.l.b16 %v5866
  %v5938 = vunpack.c.l.b16 %v5867
  %v5939 = vunpack.c.l.b16 %v5868
  %v5940 = vunpack.c.l.b16 %v5869
  %v5941 = vunpack.c.l.b16 %v5870
  %v5942 = vunpack.c.l.b16 %v5871
  %v5943 = vunpack.c.l.b16 %v5872
  %v5944 = vunpack.c.l.b16 %v5873
  %v5945 = vunpack.c.l.b16 %v5874
  %v5946 = vunpack.c.l.b16 %v5875
  %v5947 = vunpack.c.l.b16 %v5876
  %v5948 = vunpack.c.l.b16 %v5877
  %v5949 = vunpack.c.l.b16 %v5878
  %v5950 = vunpack.c.l.b16 %v5879
  %v5951 = vunpack.c.l.b16 %v5880
  %v5952 = vunpack.c.l.b16 %v5881
  %v5953 = vunpack.c.l.b16 %v5882
  %v5954 = vunpack.c.l.b16 %v5883
  %v5955 = vunpack.c.l.b16 %v5884
  %v5956 = vunpack.c.l.b16 %v5885
  %v5957 = vunpack.c.l.b16 %v5886
  %v5958 = vunpack.c.l.b16 %v5887
  %v5959 = vunpack.c.l.b16 %v5888
  %v5960 = vunpack.c.l.b16 %v5889
  %v5961 = vunpack.c.l.b16 %v5890
  %v5962 = vunpack.c.l.b16 %v5891
  %v5963 = vpack.c.b16 %v5932, %v5931
  %v5964 = vpack.c.b16 %v5934, %v5933
  %v5965 = vpack.c.b16 %v5936, %v5935
  %v5966 = vpack.c.b16 %v5938, %v5937
  %v5967 = vpack.c.b16 %v5940, %v5939
  %v5968 = vpack.c.b16 %v5942, %v5941
  %v5969 = vpack.c.b16 %v5944, %v5943
  %v5970 = vpack.c.b16 %v5946, %v5945
  %v5971 = vpack.c.b16 %v5948, %v5947
  %v5972 = vpack.c.b16 %v5950, %v5949
  %v5973 = vpack.c.b16 %v5952, %v5951
  %v5974 = vpack.c.b16 %v5954, %v5953
  %v5975 = vpack.c.b16 %v5956, %v5955
  %v5976 = vpack.c.b16 %v5958, %v5957
  %v5977 = vpack.c.b16 %v5960, %v5959
  %v5978 = vpack.c.b16 %v5962, %v5961
  %5995 = vmatprep.subr.bf16.mxu0 0
  %5996 = vmatpush1.bf16.msra.mxu0 %v5970
  %5997 = vmatprep.subr.bf16.mxu0 0
  %5998 = vmatpush1.bf16.msra.mxu0 %v5969
  %5999 = vmatprep.subr.bf16.mxu0 0
  %6000 = vmatpush1.bf16.msra.mxu0 %v5968
  %6001 = vmatprep.subr.bf16.mxu0 0
  %6002 = vmatpush1.bf16.msra.mxu0 %v5967
  %6003 = vmatprep.subr.bf16.mxu0 0
  %6004 = vmatpush1.bf16.msra.mxu0 %v5966
  %6005 = vmatprep.subr.bf16.mxu0 0
  %6006 = vmatpush1.bf16.msra.mxu0 %v5965
  %6007 = vmatprep.subr.bf16.mxu0 0
  %6008 = vmatpush1.bf16.msra.mxu0 %v5964
  %6009 = vmatprep.subr.bf16.mxu0 0
  %6010 = vmatpush1.bf16.msra.mxu0 %v5963
  %6011 = vmatprep.subr.bf16.mxu0 0
  %6012 = vmatpush2.bf16.msra.mxu0 %v5978
  %6013 = vmatprep.subr.bf16.mxu0 0
  %6014 = vmatpush2.bf16.msra.mxu0 %v5977
  %6015 = vmatprep.subr.bf16.mxu0 0
  %6016 = vmatpush2.bf16.msra.mxu0 %v5976
  %6017 = vmatprep.subr.bf16.mxu0 0
  %6018 = vmatpush2.bf16.msra.mxu0 %v5975
  %6019 = vmatprep.subr.bf16.mxu0 0
  %6020 = vmatpush2.bf16.msra.mxu0 %v5974
  %6021 = vmatprep.subr.bf16.mxu0 0
  %6022 = vmatpush2.bf16.msra.mxu0 %v5973
  %6023 = vmatprep.subr.bf16.mxu0 0
  %6024 = vmatpush2.bf16.msra.mxu0 %v5972
  %6025 = vmatprep.subr.bf16.mxu0 0
  %6026 = vmatpush2.bf16.msra.mxu0 %v5971
  %6027 = vmatprep.mubr.bf16.mxu0 %v5858
  %6028 = vmatmul.mubr.bf16.gmra.mxu0 %v5842
  %v6029 = vpop.f32.mrf.mxu0
  %v6030 = vadd.f32 %v5897, %v6029
  %v6031 = vpop.f32.mrf.mxu0
  %v6032 = vpop.f32.mrf.mxu0
  %v6033 = vadd.f32 %v5897, %v6032
  %v6034 = vpop.f32.mrf.mxu0
  %6035 = vdwg.mxu0
  %v6036 = vmax.f32 %v6030, 0.0
  %v6037 = vmax.f32 %v6033, 0.0
  %v6038 = vld [vmem:[%s6] sm:$0x1]
  %v6040 = vlaneseq
  %v6041 = vshrl.u32 %v6040, 7
  %v6042 = vsub.s32 0, %v6041
  %v6043 = vrot.slane %v6038, %v6042
  %v6045 = vmul.f32 %v6036, %v6043
  %v6046 = vmul.f32 %v6037, %v6043
  %v6047 = vsel %vm4357, %v6045, 0.0
  %6048 = vadd.xlane.f32.xlu0 %v6047
  %v6049 = vpop.xlane.xlu0 %6048
  %v6050 = vsel %vm4357, %v6046, 0.0
  %6051 = vadd.xlane.f32.xlu0 %v6050
  %v6052 = vpop.xlane.xlu0 %6051
  %v6053 = vld [vmem:[#allocation3] sm:$0x1]
  %v6055 = vlaneseq
  %v6056 = vshrl.u32 %v6055, 7
  %v6057 = vsub.s32 0, %v6056
  %v6058 = vrot.slane %v6053, %v6057
  %v6060 = vadd.f32 %v6049, %v6058
  %v6061 = vadd.f32 %v6052, %v6058
  %vm6062 = vcmask 7168
  %6063 = vst.msk [vmem:[%s9] sm:$0xff] %vm6062, %v6060
  %6064 = vst.msk [vmem:[%s9 + $0x8] sm:$0xff] %vm6062, %v6061
  // Predicated region
  $region38: #{forward.1} parent=0 // pred_check
    _
  $region39: #{forward.1} parent=0 // pred_check_branch
    %6066 = sbr.rel (0) target = $region41
  $region40: #{forward.1} parent=0 // pred_region
    _
  $region41: #{forward.1} parent=0 // pred_fallthru
    _
  // Predicated region
  $region42: #{forward.1} parent=0 // pred_check
    _
  $region43: #{forward.1} parent=0 // pred_check_branch
    %6068 = sbr.rel (0) target = $region45
  $region44: #{forward.1} parent=0 // pred_region
    _
  $region45: #{forward.1} parent=0 // pred_fallthru
    _

</llo_original>
